<compile_context>
chip_gen: v6e
topology: v6e:2x2x1
jax: 0.10.0
libtpu: 0.0.40
codegen_flags: <defaults>
</compile_context>

<pallas_src>
import math
import numpy as np

import jax
import jax.numpy as jnp
from jax import lax
from jax.experimental import pallas as pl
from jax.experimental.pallas import tpu as pltpu


def _round_up(x, m):
    return ((x + m - 1) // m) * m


def _cdiv(a, b):
    return (a + b - 1) // b


def _vmem_capacity_bytes():
    try:
        return int(pltpu.get_tpu_info().vmem_capacity_bytes)
    except Exception:
        return 64 * 1024 * 1024  # conservative (v7x-sized) fallback


def _choose_tiles(m_out, c_pad, o_pad, w_period, block_m, vmem_budget):
    """Pick (TM, TO) so the double-buffered block working set fits the VMEM budget."""
    if o_pad <= 512:
        to_cands = [o_pad]
    else:
        to_cands = [t for t in (512, 256, 128) if o_pad % t == 0]
    tm = min(block_m, _round_up(m_out, 16))          # bf16 LHS -> multiple of 16 sublanes
    tm = max(16, (tm // 16) * 16)

    def working_set(tm_, to_):
        tw_ = _round_up(tm_ + 2 * w_period + 2, 16)
        return (2 * (tw_ * c_pad * 2)          # activation block (double buffered, bf16)
                + 2 * (9 * c_pad * to_ * 2)    # weight block
                + 2 * (to_ * 4)                # bias block
                + 2 * (tm_ * to_ * 2)          # output block (bf16)
                + tm_ * to_ * 4)               # f32 accumulator temporaries

    ti = 0
    to = to_cands[ti]
    while working_set(tm, to) > vmem_budget:
        if tm > 128:
            tm = max(128, ((tm // 2) // 16) * 16)
        elif ti + 1 < len(to_cands):
            ti += 1
            to = to_cands[ti]
        else:
            break
    return tm, to


# ----------------------------------------------------------------------------
# Pallas conv3x3 (stride 1, pad 1, groups 1) + folded inference BatchNorm
# ----------------------------------------------------------------------------
def conv3x3_bn_pallas(x_nchw, weight_oihw, bn_scale, bn_bias, *, block_m=512,
                      out_dtype=jnp.float32):
    """x_nchw: (N, C, H, W); weight_oihw: (O, C, 3, 3); returns (N, O, H, W)."""
    N, C, H, W = x_nchw.shape
    O = weight_oihw.shape[0]

    Wp = W + 2                       # row period of the flattened, W-padded image
    M_out = H * Wp                   # flat output positions per image (2 junk cols / row)
    C_pad = _round_up(C, 16)         # sublane-exact bf16 weight tiles; no-op for real nets
    O_pad = _round_up(O, 128)        # lane-dense output stores

    vmem_cap = _vmem_capacity_bytes()
    TM, TO = _choose_tiles(M_out, C_pad, O_pad, Wp, block_m, int(vmem_cap * 0.7))
    DELTA = 2 * Wp + 2               # halo rows needed beyond the TM output rows
    TW = _round_up(TM + DELTA, 16)
    n_m = _cdiv(M_out, TM)
    n_o = O_pad // TO
    NM = N * n_m

    # ---- activations: NCHW -> NHWC, 1-px halo pad, flatten rows, halo-tiled gather ----
    x_nhwc = jnp.transpose(x_nchw, (0, 2, 3, 1))
    x_pad = jnp.pad(x_nhwc, ((0, 0), (1, 1), (1, 1), (0, C_pad - C)))
    x_flat = x_pad.reshape(N, (H + 2) * Wp, C_pad)
    L = (n_m - 1) * TM + TW
    x_flat = jnp.pad(x_flat, ((0, 0), (0, L - (H + 2) * Wp), (0, 0)))
    x_flat = x_flat.astype(jnp.bfloat16)
    gather_idx = (np.arange(n_m, dtype=np.int32)[:, None] * TM
                  + np.arange(TW, dtype=np.int32)[None, :]).reshape(-1)
    x_tiles = x_flat[:, gather_idx, :].reshape(NM, TW, C_pad)

    # ---- weights: fold BN scale, (O, C, 3, 3) -> (9, C_pad, O_pad), tap-major ----
    scale = bn_scale.astype(jnp.float32)
    w = weight_oihw.astype(jnp.float32) * scale[:, None, None, None]
    w_taps = jnp.transpose(w, (2, 3, 1, 0)).reshape(9, C, O)        # [kh*3+kw, c, o]
    w_taps = jnp.pad(w_taps, ((0, 0), (0, C_pad - C), (0, O_pad - O))).astype(jnp.bfloat16)
    bias = jnp.pad(bn_bias.astype(jnp.float32), (0, O_pad - O)).reshape(1, O_pad)

    # ---- kernel: 9 shifted matmuls (in-kernel tap fold) + f32 bias, bf16 output ----
    def kernel(x_ref, w_ref, b_ref, o_ref):
        acc = jnp.dot(x_ref[0, 0:TM, :], w_ref[0],
                      preferred_element_type=jnp.float32)
        for tap in range(1, 9):
            kh, kw = divmod(tap, 3)
            off = kh * Wp + kw                       # static sublane offset of this tap
            acc = acc + jnp.dot(x_ref[0, off:off + TM, :], w_ref[tap],
                                preferred_element_type=jnp.float32)
        o_ref[...] = (acc + b_ref[...]).astype(o_ref.dtype)

    # O tiles outermost (weights fetched once per O tile); batch x row-tiles flattened into
    # one "parallel" axis so the megacore split has work even at N == 1.
    if n_o > 1:
        grid = (n_o, NM)
        x_map = lambda o, m: (m, 0, 0)
        w_map = lambda o, m: (0, 0, o)
        b_map = lambda o, m: (0, o)
        o_map = lambda o, m: (m, o)
    else:
        grid = (NM,)
        x_map = lambda m: (m, 0, 0)
        w_map = lambda m: (0, 0, 0)
        b_map = lambda m: (0, 0)
        o_map = lambda m: (m, 0)

    cost = pl.CostEstimate(
        flops=int(2 * NM * TM * 9 * C_pad * O_pad),
        transcendentals=0,
        bytes_accessed=int(n_o * x_tiles.size * 2 + w_taps.size * 2
                           + bias.size * 4 + NM * TM * O_pad * 2),
    )

    out = pl.pallas_call(
        kernel,
        out_shape=jax.ShapeDtypeStruct((NM * TM, O_pad), jnp.bfloat16),
        grid_spec=pltpu.PrefetchScalarGridSpec(
            num_scalar_prefetch=0,
            grid=grid,
            in_specs=[
                pl.BlockSpec((1, TW, C_pad), x_map),
                pl.BlockSpec((9, C_pad, TO), w_map),
                pl.BlockSpec((1, TO), b_map),
            ],
            out_specs=pl.BlockSpec((TM, TO), o_map),
        ),
        compiler_params=pltpu.CompilerParams(
            dimension_semantics=("parallel",) * len(grid),
            vmem_limit_bytes=int(vmem_cap * 0.8),
        ),
        cost_estimate=cost,
    )(x_tiles, w_taps, bias)

    # ---- un-flatten: drop padded rows / junk columns / padded channels, back to NCHW ----
    # TODO(synk): an NHWC-native consumer could take `out` directly (pre-transpose, bf16).
    out = out.reshape(N, n_m * TM, O_pad)[:, :M_out, :O]
    out = out.reshape(N, H, Wp, O)[:, :, :W, :]
    return jnp.transpose(out, (0, 3, 1, 2)).astype(out_dtype)


# ----------------------------------------------------------------------------
# Deterministic parameter construction (mirrors the PyTorch __init__ shapes)
# ----------------------------------------------------------------------------
def kaiming_uniform(key, shape, a):
    fan_in = int(np.prod(shape[1:]))
    gain = math.sqrt(2.0 / (1.0 + a * a))
    bound = gain * math.sqrt(3.0 / fan_in)
    return jax.random.uniform(key, shape, jnp.float32, -bound, bound)


def make_params(in_channels, out_channels, kernel_size=3, groups=1, expand_ratio=8, seed=0):
    assert groups == 1 and groups < out_channels
    key = jax.random.PRNGKey(seed)
    ks = jax.random.split(key, 8)
    ipg = in_channels // groups
    internal = in_channels  # internal_channels_1x1_3x3 defaults to in_channels (groups < out)

    p = {}
    p["weight_rbr_origin"] = kaiming_uniform(ks[0], (out_channels, ipg, kernel_size, kernel_size), math.sqrt(1.0))
    p["weight_rbr_avg_conv"] = kaiming_uniform(ks[1], (out_channels, ipg, 1, 1), 1.0)
    p["weight_rbr_pfir_conv"] = kaiming_uniform(ks[2], (out_channels, ipg, 1, 1), 1.0)
    p["weight_rbr_avg_avg"] = jnp.ones((kernel_size, kernel_size), jnp.float32) / (kernel_size * kernel_size)

    # fre_init prior buffer
    prior = np.zeros((out_channels, kernel_size, kernel_size), np.float32)
    half_fg = out_channels / 2
    for i in range(out_channels):
        for h in range(3):
            for w in range(3):
                if i < half_fg:
                    prior[i, h, w] = math.cos(math.pi * (h + 0.5) * (i + 1) / 3)
                else:
                    prior[i, h, w] = math.cos(math.pi * (w + 0.5) * (i + 1 - half_fg) / 3)
    p["weight_rbr_prior"] = jnp.asarray(prior)

    # 1x1 -> kxk branch (identity-initialized 1x1 since internal == in_channels)
    p["weight_rbr_1x1_kxk_idconv1"] = jnp.zeros((in_channels, ipg, 1, 1), jnp.float32)
    id_value = np.zeros((in_channels, ipg, 1, 1), np.float32)
    for i in range(in_channels):
        id_value[i, i % ipg, 0, 0] = 1.0
    p["id_tensor"] = jnp.asarray(id_value)
    p["weight_rbr_1x1_kxk_conv2"] = kaiming_uniform(
        ks[3], (out_channels, internal // groups, kernel_size, kernel_size), math.sqrt(1.0))

    # depthwise-separable branch
    p["weight_rbr_gconv_dw"] = kaiming_uniform(
        ks[4], (in_channels * expand_ratio, 1, kernel_size, kernel_size), math.sqrt(1.0))
    p["weight_rbr_gconv_pw"] = kaiming_uniform(
        ks[5], (out_channels, in_channels * expand_ratio, 1, 1), math.sqrt(1.0))

    # branch scaling vector (branch_counter == 5 for in != out, groups < out)
    vector = np.zeros((5, out_channels), np.float32)
    vector[0, :] = 0.25
    vector[1, :] = 0.25
    vector[2, :] = 0.0
    vector[3, :] = 0.5
    vector[4, :] = 0.5
    p["vector"] = jnp.asarray(vector)

    # BatchNorm2d(out_channels), eval mode, fresh init
    p["bn_gamma"] = jnp.ones((out_channels,), jnp.float32)
    p["bn_beta"] = jnp.zeros((out_channels,), jnp.float32)
    p["bn_mean"] = jnp.zeros((out_channels,), jnp.float32)
    p["bn_var"] = jnp.ones((out_channels,), jnp.float32)
    p["bn_eps"] = 1e-5
    return p


# ----------------------------------------------------------------------------
# weight_gen: OREPA branch fusion into a single OIHW 3x3 weight (small JAX glue)
# ----------------------------------------------------------------------------
def weight_gen(p, in_channels, out_channels, expand_ratio=8):
    v = p["vector"]

    w_origin = p["weight_rbr_origin"] * v[0][:, None, None, None]

    w_avg = (p["weight_rbr_avg_conv"][:, :, 0, 0][:, :, None, None]
             * p["weight_rbr_avg_avg"][None, None, :, :]) * v[1][:, None, None, None]

    w_pfir = (p["weight_rbr_pfir_conv"][:, :, 0, 0][:, :, None, None]
              * p["weight_rbr_prior"][:, None, :, :]) * v[2][:, None, None, None]

    conv1 = (p["weight_rbr_1x1_kxk_idconv1"] + p["id_tensor"])[:, :, 0, 0]   # (T, I)
    w_1x1_kxk = jnp.einsum("ti,othw->oihw", conv1, p["weight_rbr_1x1_kxk_conv2"])
    w_1x1_kxk = w_1x1_kxk * v[3][:, None, None, None]

    # dwsc2full
    dw = p["weight_rbr_gconv_dw"].reshape(in_channels, expand_ratio, 1, 3, 3)  # (g, tg, ig, h, w)
    pw = p["weight_rbr_gconv_pw"][:, :, 0, 0].reshape(out_channels, in_channels, expand_ratio)
    w_gconv = jnp.einsum("gtihw,ogt->ogihw", dw, pw).reshape(out_channels, in_channels, 3, 3)
    w_gconv = w_gconv * v[4][:, None, None, None]

    return w_origin + w_avg + w_pfir + w_1x1_kxk + w_gconv


def orepa_forward(x_nchw, p, in_channels, out_channels):
    weight = weight_gen(p, in_channels, out_channels)                 # (O, I, 3, 3)
    bn_scale = p["bn_gamma"] / jnp.sqrt(p["bn_var"] + p["bn_eps"])
    bn_bias = p["bn_beta"] - p["bn_mean"] * bn_scale
    return conv3x3_bn_pallas(x_nchw, weight, bn_scale, bn_bias)       # nonlinear = Identity


# ----------------------------------------------------------------------------
if __name__ == "__main__":
    in_channels, out_channels = 4, 8
    N, H, W = 2, 16, 16

    key = jax.random.PRNGKey(0)
    x = jax.random.normal(key, (N, in_channels, H, W), jnp.float32)   # NCHW, like torch

    params = make_params(in_channels, out_channels, kernel_size=3, groups=1, seed=0)

    out = orepa_forward(x, params, in_channels, out_channels)
    out = jax.block_until_ready(out)
    assert out.shape == (N, out_channels, H, W)

    # Reference: full-precision lax.conv on the SAME bf16-rounded inputs / fused weight.
    # Tolerance absorbs f32 accumulation-order differences plus the kernel's bf16 output cast.
    weight = weight_gen(params, in_channels, out_channels)
    scale = params["bn_gamma"] / jnp.sqrt(params["bn_var"] + params["bn_eps"])
    bias = params["bn_beta"] - params["bn_mean"] * scale
    w_fused = (weight * scale[:, None, None, None]).astype(jnp.bfloat16).astype(jnp.float32)
    x_r = x.astype(jnp.bfloat16).astype(jnp.float32)
    ref = lax.conv_general_dilated(
        x_r, w_fused, window_strides=(1, 1), padding=((1, 1), (1, 1)),
        dimension_numbers=("NCHW", "OIHW", "NCHW"),
        precision=lax.Precision.HIGHEST)
    ref = ref + bias[None, :, None, None]
    np.testing.assert_allclose(np.asarray(out), np.asarray(ref), rtol=2e-2, atol=2e-2)

    print("KERNEL_OK")
</pallas_src>

<mosaic_0001>
module attributes {stable_mosaic.version = 11 : i64} {
  func.func @kernel(%arg0: i32, %arg1: memref<1x336x16xbf16, #tpu.memory_space<vmem>>, %arg2: memref<9x16x128xbf16, #tpu.memory_space<vmem>>, %arg3: memref<1x128xf32, #tpu.memory_space<vmem>>, %arg4: memref<288x128xbf16, #tpu.memory_space<vmem>>) attributes {dimension_semantics = [#tpu.dimension_semantics<parallel>], iteration_bounds = array<i64: 2>, scalar_prefetch = 0 : i64, scratch_operands = 0 : i64, tpu.core_type = #tpu.core_type<tc>, window_params = [{transform_indices = @transform_0, window_bounds = array<i64: 1, 336, 16>}, {pipeline_mode = #tpu.pipeline_mode<synchronous>, transform_indices = @transform_1, window_bounds = array<i64: 9, 16, 128>}, {pipeline_mode = #tpu.pipeline_mode<synchronous>, transform_indices = @transform_2, window_bounds = array<i64: 1, 128>}, {transform_indices = @transform_3, window_bounds = array<i64: 288, 128>}]} {
    %c0 = arith.constant 0 : index
    %c0_0 = arith.constant 0 : index
    %c0_1 = arith.constant 0 : index
    %0 = vector.load %arg1[%c0, %c0_0, %c0_1] : memref<1x336x16xbf16, #tpu.memory_space<vmem>>, vector<1x288x16xbf16>
    %1 = vector.shape_cast %0 : vector<1x288x16xbf16> to vector<288x16xbf16>
    %c0_2 = arith.constant 0 : index
    %c0_3 = arith.constant 0 : index
    %c0_4 = arith.constant 0 : index
    %2 = vector.load %arg2[%c0_2, %c0_3, %c0_4] : memref<9x16x128xbf16, #tpu.memory_space<vmem>>, vector<1x16x128xbf16>
    %3 = vector.shape_cast %2 : vector<1x16x128xbf16> to vector<16x128xbf16>
    %cst = arith.constant dense<0.000000e+00> : vector<288x128xf32>
    %4 = tpu.matmul %1, %3, %cst {dimension_numbers = #tpu.dot_dimension_numbers<[1], [0], [0], [1], [0, 0, 1, 1], [], []>} : vector<288x16xbf16>, vector<16x128xbf16>, vector<288x128xf32> -> vector<288x128xf32>
    %c0_5 = arith.constant 0 : index
    %c1 = arith.constant 1 : index
    %c0_6 = arith.constant 0 : index
    %5 = vector.load %arg1[%c0_5, %c1, %c0_6] : memref<1x336x16xbf16, #tpu.memory_space<vmem>>, vector<1x288x16xbf16>
    %6 = vector.shape_cast %5 : vector<1x288x16xbf16> to vector<288x16xbf16>
    %c1_7 = arith.constant 1 : index
    %c0_8 = arith.constant 0 : index
    %c0_9 = arith.constant 0 : index
    %7 = vector.load %arg2[%c1_7, %c0_8, %c0_9] : memref<9x16x128xbf16, #tpu.memory_space<vmem>>, vector<1x16x128xbf16>
    %8 = vector.shape_cast %7 : vector<1x16x128xbf16> to vector<16x128xbf16>
    %cst_10 = arith.constant dense<0.000000e+00> : vector<288x128xf32>
    %9 = tpu.matmul %6, %8, %cst_10 {dimension_numbers = #tpu.dot_dimension_numbers<[1], [0], [0], [1], [0, 0, 1, 1], [], []>} : vector<288x16xbf16>, vector<16x128xbf16>, vector<288x128xf32> -> vector<288x128xf32>
    %10 = arith.addf %4, %9 : vector<288x128xf32>
    %c0_11 = arith.constant 0 : index
    %c2 = arith.constant 2 : index
    %c0_12 = arith.constant 0 : index
    %11 = vector.load %arg1[%c0_11, %c2, %c0_12] : memref<1x336x16xbf16, #tpu.memory_space<vmem>>, vector<1x288x16xbf16>
    %12 = vector.shape_cast %11 : vector<1x288x16xbf16> to vector<288x16xbf16>
    %c2_13 = arith.constant 2 : index
    %c0_14 = arith.constant 0 : index
    %c0_15 = arith.constant 0 : index
    %13 = vector.load %arg2[%c2_13, %c0_14, %c0_15] : memref<9x16x128xbf16, #tpu.memory_space<vmem>>, vector<1x16x128xbf16>
    %14 = vector.shape_cast %13 : vector<1x16x128xbf16> to vector<16x128xbf16>
    %cst_16 = arith.constant dense<0.000000e+00> : vector<288x128xf32>
    %15 = tpu.matmul %12, %14, %cst_16 {dimension_numbers = #tpu.dot_dimension_numbers<[1], [0], [0], [1], [0, 0, 1, 1], [], []>} : vector<288x16xbf16>, vector<16x128xbf16>, vector<288x128xf32> -> vector<288x128xf32>
    %16 = arith.addf %10, %15 : vector<288x128xf32>
    %c0_17 = arith.constant 0 : index
    %c18 = arith.constant 18 : index
    %c0_18 = arith.constant 0 : index
    %17 = vector.load %arg1[%c0_17, %c18, %c0_18] : memref<1x336x16xbf16, #tpu.memory_space<vmem>>, vector<1x288x16xbf16>
    %18 = vector.shape_cast %17 : vector<1x288x16xbf16> to vector<288x16xbf16>
    %c3 = arith.constant 3 : index
    %c0_19 = arith.constant 0 : index
    %c0_20 = arith.constant 0 : index
    %19 = vector.load %arg2[%c3, %c0_19, %c0_20] : memref<9x16x128xbf16, #tpu.memory_space<vmem>>, vector<1x16x128xbf16>
    %20 = vector.shape_cast %19 : vector<1x16x128xbf16> to vector<16x128xbf16>
    %cst_21 = arith.constant dense<0.000000e+00> : vector<288x128xf32>
    %21 = tpu.matmul %18, %20, %cst_21 {dimension_numbers = #tpu.dot_dimension_numbers<[1], [0], [0], [1], [0, 0, 1, 1], [], []>} : vector<288x16xbf16>, vector<16x128xbf16>, vector<288x128xf32> -> vector<288x128xf32>
    %22 = arith.addf %16, %21 : vector<288x128xf32>
    %c0_22 = arith.constant 0 : index
    %c19 = arith.constant 19 : index
    %c0_23 = arith.constant 0 : index
    %23 = vector.load %arg1[%c0_22, %c19, %c0_23] : memref<1x336x16xbf16, #tpu.memory_space<vmem>>, vector<1x288x16xbf16>
    %24 = vector.shape_cast %23 : vector<1x288x16xbf16> to vector<288x16xbf16>
    %c4 = arith.constant 4 : index
    %c0_24 = arith.constant 0 : index
    %c0_25 = arith.constant 0 : index
    %25 = vector.load %arg2[%c4, %c0_24, %c0_25] : memref<9x16x128xbf16, #tpu.memory_space<vmem>>, vector<1x16x128xbf16>
    %26 = vector.shape_cast %25 : vector<1x16x128xbf16> to vector<16x128xbf16>
    %cst_26 = arith.constant dense<0.000000e+00> : vector<288x128xf32>
    %27 = tpu.matmul %24, %26, %cst_26 {dimension_numbers = #tpu.dot_dimension_numbers<[1], [0], [0], [1], [0, 0, 1, 1], [], []>} : vector<288x16xbf16>, vector<16x128xbf16>, vector<288x128xf32> -> vector<288x128xf32>
    %28 = arith.addf %22, %27 : vector<288x128xf32>
    %c0_27 = arith.constant 0 : index
    %c20 = arith.constant 20 : index
    %c0_28 = arith.constant 0 : index
    %29 = vector.load %arg1[%c0_27, %c20, %c0_28] : memref<1x336x16xbf16, #tpu.memory_space<vmem>>, vector<1x288x16xbf16>
    %30 = vector.shape_cast %29 : vector<1x288x16xbf16> to vector<288x16xbf16>
    %c5 = arith.constant 5 : index
    %c0_29 = arith.constant 0 : index
    %c0_30 = arith.constant 0 : index
    %31 = vector.load %arg2[%c5, %c0_29, %c0_30] : memref<9x16x128xbf16, #tpu.memory_space<vmem>>, vector<1x16x128xbf16>
    %32 = vector.shape_cast %31 : vector<1x16x128xbf16> to vector<16x128xbf16>
    %cst_31 = arith.constant dense<0.000000e+00> : vector<288x128xf32>
    %33 = tpu.matmul %30, %32, %cst_31 {dimension_numbers = #tpu.dot_dimension_numbers<[1], [0], [0], [1], [0, 0, 1, 1], [], []>} : vector<288x16xbf16>, vector<16x128xbf16>, vector<288x128xf32> -> vector<288x128xf32>
    %34 = arith.addf %28, %33 : vector<288x128xf32>
    %c0_32 = arith.constant 0 : index
    %c36 = arith.constant 36 : index
    %c0_33 = arith.constant 0 : index
    %35 = vector.load %arg1[%c0_32, %c36, %c0_33] : memref<1x336x16xbf16, #tpu.memory_space<vmem>>, vector<1x288x16xbf16>
    %36 = vector.shape_cast %35 : vector<1x288x16xbf16> to vector<288x16xbf16>
    %c6 = arith.constant 6 : index
    %c0_34 = arith.constant 0 : index
    %c0_35 = arith.constant 0 : index
    %37 = vector.load %arg2[%c6, %c0_34, %c0_35] : memref<9x16x128xbf16, #tpu.memory_space<vmem>>, vector<1x16x128xbf16>
    %38 = vector.shape_cast %37 : vector<1x16x128xbf16> to vector<16x128xbf16>
    %cst_36 = arith.constant dense<0.000000e+00> : vector<288x128xf32>
    %39 = tpu.matmul %36, %38, %cst_36 {dimension_numbers = #tpu.dot_dimension_numbers<[1], [0], [0], [1], [0, 0, 1, 1], [], []>} : vector<288x16xbf16>, vector<16x128xbf16>, vector<288x128xf32> -> vector<288x128xf32>
    %40 = arith.addf %34, %39 : vector<288x128xf32>
    %c0_37 = arith.constant 0 : index
    %c37 = arith.constant 37 : index
    %c0_38 = arith.constant 0 : index
    %41 = vector.load %arg1[%c0_37, %c37, %c0_38] : memref<1x336x16xbf16, #tpu.memory_space<vmem>>, vector<1x288x16xbf16>
    %42 = vector.shape_cast %41 : vector<1x288x16xbf16> to vector<288x16xbf16>
    %c7 = arith.constant 7 : index
    %c0_39 = arith.constant 0 : index
    %c0_40 = arith.constant 0 : index
    %43 = vector.load %arg2[%c7, %c0_39, %c0_40] : memref<9x16x128xbf16, #tpu.memory_space<vmem>>, vector<1x16x128xbf16>
    %44 = vector.shape_cast %43 : vector<1x16x128xbf16> to vector<16x128xbf16>
    %cst_41 = arith.constant dense<0.000000e+00> : vector<288x128xf32>
    %45 = tpu.matmul %42, %44, %cst_41 {dimension_numbers = #tpu.dot_dimension_numbers<[1], [0], [0], [1], [0, 0, 1, 1], [], []>} : vector<288x16xbf16>, vector<16x128xbf16>, vector<288x128xf32> -> vector<288x128xf32>
    %46 = arith.addf %40, %45 : vector<288x128xf32>
    %c0_42 = arith.constant 0 : index
    %c38 = arith.constant 38 : index
    %c0_43 = arith.constant 0 : index
    %47 = vector.load %arg1[%c0_42, %c38, %c0_43] : memref<1x336x16xbf16, #tpu.memory_space<vmem>>, vector<1x288x16xbf16>
    %48 = vector.shape_cast %47 : vector<1x288x16xbf16> to vector<288x16xbf16>
    %c8 = arith.constant 8 : index
    %c0_44 = arith.constant 0 : index
    %c0_45 = arith.constant 0 : index
    %49 = vector.load %arg2[%c8, %c0_44, %c0_45] : memref<9x16x128xbf16, #tpu.memory_space<vmem>>, vector<1x16x128xbf16>
    %50 = vector.shape_cast %49 : vector<1x16x128xbf16> to vector<16x128xbf16>
    %cst_46 = arith.constant dense<0.000000e+00> : vector<288x128xf32>
    %51 = tpu.matmul %48, %50, %cst_46 {dimension_numbers = #tpu.dot_dimension_numbers<[1], [0], [0], [1], [0, 0, 1, 1], [], []>} : vector<288x16xbf16>, vector<16x128xbf16>, vector<288x128xf32> -> vector<288x128xf32>
    %52 = arith.addf %46, %51 : vector<288x128xf32>
    %c0_47 = arith.constant 0 : index
    %c0_48 = arith.constant 0 : index
    %53 = vector.load %arg3[%c0_47, %c0_48] : memref<1x128xf32, #tpu.memory_space<vmem>>, vector<1x128xf32>
    %54 = vector.broadcast %53 : vector<1x128xf32> to vector<288x128xf32>
    %55 = arith.addf %52, %54 : vector<288x128xf32>
    %56 = arith.truncf %55 : vector<288x128xf32> to vector<288x128xbf16>
    %c0_49 = arith.constant 0 : index
    %c0_50 = arith.constant 0 : index
    %57 = vector.load %arg4[%c0_49, %c0_50] : memref<288x128xbf16, #tpu.memory_space<vmem>>, vector<288x128xbf16>
    tpu.vector_store %arg4[%c0_49, %c0_50], %56 {strides = array<i32>} : memref<288x128xbf16, #tpu.memory_space<vmem>>, vector<288x128xbf16>,
    return
  }
  func.func @transform_0(%arg0: i32) -> (i32, i32, i32) {
    %c0_i32 = arith.constant 0 : i32
    %c0_i32_0 = arith.constant 0 : i32
    %c0_i32_1 = arith.constant 0 : i32
    return %arg0, %c0_i32, %c0_i32_0 : i32, i32, i32
  }
  func.func @transform_1(%arg0: i32) -> (i32, i32, i32) {
    %c0_i32 = arith.constant 0 : i32
    %c0_i32_0 = arith.constant 0 : i32
    %c0_i32_1 = arith.constant 0 : i32
    %c0_i32_2 = arith.constant 0 : i32
    return %c0_i32, %c0_i32_0, %c0_i32_1 : i32, i32, i32
  }
  func.func @transform_2(%arg0: i32) -> (i32, i32) {
    %c0_i32 = arith.constant 0 : i32
    %c0_i32_0 = arith.constant 0 : i32
    %c0_i32_1 = arith.constant 0 : i32
    return %c0_i32, %c0_i32_0 : i32, i32
  }
  func.func @transform_3(%arg0: i32) -> (i32, i32) {
    %c0_i32 = arith.constant 0 : i32
    %c0_i32_0 = arith.constant 0 : i32
    return %arg0, %c0_i32 : i32, i32
  }
}

</mosaic_0001>

<llo_original>
// kernel: tpu_custom_call.1
$region0: #{tpu_custom_call.1}
  #allocation0 [shape = 'u32[]', space=smem, size = 0x4, offset = 0x4, fixed_abs, tag = 'smem constant byte address 0x4 - core index']
  #allocation1 [shape = 'u32[144,128]{1,0:T(1,128)}', space=vmem, size = 0x12000, scoped, tag = 'internal scratch']
  %s0 = inlined_call_operand.vmem [shape: bf16[2,336,16], index: 0, kind: input, shape index: {}]
  %s1 = inlined_call_operand.vmem [shape: bf16[9,16,128], index: 1, kind: input, shape index: {}]
  %s2 = inlined_call_operand.vmem [shape: f32[1,128], index: 2, kind: input, shape index: {}]
  %s3 = inlined_call_operand.hbm [shape: bf16[576,128], index: 3, kind: output, shape index: {}]
  %s4 = sld [smem:[#allocation0]]
  $region45: #{tpu_custom_call.1} parent=0
    _
  %s6 = ssub.s32 1, %s4
  %s7 = scalar_select 0, %s6, %s4
  $region1: #{tpu_custom_call.1} parent=0
    #allocation2 [shape = 'u8[147456]{0}', space=vmem, size = 0x24000, scoped, tag = 'output window, operand 0']
    #allocation3 [shape = 's32[2]{0}', space=sflag, size = 0x8, scoped, tag = 'scoped memory for tpu_custom_call.1']
    %8 = vsyncpa [#allocation3], 0
    %s9 = scalar_lea.sflag [#allocation3], 1
    %10 = vsyncpa %s9, 0
    loop: start=0, step=1, limit=4
    $region2: #{tpu_custom_call.1} parent=1 // loop_pre_header
      _
    $region3: #{tpu_custom_call.1} parent=1 // loop_header
      %s12 = sphi 0, %s16
      %p13 = scmp.ge.s32.totalorder %s12, 4
      %s22 = sphi 0, %s24
      %s25 = sphi 0, %s22
      %s26 = sphi 0, %s25
      %s42 = sphi 0, %s26
      %s46 = sphi 0, %s46
      %s48 = sphi 0, %s46
      %s49 = sphi 0, %s48
      %s63 = sphi 0, %s49
      %s67 = sphi 0, %s67
      %s69 = sphi 0, %s67
      %s70 = sphi 0, %s69
      %s84 = sphi 0, %s70
      %s90 = sphi 0, %s92
      %s93 = sphi 0, %s90
      %s94 = sphi 0, %s93
      %s110 = sphi 0, %s94
    $region4: #{tpu_custom_call.1} parent=1 // loop_header_branch
      %15 = sbr.rel (%p13) target = $region8
    $region5: #{tpu_custom_call.1} parent=1 // loop_body
      %s17 = ssub.s32 %s12, 1
      %s18 = ssub.s32 %s12, 2
      %s19 = sadd.s32 %s12, 1
      %s20 = ssub.s32 %s12, %s19
      %p21 = scmp.eq.s32.totalorder %s20, 0
      %s23 = sadd.s32 %s22, 1
      %s24 = scalar_select %p21, %s22, %s23
      %p27 = pneg %p21
      %p28 = scmp.eq.s32.totalorder %s12, 1
      %p29 = por %p27, %p28
      %p30 = scmp.ne.s32.totalorder %s22, %s25
      %p31 = scmp.eq.s32.totalorder %s12, 0
      %p32 = por %p30, %p31
      %p33 = scmp.ne.s32.totalorder %s22, %s25
      %p34 = scmp.eq.s32.totalorder %s17, 1
      %p35 = por %p33, %p34
      %p36 = scmp.ne.s32.totalorder %s25, %s26
      %p37 = scmp.eq.s32.totalorder %s17, 0
      %p38 = por %p36, %p37
      %p39 = scmp.ne.s32.totalorder %s25, %s26
      %p40 = scmp.eq.s32.totalorder %s18, 1
      %p41 = por %p39, %p40
      %p43 = scmp.ne.s32.totalorder %s26, %s42
      %p44 = scmp.eq.s32.totalorder %s18, 0
      %p45 = por %p43, %p44
      %s47 = sadd.s32 %s46, 1
      %p50 = scmp.eq.s32.totalorder %s12, 1
      %p51 = scmp.ne.s32.totalorder %s46, %s48
      %p52 = scmp.eq.s32.totalorder %s12, 0
      %p53 = por %p51, %p52
      %p54 = scmp.ne.s32.totalorder %s46, %s48
      %p55 = scmp.eq.s32.totalorder %s17, 1
      %p56 = por %p54, %p55
      %p57 = scmp.ne.s32.totalorder %s48, %s49
      %p58 = scmp.eq.s32.totalorder %s17, 0
      %p59 = por %p57, %p58
      %p60 = scmp.ne.s32.totalorder %s48, %s49
      %p61 = scmp.eq.s32.totalorder %s18, 1
      %p62 = por %p60, %p61
      %p64 = scmp.ne.s32.totalorder %s49, %s63
      %p65 = scmp.eq.s32.totalorder %s18, 0
      %p66 = por %p64, %p65
      %s68 = sadd.s32 %s67, 1
      %p71 = scmp.eq.s32.totalorder %s12, 1
      %p72 = scmp.ne.s32.totalorder %s67, %s69
      %p73 = scmp.eq.s32.totalorder %s12, 0
      %p74 = por %p72, %p73
      %p75 = scmp.ne.s32.totalorder %s67, %s69
      %p76 = scmp.eq.s32.totalorder %s17, 1
      %p77 = por %p75, %p76
      %p78 = scmp.ne.s32.totalorder %s69, %s70
      %p79 = scmp.eq.s32.totalorder %s17, 0
      %p80 = por %p78, %p79
      %p81 = scmp.ne.s32.totalorder %s69, %s70
      %p82 = scmp.eq.s32.totalorder %s18, 1
      %p83 = por %p81, %p82
      %p85 = scmp.ne.s32.totalorder %s70, %s84
      %p86 = scmp.eq.s32.totalorder %s18, 0
      %p87 = por %p85, %p86
      %s88 = ssub.s32 %s12, %s19
      %p89 = scmp.eq.s32.totalorder %s88, 0
      %s91 = sadd.s32 %s90, 1
      %s92 = scalar_select %p89, %s90, %s91
      %p95 = pneg %p89
      %p96 = scmp.eq.s32.totalorder %s12, 1
      %p97 = por %p95, %p96
      %p98 = scmp.ne.s32.totalorder %s90, %s93
      %p99 = scmp.eq.s32.totalorder %s12, 0
      %p100 = por %p98, %p99
      %p101 = scmp.ne.s32.totalorder %s90, %s93
      %p102 = scmp.eq.s32.totalorder %s17, 1
      %p103 = por %p101, %p102
      %p104 = scmp.ne.s32.totalorder %s93, %s94
      %p105 = scmp.eq.s32.totalorder %s17, 0
      %p106 = por %p104, %p105
      %p107 = scmp.ne.s32.totalorder %s93, %s94
      %p108 = scmp.eq.s32.totalorder %s18, 1
      %p109 = por %p107, %p108
      %p111 = scmp.ne.s32.totalorder %s94, %s110
      %p112 = scmp.eq.s32.totalorder %s18, 0
      %p113 = por %p111, %p112
      %p114 = scmp.le.s32.totalorder 1, %s12
      %p115 = scmp.lt.s32.totalorder %s12, 3
      %p116 = pnand %p114, %p115
      %p117 = pneg %p116
      // Predicated region
      $region9: #{tpu_custom_call.1} parent=5 // pred_check
        _
      $region10: #{tpu_custom_call.1} parent=5 // pred_check_branch
        %119 = sbr.rel (%p116) target = $region12
      $region11: #{tpu_custom_call.1} parent=5 // pred_region
        %s120 = ssub.s32 %s12, 1
        // Predicated region
        $region13: #{tpu_custom_call.1} parent=11 // pred_check
          %p121 = pneg %p59
        $region14: #{tpu_custom_call.1} parent=11 // pred_check_branch
          %123 = sbr.rel (%p121) target = $region16
        $region15: #{tpu_custom_call.1} parent=11 // pred_region
          _
        $region16: #{tpu_custom_call.1} parent=11 // pred_fallthru
          _
        // Predicated region
        $region17: #{tpu_custom_call.1} parent=11 // pred_check
          %p124 = pneg %p80
        $region18: #{tpu_custom_call.1} parent=11 // pred_check_branch
          %126 = sbr.rel (%p124) target = $region20
        $region19: #{tpu_custom_call.1} parent=11 // pred_region
          _
        $region20: #{tpu_custom_call.1} parent=11 // pred_fallthru
          _
      $region12: #{tpu_custom_call.1} parent=5 // pred_fallthru
        _
      %p127 = scmp.lt.s32.totalorder %s12, 2
      // Predicated region
      $region21: #{tpu_custom_call.1} parent=5 // pred_check
        %p128 = pneg %p127
      $region22: #{tpu_custom_call.1} parent=5 // pred_check_branch
        %130 = sbr.rel (%p128) target = $region24
      $region23: #{tpu_custom_call.1} parent=5 // pred_region
        // Predicated region
        $region25: #{tpu_custom_call.1} parent=23 // pred_check
          %p131 = pneg %p32
        $region26: #{tpu_custom_call.1} parent=23 // pred_check_branch
          %133 = sbr.rel (%p131) target = $region28
        $region27: #{tpu_custom_call.1} parent=23 // pred_region
          %p134 = scmp.lt.s32.totalorder %s12, 1
          %s135 = scalar_select %p134, %s12, 1
          %s136 = smul.addr %s135, 42
          %s137 = smul.addr %s136, 4
          %s138 = scalar_lea.vmem %s0, %s137
        $region28: #{tpu_custom_call.1} parent=23 // pred_fallthru
          _
      $region24: #{tpu_custom_call.1} parent=5 // pred_fallthru
        _
      %p139 = scmp.le.s32.totalorder 1, %s12
      %p140 = scmp.lt.s32.totalorder %s12, 3
      %p141 = pnand %p139, %p140
      %p142 = pneg %p141
      // Predicated region
      $region29: #{tpu_custom_call.1} parent=5 // pred_check
        _
      $region30: #{tpu_custom_call.1} parent=5 // pred_check_branch
        %144 = sbr.rel (%p141) target = $region32
      $region31: #{tpu_custom_call.1} parent=5 // pred_region
        %s145 = ssub.s32 %s12, 1
        %p146 = scmp.lt.s32.totalorder %s17, 1
        %s147 = scalar_select %p146, %s17, 1
        %s148 = smul.addr %s147, 42
        %s149 = smul.addr %s148, 4
        %s150 = scalar_lea.vmem %s0, %s149
        %p151 = pneg %p38
        %p152 = pneg %p35
        %p153 = pneg %p59
        %p154 = pneg %p56
        %p155 = pneg %p80
        %p156 = pneg %p77
        %p157 = pneg %p106
        %p158 = pneg %p103
        %s159 = sand.u32 %s93, 1
        %s160 = scalar_lea.sflag [#allocation3], %s159
        %s161 = sand.u32 %s93, 1
        %s162 = smul.addr %s161, 144
        %s163 = scalar_lea.vmem [#allocation2], %s162
        %p164 = scmp.lt.s32.totalorder %s17, 1
        %s165 = scalar_select %p164, %s17, 1
        %s166 = smul.addr %s165, 42
        %s167 = smul.addr %s166, 4
        %s168 = scalar_lea.vmem %s0, %s167
        %s169 = smul.u32 36, %s17
        %v171 = vld [vmem:[%s168] sm:$0xf]
        %v172 = vld [vmem:[%s168 + $0x4] sm:$0xf]
        %v173 = vld [vmem:[%s168 + $0x8] sm:$0xf]
        %v174 = vld [vmem:[%s168 + $0xc] sm:$0xf]
        %v175 = vld [vmem:[%s168 + $0x10] sm:$0xf]
        %v176 = vld [vmem:[%s168 + $0x14] sm:$0xf]
        %v177 = vld [vmem:[%s168 + $0x18] sm:$0xf]
        %v178 = vld [vmem:[%s168 + $0x1c] sm:$0xf]
        %v179 = vld [vmem:[%s168 + $0x20] sm:$0xf]
        %v180 = vld [vmem:[%s168 + $0x24] sm:$0xf]
        %v181 = vld [vmem:[%s168 + $0x28] sm:$0xf]
        %v182 = vld [vmem:[%s168 + $0x2c] sm:$0xf]
        %v183 = vld [vmem:[%s168 + $0x30] sm:$0xf]
        %v184 = vld [vmem:[%s168 + $0x34] sm:$0xf]
        %v185 = vld [vmem:[%s168 + $0x38] sm:$0xf]
        %v186 = vld [vmem:[%s168 + $0x3c] sm:$0xf]
        %v187 = vld [vmem:[%s168 + $0x40] sm:$0xf]
        %v188 = vld [vmem:[%s168 + $0x44] sm:$0xf]
        %v189 = vld [vmem:[%s168 + $0x48] sm:$0xf]
        %v190 = vld [vmem:[%s168 + $0x4c] sm:$0xf]
        %v191 = vld [vmem:[%s168 + $0x50] sm:$0xf]
        %v192 = vld [vmem:[%s168 + $0x54] sm:$0xf]
        %v193 = vld [vmem:[%s168 + $0x58] sm:$0xf]
        %v194 = vld [vmem:[%s168 + $0x5c] sm:$0xf]
        %v195 = vld [vmem:[%s168 + $0x60] sm:$0xf]
        %v196 = vld [vmem:[%s168 + $0x64] sm:$0xf]
        %v197 = vld [vmem:[%s168 + $0x68] sm:$0xf]
        %v198 = vld [vmem:[%s168 + $0x6c] sm:$0xf]
        %v199 = vld [vmem:[%s168 + $0x70] sm:$0xf]
        %v200 = vld [vmem:[%s168 + $0x74] sm:$0xf]
        %v201 = vld [vmem:[%s168 + $0x78] sm:$0xf]
        %v202 = vld [vmem:[%s168 + $0x7c] sm:$0xf]
        %v203 = vld [vmem:[%s168 + $0x80] sm:$0xf]
        %v204 = vld [vmem:[%s168 + $0x84] sm:$0xf]
        %v205 = vld [vmem:[%s168 + $0x88] sm:$0xf]
        %v206 = vld [vmem:[%s168 + $0x8c] sm:$0xf]
        %v207 = vld [vmem:[%s1] sm:$0xf]
        %v208 = vld [vmem:[%s1 + $0x4] sm:$0xf]
        %v209 = vld [vmem:[%s168 + $0x90] sm:$0x1]
        %s210 = scalar_lea.vmem %s1, 8
        %v211 = vld [vmem:[%s210] sm:$0xf]
        %v212 = vld [vmem:[%s210 + $0x4] sm:$0xf]
        %v250 = vunpack.c.l.b16 %v171
        %v251 = vunpack.c.l.b16 %v172
        %v252 = vunpack.c.l.b16 %v173
        %v253 = vunpack.c.l.b16 %v174
        %v254 = vunpack.c.l.b16 %v175
        %v255 = vunpack.c.l.b16 %v176
        %v256 = vunpack.c.l.b16 %v177
        %v257 = vunpack.c.l.b16 %v178
        %v258 = vunpack.c.l.b16 %v179
        %v259 = vunpack.c.l.b16 %v180
        %v260 = vunpack.c.l.b16 %v181
        %v261 = vunpack.c.l.b16 %v182
        %v262 = vunpack.c.l.b16 %v183
        %v263 = vunpack.c.l.b16 %v184
        %v264 = vunpack.c.l.b16 %v185
        %v265 = vunpack.c.l.b16 %v186
        %v266 = vunpack.c.l.b16 %v187
        %v267 = vunpack.c.l.b16 %v188
        %v268 = vunpack.c.l.b16 %v189
        %v269 = vunpack.c.l.b16 %v190
        %v270 = vunpack.c.l.b16 %v191
        %v271 = vunpack.c.l.b16 %v192
        %v272 = vunpack.c.l.b16 %v193
        %v273 = vunpack.c.l.b16 %v194
        %v274 = vunpack.c.l.b16 %v195
        %v275 = vunpack.c.l.b16 %v196
        %v276 = vunpack.c.l.b16 %v197
        %v277 = vunpack.c.l.b16 %v198
        %v278 = vunpack.c.l.b16 %v199
        %v279 = vunpack.c.l.b16 %v200
        %v280 = vunpack.c.l.b16 %v201
        %v281 = vunpack.c.l.b16 %v202
        %v282 = vunpack.c.l.b16 %v203
        %v283 = vunpack.c.l.b16 %v204
        %v284 = vunpack.c.l.b16 %v205
        %v285 = vunpack.c.l.b16 %v206
        %v286 = vunpack.c.l.b16 %v209
        %v287 = vpack.c.b16 %v251, %v250
        %v288 = vpack.c.b16 %v253, %v252
        %v289 = vpack.c.b16 %v255, %v254
        %v290 = vpack.c.b16 %v257, %v256
        %v291 = vpack.c.b16 %v259, %v258
        %v292 = vpack.c.b16 %v261, %v260
        %v293 = vpack.c.b16 %v263, %v262
        %v294 = vpack.c.b16 %v265, %v264
        %v295 = vpack.c.b16 %v267, %v266
        %v296 = vpack.c.b16 %v269, %v268
        %v297 = vpack.c.b16 %v271, %v270
        %v298 = vpack.c.b16 %v273, %v272
        %v299 = vpack.c.b16 %v275, %v274
        %v300 = vpack.c.b16 %v277, %v276
        %v301 = vpack.c.b16 %v279, %v278
        %v302 = vpack.c.b16 %v281, %v280
        %v303 = vpack.c.b16 %v283, %v282
        %v304 = vpack.c.b16 %v285, %v284
        %v305 = vpack.c.b16 %v286, %v286
        %vm306 = vsmask.f32 7424
        %v308 = vshrl.u32 %v287, 16
        %v310 = vshll.u32 %v287, 16
        %v312 = vrot.slane %v310, 1
        %v313 = vor.u32 %v308, %v312
        %v315 = vshll.u32 %v288, 16
        %v317 = vrot.slane %v315, 1
        %v318 = vsel %vm306, %v313, %v317
        %v319 = vshrl.u32 %v288, 16
        %v321 = vor.u32 %v319, %v317
        %v323 = vshll.u32 %v289, 16
        %v325 = vrot.slane %v323, 1
        %v326 = vsel %vm306, %v321, %v325
        %v327 = vshrl.u32 %v289, 16
        %v329 = vor.u32 %v327, %v325
        %v331 = vshll.u32 %v290, 16
        %v333 = vrot.slane %v331, 1
        %v334 = vsel %vm306, %v329, %v333
        %v335 = vshrl.u32 %v290, 16
        %v337 = vor.u32 %v335, %v333
        %v339 = vshll.u32 %v291, 16
        %v341 = vrot.slane %v339, 1
        %v342 = vsel %vm306, %v337, %v341
        %v343 = vshrl.u32 %v291, 16
        %v345 = vor.u32 %v343, %v341
        %v347 = vshll.u32 %v292, 16
        %v349 = vrot.slane %v347, 1
        %v350 = vsel %vm306, %v345, %v349
        %v351 = vshrl.u32 %v292, 16
        %v353 = vor.u32 %v351, %v349
        %v355 = vshll.u32 %v293, 16
        %v357 = vrot.slane %v355, 1
        %v358 = vsel %vm306, %v353, %v357
        %v359 = vshrl.u32 %v293, 16
        %v361 = vor.u32 %v359, %v357
        %v363 = vshll.u32 %v294, 16
        %v365 = vrot.slane %v363, 1
        %v366 = vsel %vm306, %v361, %v365
        %v367 = vshrl.u32 %v294, 16
        %v369 = vor.u32 %v367, %v365
        %v371 = vshll.u32 %v295, 16
        %v373 = vrot.slane %v371, 1
        %v374 = vsel %vm306, %v369, %v373
        %v375 = vshrl.u32 %v295, 16
        %v377 = vor.u32 %v375, %v373
        %v379 = vshll.u32 %v296, 16
        %v381 = vrot.slane %v379, 1
        %v382 = vsel %vm306, %v377, %v381
        %v383 = vshrl.u32 %v296, 16
        %v385 = vor.u32 %v383, %v381
        %v387 = vshll.u32 %v297, 16
        %v389 = vrot.slane %v387, 1
        %v390 = vsel %vm306, %v385, %v389
        %v391 = vshrl.u32 %v297, 16
        %v393 = vor.u32 %v391, %v389
        %v395 = vshll.u32 %v298, 16
        %v397 = vrot.slane %v395, 1
        %v398 = vsel %vm306, %v393, %v397
        %v399 = vshrl.u32 %v298, 16
        %v401 = vor.u32 %v399, %v397
        %v403 = vshll.u32 %v299, 16
        %v405 = vrot.slane %v403, 1
        %v406 = vsel %vm306, %v401, %v405
        %v407 = vshrl.u32 %v299, 16
        %v409 = vor.u32 %v407, %v405
        %v411 = vshll.u32 %v300, 16
        %v413 = vrot.slane %v411, 1
        %v414 = vsel %vm306, %v409, %v413
        %v415 = vshrl.u32 %v300, 16
        %v417 = vor.u32 %v415, %v413
        %v419 = vshll.u32 %v301, 16
        %v421 = vrot.slane %v419, 1
        %v422 = vsel %vm306, %v417, %v421
        %v423 = vshrl.u32 %v301, 16
        %v425 = vor.u32 %v423, %v421
        %v427 = vshll.u32 %v302, 16
        %v429 = vrot.slane %v427, 1
        %v430 = vsel %vm306, %v425, %v429
        %v431 = vshrl.u32 %v302, 16
        %v433 = vor.u32 %v431, %v429
        %v435 = vshll.u32 %v303, 16
        %v437 = vrot.slane %v435, 1
        %v438 = vsel %vm306, %v433, %v437
        %v439 = vshrl.u32 %v303, 16
        %v441 = vor.u32 %v439, %v437
        %v443 = vshll.u32 %v304, 16
        %v445 = vrot.slane %v443, 1
        %v446 = vsel %vm306, %v441, %v445
        %v447 = vshrl.u32 %v304, 16
        %v449 = vor.u32 %v447, %v445
        %v451 = vshll.u32 %v305, 16
        %v453 = vrot.slane %v451, 1
        %v454 = vsel %vm306, %v449, %v453
        %v457 = vunpack.c.l.b16 %v211
        %v458 = vunpack.c.l.b16 %v212
        %v459 = vpack.c.b16 %v458, %v457
        %vm461 = vcmask 130048
        %v463 = vsel %vm461, %v318, 0
        %v466 = vsel %vm461, %v326, 0
        %v469 = vsel %vm461, %v334, 0
        %v472 = vsel %vm461, %v342, 0
        %v475 = vsel %vm461, %v350, 0
        %v478 = vsel %vm461, %v358, 0
        %v481 = vsel %vm461, %v366, 0
        %v484 = vsel %vm461, %v374, 0
        %v487 = vsel %vm461, %v382, 0
        %v490 = vsel %vm461, %v390, 0
        %v493 = vsel %vm461, %v398, 0
        %v496 = vsel %vm461, %v406, 0
        %v499 = vsel %vm461, %v414, 0
        %v502 = vsel %vm461, %v422, 0
        %v505 = vsel %vm461, %v430, 0
        %v508 = vsel %vm461, %v438, 0
        %v511 = vsel %vm461, %v446, 0
        %v514 = vsel %vm461, %v454, 0
        %516 = vmatprep.subr.bf16.mxu0 0
        %517 = vmatpush1.bf16.msra.mxu0 0
        %518 = vmatprep.subr.bf16.mxu0 0
        %519 = vmatpush1.bf16.msra.mxu0 0
        %520 = vmatprep.subr.bf16.mxu0 0
        %521 = vmatpush1.bf16.msra.mxu0 0
        %522 = vmatprep.subr.bf16.mxu0 0
        %523 = vmatpush1.bf16.msra.mxu0 0
        %524 = vmatprep.subr.bf16.mxu0 0
        %525 = vmatpush1.bf16.msra.mxu0 0
        %526 = vmatprep.subr.bf16.mxu0 0
        %527 = vmatpush1.bf16.msra.mxu0 0
        %528 = vmatprep.subr.bf16.mxu0 0
        %529 = vmatpush1.bf16.msra.mxu0 0
        %530 = vmatprep.subr.bf16.mxu0 0
        %531 = vmatpush1.bf16.msra.mxu0 %v459
        %532 = vmatprep.subr.bf16.mxu0 0
        %533 = vmatpush2.bf16.msra.mxu0 0
        %534 = vmatprep.subr.bf16.mxu0 0
        %535 = vmatpush2.bf16.msra.mxu0 0
        %536 = vmatprep.subr.bf16.mxu0 0
        %537 = vmatpush2.bf16.msra.mxu0 0
        %538 = vmatprep.subr.bf16.mxu0 0
        %539 = vmatpush2.bf16.msra.mxu0 0
        %540 = vmatprep.subr.bf16.mxu0 0
        %541 = vmatpush2.bf16.msra.mxu0 0
        %542 = vmatprep.subr.bf16.mxu0 0
        %543 = vmatpush2.bf16.msra.mxu0 0
        %544 = vmatprep.subr.bf16.mxu0 0
        %545 = vmatpush2.bf16.msra.mxu0 0
        %546 = vmatprep.subr.bf16.mxu0 0
        %547 = vmatpush2.bf16.msra.mxu0 0
        %548 = vmatprep.mubr.bf16.mxu0 0
        %549 = vmatmul.mubr.bf16.gmra.mxu0 %v463
        %v550 = vpop.f32.mrf.mxu0
        %v551 = vadd.f32 0.0, %v550
        %v552 = vpop.f32.mrf.mxu0
        %v553 = vpop.f32.mrf.mxu0
        %v554 = vadd.f32 0.0, %v553
        %v555 = vpop.f32.mrf.mxu0
        %556 = vmatprep.mubr.bf16.mxu0 0
        %557 = vmatmul.mubr.bf16.gmra.mxu0 %v466
        %v558 = vpop.f32.mrf.mxu0
        %v559 = vadd.f32 0.0, %v558
        %v560 = vpop.f32.mrf.mxu0
        %v561 = vpop.f32.mrf.mxu0
        %v562 = vadd.f32 0.0, %v561
        %v563 = vpop.f32.mrf.mxu0
        %564 = vmatprep.mubr.bf16.mxu0 0
        %565 = vmatmul.mubr.bf16.gmra.mxu0 %v469
        %v566 = vpop.f32.mrf.mxu0
        %v567 = vadd.f32 0.0, %v566
        %v568 = vpop.f32.mrf.mxu0
        %v569 = vpop.f32.mrf.mxu0
        %v570 = vadd.f32 0.0, %v569
        %v571 = vpop.f32.mrf.mxu0
        %572 = vmatprep.mubr.bf16.mxu0 0
        %573 = vmatmul.mubr.bf16.gmra.mxu0 %v472
        %v574 = vpop.f32.mrf.mxu0
        %v575 = vadd.f32 0.0, %v574
        %v576 = vpop.f32.mrf.mxu0
        %v577 = vpop.f32.mrf.mxu0
        %v578 = vadd.f32 0.0, %v577
        %v579 = vpop.f32.mrf.mxu0
        %580 = vmatprep.mubr.bf16.mxu0 0
        %581 = vmatmul.mubr.bf16.gmra.mxu0 %v475
        %v582 = vpop.f32.mrf.mxu0
        %v583 = vadd.f32 0.0, %v582
        %v584 = vpop.f32.mrf.mxu0
        %v585 = vpop.f32.mrf.mxu0
        %v586 = vadd.f32 0.0, %v585
        %v587 = vpop.f32.mrf.mxu0
        %588 = vmatprep.mubr.bf16.mxu0 0
        %589 = vmatmul.mubr.bf16.gmra.mxu0 %v478
        %v590 = vpop.f32.mrf.mxu0
        %v591 = vadd.f32 0.0, %v590
        %v592 = vpop.f32.mrf.mxu0
        %v593 = vpop.f32.mrf.mxu0
        %v594 = vadd.f32 0.0, %v593
        %v595 = vpop.f32.mrf.mxu0
        %596 = vmatprep.mubr.bf16.mxu0 0
        %597 = vmatmul.mubr.bf16.gmra.mxu0 %v481
        %v598 = vpop.f32.mrf.mxu0
        %v599 = vadd.f32 0.0, %v598
        %v600 = vpop.f32.mrf.mxu0
        %v601 = vpop.f32.mrf.mxu0
        %v602 = vadd.f32 0.0, %v601
        %v603 = vpop.f32.mrf.mxu0
        %604 = vmatprep.mubr.bf16.mxu0 0
        %605 = vmatmul.mubr.bf16.gmra.mxu0 %v484
        %v606 = vpop.f32.mrf.mxu0
        %v607 = vadd.f32 0.0, %v606
        %v608 = vpop.f32.mrf.mxu0
        %v609 = vpop.f32.mrf.mxu0
        %v610 = vadd.f32 0.0, %v609
        %v611 = vpop.f32.mrf.mxu0
        %612 = vmatprep.mubr.bf16.mxu0 0
        %613 = vmatmul.mubr.bf16.gmra.mxu0 %v487
        %v614 = vpop.f32.mrf.mxu0
        %v615 = vadd.f32 0.0, %v614
        %v616 = vpop.f32.mrf.mxu0
        %v617 = vpop.f32.mrf.mxu0
        %v618 = vadd.f32 0.0, %v617
        %v619 = vpop.f32.mrf.mxu0
        %620 = vmatprep.mubr.bf16.mxu0 0
        %621 = vmatmul.mubr.bf16.gmra.mxu0 %v490
        %v622 = vpop.f32.mrf.mxu0
        %v623 = vadd.f32 0.0, %v622
        %v624 = vpop.f32.mrf.mxu0
        %v625 = vpop.f32.mrf.mxu0
        %v626 = vadd.f32 0.0, %v625
        %v627 = vpop.f32.mrf.mxu0
        %628 = vmatprep.mubr.bf16.mxu0 0
        %629 = vmatmul.mubr.bf16.gmra.mxu0 %v493
        %v630 = vpop.f32.mrf.mxu0
        %v631 = vadd.f32 0.0, %v630
        %v632 = vpop.f32.mrf.mxu0
        %v633 = vpop.f32.mrf.mxu0
        %v634 = vadd.f32 0.0, %v633
        %v635 = vpop.f32.mrf.mxu0
        %636 = vmatprep.mubr.bf16.mxu0 0
        %637 = vmatmul.mubr.bf16.gmra.mxu0 %v496
        %v638 = vpop.f32.mrf.mxu0
        %v639 = vadd.f32 0.0, %v638
        %v640 = vpop.f32.mrf.mxu0
        %v641 = vpop.f32.mrf.mxu0
        %v642 = vadd.f32 0.0, %v641
        %v643 = vpop.f32.mrf.mxu0
        %644 = vmatprep.mubr.bf16.mxu0 0
        %645 = vmatmul.mubr.bf16.gmra.mxu0 %v499
        %v646 = vpop.f32.mrf.mxu0
        %v647 = vadd.f32 0.0, %v646
        %v648 = vpop.f32.mrf.mxu0
        %v649 = vpop.f32.mrf.mxu0
        %v650 = vadd.f32 0.0, %v649
        %v651 = vpop.f32.mrf.mxu0
        %652 = vmatprep.mubr.bf16.mxu0 0
        %653 = vmatmul.mubr.bf16.gmra.mxu0 %v502
        %v654 = vpop.f32.mrf.mxu0
        %v655 = vadd.f32 0.0, %v654
        %v656 = vpop.f32.mrf.mxu0
        %v657 = vpop.f32.mrf.mxu0
        %v658 = vadd.f32 0.0, %v657
        %v659 = vpop.f32.mrf.mxu0
        %660 = vmatprep.mubr.bf16.mxu0 0
        %661 = vmatmul.mubr.bf16.gmra.mxu0 %v505
        %v662 = vpop.f32.mrf.mxu0
        %v663 = vadd.f32 0.0, %v662
        %v664 = vpop.f32.mrf.mxu0
        %v665 = vpop.f32.mrf.mxu0
        %v666 = vadd.f32 0.0, %v665
        %v667 = vpop.f32.mrf.mxu0
        %668 = vmatprep.mubr.bf16.mxu0 0
        %669 = vmatmul.mubr.bf16.gmra.mxu0 %v508
        %v670 = vpop.f32.mrf.mxu0
        %v671 = vadd.f32 0.0, %v670
        %v672 = vpop.f32.mrf.mxu0
        %v673 = vpop.f32.mrf.mxu0
        %v674 = vadd.f32 0.0, %v673
        %v675 = vpop.f32.mrf.mxu0
        %676 = vmatprep.mubr.bf16.mxu0 0
        %677 = vmatmul.mubr.bf16.gmra.mxu0 %v511
        %v678 = vpop.f32.mrf.mxu0
        %v679 = vadd.f32 0.0, %v678
        %v680 = vpop.f32.mrf.mxu0
        %v681 = vpop.f32.mrf.mxu0
        %v682 = vadd.f32 0.0, %v681
        %v683 = vpop.f32.mrf.mxu0
        %684 = vmatprep.mubr.bf16.mxu0 0
        %685 = vmatmul.mubr.bf16.gmra.mxu0 %v514
        %v686 = vpop.f32.mrf.mxu0
        %v687 = vadd.f32 0.0, %v686
        %v688 = vpop.f32.mrf.mxu0
        %v689 = vpop.f32.mrf.mxu0
        %v690 = vadd.f32 0.0, %v689
        %v691 = vpop.f32.mrf.mxu0
        %692 = vdwg.mxu0
        %v695 = vunpack.c.l.b16 %v207
        %v696 = vunpack.c.l.b16 %v208
        %v697 = vpack.c.b16 %v696, %v695
        %v699 = vsel %vm461, %v287, 0
        %v701 = vsel %vm461, %v288, 0
        %v703 = vsel %vm461, %v289, 0
        %v705 = vsel %vm461, %v290, 0
        %v707 = vsel %vm461, %v291, 0
        %v709 = vsel %vm461, %v292, 0
        %v711 = vsel %vm461, %v293, 0
        %v713 = vsel %vm461, %v294, 0
        %v715 = vsel %vm461, %v295, 0
        %v717 = vsel %vm461, %v296, 0
        %v719 = vsel %vm461, %v297, 0
        %v721 = vsel %vm461, %v298, 0
        %v723 = vsel %vm461, %v299, 0
        %v725 = vsel %vm461, %v300, 0
        %v727 = vsel %vm461, %v301, 0
        %v729 = vsel %vm461, %v302, 0
        %v731 = vsel %vm461, %v303, 0
        %v733 = vsel %vm461, %v304, 0
        %735 = vmatprep.subr.bf16.mxu0 0
        %736 = vmatpush1.bf16.msra.mxu0 0
        %737 = vmatprep.subr.bf16.mxu0 0
        %738 = vmatpush1.bf16.msra.mxu0 0
        %739 = vmatprep.subr.bf16.mxu0 0
        %740 = vmatpush1.bf16.msra.mxu0 0
        %741 = vmatprep.subr.bf16.mxu0 0
        %742 = vmatpush1.bf16.msra.mxu0 0
        %743 = vmatprep.subr.bf16.mxu0 0
        %744 = vmatpush1.bf16.msra.mxu0 0
        %745 = vmatprep.subr.bf16.mxu0 0
        %746 = vmatpush1.bf16.msra.mxu0 0
        %747 = vmatprep.subr.bf16.mxu0 0
        %748 = vmatpush1.bf16.msra.mxu0 0
        %749 = vmatprep.subr.bf16.mxu0 0
        %750 = vmatpush1.bf16.msra.mxu0 %v697
        %751 = vmatprep.subr.bf16.mxu0 0
        %752 = vmatpush2.bf16.msra.mxu0 0
        %753 = vmatprep.subr.bf16.mxu0 0
        %754 = vmatpush2.bf16.msra.mxu0 0
        %755 = vmatprep.subr.bf16.mxu0 0
        %756 = vmatpush2.bf16.msra.mxu0 0
        %757 = vmatprep.subr.bf16.mxu0 0
        %758 = vmatpush2.bf16.msra.mxu0 0
        %759 = vmatprep.subr.bf16.mxu0 0
        %760 = vmatpush2.bf16.msra.mxu0 0
        %761 = vmatprep.subr.bf16.mxu0 0
        %762 = vmatpush2.bf16.msra.mxu0 0
        %763 = vmatprep.subr.bf16.mxu0 0
        %764 = vmatpush2.bf16.msra.mxu0 0
        %765 = vmatprep.subr.bf16.mxu0 0
        %766 = vmatpush2.bf16.msra.mxu0 0
        %767 = vmatprep.mubr.bf16.mxu0 0
        %768 = vmatmul.mubr.bf16.gmra.mxu0 %v699
        %v769 = vpop.f32.mrf.mxu0
        %v770 = vadd.f32 %v551, %v769
        %v771 = vpop.f32.mrf.mxu0
        %v772 = vpop.f32.mrf.mxu0
        %v773 = vadd.f32 %v554, %v772
        %v774 = vpop.f32.mrf.mxu0
        %775 = vmatprep.mubr.bf16.mxu0 0
        %776 = vmatmul.mubr.bf16.gmra.mxu0 %v701
        %v777 = vpop.f32.mrf.mxu0
        %v778 = vadd.f32 %v559, %v777
        %v779 = vpop.f32.mrf.mxu0
        %v780 = vpop.f32.mrf.mxu0
        %v781 = vadd.f32 %v562, %v780
        %v782 = vpop.f32.mrf.mxu0
        %783 = vmatprep.mubr.bf16.mxu0 0
        %784 = vmatmul.mubr.bf16.gmra.mxu0 %v703
        %v785 = vpop.f32.mrf.mxu0
        %v786 = vadd.f32 %v567, %v785
        %v787 = vpop.f32.mrf.mxu0
        %v788 = vpop.f32.mrf.mxu0
        %v789 = vadd.f32 %v570, %v788
        %v790 = vpop.f32.mrf.mxu0
        %791 = vmatprep.mubr.bf16.mxu0 0
        %792 = vmatmul.mubr.bf16.gmra.mxu0 %v705
        %v793 = vpop.f32.mrf.mxu0
        %v794 = vadd.f32 %v575, %v793
        %v795 = vpop.f32.mrf.mxu0
        %v796 = vpop.f32.mrf.mxu0
        %v797 = vadd.f32 %v578, %v796
        %v798 = vpop.f32.mrf.mxu0
        %799 = vmatprep.mubr.bf16.mxu0 0
        %800 = vmatmul.mubr.bf16.gmra.mxu0 %v707
        %v801 = vpop.f32.mrf.mxu0
        %v802 = vadd.f32 %v583, %v801
        %v803 = vpop.f32.mrf.mxu0
        %v804 = vpop.f32.mrf.mxu0
        %v805 = vadd.f32 %v586, %v804
        %v806 = vpop.f32.mrf.mxu0
        %807 = vmatprep.mubr.bf16.mxu0 0
        %808 = vmatmul.mubr.bf16.gmra.mxu0 %v709
        %v809 = vpop.f32.mrf.mxu0
        %v810 = vadd.f32 %v591, %v809
        %v811 = vpop.f32.mrf.mxu0
        %v812 = vpop.f32.mrf.mxu0
        %v813 = vadd.f32 %v594, %v812
        %v814 = vpop.f32.mrf.mxu0
        %815 = vmatprep.mubr.bf16.mxu0 0
        %816 = vmatmul.mubr.bf16.gmra.mxu0 %v711
        %v817 = vpop.f32.mrf.mxu0
        %v818 = vadd.f32 %v599, %v817
        %v819 = vpop.f32.mrf.mxu0
        %v820 = vpop.f32.mrf.mxu0
        %v821 = vadd.f32 %v602, %v820
        %v822 = vpop.f32.mrf.mxu0
        %823 = vmatprep.mubr.bf16.mxu0 0
        %824 = vmatmul.mubr.bf16.gmra.mxu0 %v713
        %v825 = vpop.f32.mrf.mxu0
        %v826 = vadd.f32 %v607, %v825
        %v827 = vpop.f32.mrf.mxu0
        %v828 = vpop.f32.mrf.mxu0
        %v829 = vadd.f32 %v610, %v828
        %v830 = vpop.f32.mrf.mxu0
        %831 = vmatprep.mubr.bf16.mxu0 0
        %832 = vmatmul.mubr.bf16.gmra.mxu0 %v715
        %v833 = vpop.f32.mrf.mxu0
        %v834 = vadd.f32 %v615, %v833
        %v835 = vpop.f32.mrf.mxu0
        %v836 = vpop.f32.mrf.mxu0
        %v837 = vadd.f32 %v618, %v836
        %v838 = vpop.f32.mrf.mxu0
        %839 = vmatprep.mubr.bf16.mxu0 0
        %840 = vmatmul.mubr.bf16.gmra.mxu0 %v717
        %v841 = vpop.f32.mrf.mxu0
        %v842 = vadd.f32 %v623, %v841
        %v843 = vpop.f32.mrf.mxu0
        %v844 = vpop.f32.mrf.mxu0
        %v845 = vadd.f32 %v626, %v844
        %v846 = vpop.f32.mrf.mxu0
        %847 = vmatprep.mubr.bf16.mxu0 0
        %848 = vmatmul.mubr.bf16.gmra.mxu0 %v719
        %v849 = vpop.f32.mrf.mxu0
        %v850 = vadd.f32 %v631, %v849
        %v851 = vpop.f32.mrf.mxu0
        %v852 = vpop.f32.mrf.mxu0
        %v853 = vadd.f32 %v634, %v852
        %v854 = vpop.f32.mrf.mxu0
        %855 = vmatprep.mubr.bf16.mxu0 0
        %856 = vmatmul.mubr.bf16.gmra.mxu0 %v721
        %v857 = vpop.f32.mrf.mxu0
        %v858 = vadd.f32 %v639, %v857
        %v859 = vpop.f32.mrf.mxu0
        %v860 = vpop.f32.mrf.mxu0
        %v861 = vadd.f32 %v642, %v860
        %v862 = vpop.f32.mrf.mxu0
        %863 = vmatprep.mubr.bf16.mxu0 0
        %864 = vmatmul.mubr.bf16.gmra.mxu0 %v723
        %v865 = vpop.f32.mrf.mxu0
        %v866 = vadd.f32 %v647, %v865
        %v867 = vpop.f32.mrf.mxu0
        %v868 = vpop.f32.mrf.mxu0
        %v869 = vadd.f32 %v650, %v868
        %v870 = vpop.f32.mrf.mxu0
        %871 = vmatprep.mubr.bf16.mxu0 0
        %872 = vmatmul.mubr.bf16.gmra.mxu0 %v725
        %v873 = vpop.f32.mrf.mxu0
        %v874 = vadd.f32 %v655, %v873
        %v875 = vpop.f32.mrf.mxu0
        %v876 = vpop.f32.mrf.mxu0
        %v877 = vadd.f32 %v658, %v876
        %v878 = vpop.f32.mrf.mxu0
        %879 = vmatprep.mubr.bf16.mxu0 0
        %880 = vmatmul.mubr.bf16.gmra.mxu0 %v727
        %v881 = vpop.f32.mrf.mxu0
        %v882 = vadd.f32 %v663, %v881
        %v883 = vpop.f32.mrf.mxu0
        %v884 = vpop.f32.mrf.mxu0
        %v885 = vadd.f32 %v666, %v884
        %v886 = vpop.f32.mrf.mxu0
        %887 = vmatprep.mubr.bf16.mxu0 0
        %888 = vmatmul.mubr.bf16.gmra.mxu0 %v729
        %v889 = vpop.f32.mrf.mxu0
        %v890 = vadd.f32 %v671, %v889
        %v891 = vpop.f32.mrf.mxu0
        %v892 = vpop.f32.mrf.mxu0
        %v893 = vadd.f32 %v674, %v892
        %v894 = vpop.f32.mrf.mxu0
        %895 = vmatprep.mubr.bf16.mxu0 0
        %896 = vmatmul.mubr.bf16.gmra.mxu0 %v731
        %v897 = vpop.f32.mrf.mxu0
        %v898 = vadd.f32 %v679, %v897
        %v899 = vpop.f32.mrf.mxu0
        %v900 = vpop.f32.mrf.mxu0
        %v901 = vadd.f32 %v682, %v900
        %v902 = vpop.f32.mrf.mxu0
        %903 = vmatprep.mubr.bf16.mxu0 0
        %904 = vmatmul.mubr.bf16.gmra.mxu0 %v733
        %v905 = vpop.f32.mrf.mxu0
        %v906 = vadd.f32 %v687, %v905
        %v907 = vpop.f32.mrf.mxu0
        %v908 = vpop.f32.mrf.mxu0
        %v909 = vadd.f32 %v690, %v908
        %v910 = vpop.f32.mrf.mxu0
        %911 = vdwg.mxu0
        %v912 = vld [vmem:[%s168] sm:$0xe]
        %s913 = scalar_lea.vmem %s1, 16
        %v914 = vld [vmem:[%s913] sm:$0xf]
        %v915 = vld [vmem:[%s913 + $0x4] sm:$0xf]
        %v917 = vunpack.c.l.b16 %v912
        %v918 = vpack.c.b16 %v251, %v917
        %vm919 = vcmask 1046528
        %v920 = vrot.slane %v918, 1
        %v921 = vrot.slane %v288, 1
        %v922 = vsel %vm919, %v920, %v921
        %v923 = vrot.slane %v289, 1
        %v924 = vsel %vm919, %v921, %v923
        %v925 = vrot.slane %v290, 1
        %v926 = vsel %vm919, %v923, %v925
        %v927 = vrot.slane %v291, 1
        %v928 = vsel %vm919, %v925, %v927
        %v929 = vrot.slane %v292, 1
        %v930 = vsel %vm919, %v927, %v929
        %v931 = vrot.slane %v293, 1
        %v932 = vsel %vm919, %v929, %v931
        %v933 = vrot.slane %v294, 1
        %v934 = vsel %vm919, %v931, %v933
        %v935 = vrot.slane %v295, 1
        %v936 = vsel %vm919, %v933, %v935
        %v937 = vrot.slane %v296, 1
        %v938 = vsel %vm919, %v935, %v937
        %v939 = vrot.slane %v297, 1
        %v940 = vsel %vm919, %v937, %v939
        %v941 = vrot.slane %v298, 1
        %v942 = vsel %vm919, %v939, %v941
        %v943 = vrot.slane %v299, 1
        %v944 = vsel %vm919, %v941, %v943
        %v945 = vrot.slane %v300, 1
        %v946 = vsel %vm919, %v943, %v945
        %v947 = vrot.slane %v301, 1
        %v948 = vsel %vm919, %v945, %v947
        %v949 = vrot.slane %v302, 1
        %v950 = vsel %vm919, %v947, %v949
        %v951 = vrot.slane %v303, 1
        %v952 = vsel %vm919, %v949, %v951
        %v953 = vrot.slane %v304, 1
        %v954 = vsel %vm919, %v951, %v953
        %v955 = vrot.slane %v305, 1
        %v956 = vsel %vm919, %v953, %v955
        %v959 = vunpack.c.l.b16 %v914
        %v960 = vunpack.c.l.b16 %v915
        %v961 = vpack.c.b16 %v960, %v959
        %v964 = vsel %vm461, %v922, 0
        %v967 = vsel %vm461, %v924, 0
        %v970 = vsel %vm461, %v926, 0
        %v973 = vsel %vm461, %v928, 0
        %v976 = vsel %vm461, %v930, 0
        %v979 = vsel %vm461, %v932, 0
        %v982 = vsel %vm461, %v934, 0
        %v985 = vsel %vm461, %v936, 0
        %v988 = vsel %vm461, %v938, 0
        %v991 = vsel %vm461, %v940, 0
        %v994 = vsel %vm461, %v942, 0
        %v997 = vsel %vm461, %v944, 0
        %v1000 = vsel %vm461, %v946, 0
        %v1003 = vsel %vm461, %v948, 0
        %v1006 = vsel %vm461, %v950, 0
        %v1009 = vsel %vm461, %v952, 0
        %v1012 = vsel %vm461, %v954, 0
        %v1015 = vsel %vm461, %v956, 0
        %1017 = vmatprep.subr.bf16.mxu0 0
        %1018 = vmatpush1.bf16.msra.mxu0 0
        %1019 = vmatprep.subr.bf16.mxu0 0
        %1020 = vmatpush1.bf16.msra.mxu0 0
        %1021 = vmatprep.subr.bf16.mxu0 0
        %1022 = vmatpush1.bf16.msra.mxu0 0
        %1023 = vmatprep.subr.bf16.mxu0 0
        %1024 = vmatpush1.bf16.msra.mxu0 0
        %1025 = vmatprep.subr.bf16.mxu0 0
        %1026 = vmatpush1.bf16.msra.mxu0 0
        %1027 = vmatprep.subr.bf16.mxu0 0
        %1028 = vmatpush1.bf16.msra.mxu0 0
        %1029 = vmatprep.subr.bf16.mxu0 0
        %1030 = vmatpush1.bf16.msra.mxu0 0
        %1031 = vmatprep.subr.bf16.mxu0 0
        %1032 = vmatpush1.bf16.msra.mxu0 %v961
        %1033 = vmatprep.subr.bf16.mxu0 0
        %1034 = vmatpush2.bf16.msra.mxu0 0
        %1035 = vmatprep.subr.bf16.mxu0 0
        %1036 = vmatpush2.bf16.msra.mxu0 0
        %1037 = vmatprep.subr.bf16.mxu0 0
        %1038 = vmatpush2.bf16.msra.mxu0 0
        %1039 = vmatprep.subr.bf16.mxu0 0
        %1040 = vmatpush2.bf16.msra.mxu0 0
        %1041 = vmatprep.subr.bf16.mxu0 0
        %1042 = vmatpush2.bf16.msra.mxu0 0
        %1043 = vmatprep.subr.bf16.mxu0 0
        %1044 = vmatpush2.bf16.msra.mxu0 0
        %1045 = vmatprep.subr.bf16.mxu0 0
        %1046 = vmatpush2.bf16.msra.mxu0 0
        %1047 = vmatprep.subr.bf16.mxu0 0
        %1048 = vmatpush2.bf16.msra.mxu0 0
        %1049 = vmatprep.mubr.bf16.mxu0 0
        %1050 = vmatmul.mubr.bf16.gmra.mxu0 %v964
        %v1051 = vpop.f32.mrf.mxu0
        %v1052 = vadd.f32 0.0, %v1051
        %v1053 = vpop.f32.mrf.mxu0
        %v1054 = vpop.f32.mrf.mxu0
        %v1055 = vadd.f32 0.0, %v1054
        %v1056 = vpop.f32.mrf.mxu0
        %1057 = vmatprep.mubr.bf16.mxu0 0
        %1058 = vmatmul.mubr.bf16.gmra.mxu0 %v967
        %v1059 = vpop.f32.mrf.mxu0
        %v1060 = vadd.f32 0.0, %v1059
        %v1061 = vpop.f32.mrf.mxu0
        %v1062 = vpop.f32.mrf.mxu0
        %v1063 = vadd.f32 0.0, %v1062
        %v1064 = vpop.f32.mrf.mxu0
        %1065 = vmatprep.mubr.bf16.mxu0 0
        %1066 = vmatmul.mubr.bf16.gmra.mxu0 %v970
        %v1067 = vpop.f32.mrf.mxu0
        %v1068 = vadd.f32 0.0, %v1067
        %v1069 = vpop.f32.mrf.mxu0
        %v1070 = vpop.f32.mrf.mxu0
        %v1071 = vadd.f32 0.0, %v1070
        %v1072 = vpop.f32.mrf.mxu0
        %1073 = vmatprep.mubr.bf16.mxu0 0
        %1074 = vmatmul.mubr.bf16.gmra.mxu0 %v973
        %v1075 = vpop.f32.mrf.mxu0
        %v1076 = vadd.f32 0.0, %v1075
        %v1077 = vpop.f32.mrf.mxu0
        %v1078 = vpop.f32.mrf.mxu0
        %v1079 = vadd.f32 0.0, %v1078
        %v1080 = vpop.f32.mrf.mxu0
        %1081 = vmatprep.mubr.bf16.mxu0 0
        %1082 = vmatmul.mubr.bf16.gmra.mxu0 %v976
        %v1083 = vpop.f32.mrf.mxu0
        %v1084 = vadd.f32 0.0, %v1083
        %v1085 = vpop.f32.mrf.mxu0
        %v1086 = vpop.f32.mrf.mxu0
        %v1087 = vadd.f32 0.0, %v1086
        %v1088 = vpop.f32.mrf.mxu0
        %1089 = vmatprep.mubr.bf16.mxu0 0
        %1090 = vmatmul.mubr.bf16.gmra.mxu0 %v979
        %v1091 = vpop.f32.mrf.mxu0
        %v1092 = vadd.f32 0.0, %v1091
        %v1093 = vpop.f32.mrf.mxu0
        %v1094 = vpop.f32.mrf.mxu0
        %v1095 = vadd.f32 0.0, %v1094
        %v1096 = vpop.f32.mrf.mxu0
        %1097 = vmatprep.mubr.bf16.mxu0 0
        %1098 = vmatmul.mubr.bf16.gmra.mxu0 %v982
        %v1099 = vpop.f32.mrf.mxu0
        %v1100 = vadd.f32 0.0, %v1099
        %v1101 = vpop.f32.mrf.mxu0
        %v1102 = vpop.f32.mrf.mxu0
        %v1103 = vadd.f32 0.0, %v1102
        %v1104 = vpop.f32.mrf.mxu0
        %1105 = vmatprep.mubr.bf16.mxu0 0
        %1106 = vmatmul.mubr.bf16.gmra.mxu0 %v985
        %v1107 = vpop.f32.mrf.mxu0
        %v1108 = vadd.f32 0.0, %v1107
        %v1109 = vpop.f32.mrf.mxu0
        %v1110 = vpop.f32.mrf.mxu0
        %v1111 = vadd.f32 0.0, %v1110
        %v1112 = vpop.f32.mrf.mxu0
        %1113 = vmatprep.mubr.bf16.mxu0 0
        %1114 = vmatmul.mubr.bf16.gmra.mxu0 %v988
        %v1115 = vpop.f32.mrf.mxu0
        %v1116 = vadd.f32 0.0, %v1115
        %v1117 = vpop.f32.mrf.mxu0
        %v1118 = vpop.f32.mrf.mxu0
        %v1119 = vadd.f32 0.0, %v1118
        %v1120 = vpop.f32.mrf.mxu0
        %1121 = vmatprep.mubr.bf16.mxu0 0
        %1122 = vmatmul.mubr.bf16.gmra.mxu0 %v991
        %v1123 = vpop.f32.mrf.mxu0
        %v1124 = vadd.f32 0.0, %v1123
        %v1125 = vpop.f32.mrf.mxu0
        %v1126 = vpop.f32.mrf.mxu0
        %v1127 = vadd.f32 0.0, %v1126
        %v1128 = vpop.f32.mrf.mxu0
        %1129 = vmatprep.mubr.bf16.mxu0 0
        %1130 = vmatmul.mubr.bf16.gmra.mxu0 %v994
        %v1131 = vpop.f32.mrf.mxu0
        %v1132 = vadd.f32 0.0, %v1131
        %v1133 = vpop.f32.mrf.mxu0
        %v1134 = vpop.f32.mrf.mxu0
        %v1135 = vadd.f32 0.0, %v1134
        %v1136 = vpop.f32.mrf.mxu0
        %1137 = vmatprep.mubr.bf16.mxu0 0
        %1138 = vmatmul.mubr.bf16.gmra.mxu0 %v997
        %v1139 = vpop.f32.mrf.mxu0
        %v1140 = vadd.f32 0.0, %v1139
        %v1141 = vpop.f32.mrf.mxu0
        %v1142 = vpop.f32.mrf.mxu0
        %v1143 = vadd.f32 0.0, %v1142
        %v1144 = vpop.f32.mrf.mxu0
        %1145 = vmatprep.mubr.bf16.mxu0 0
        %1146 = vmatmul.mubr.bf16.gmra.mxu0 %v1000
        %v1147 = vpop.f32.mrf.mxu0
        %v1148 = vadd.f32 0.0, %v1147
        %v1149 = vpop.f32.mrf.mxu0
        %v1150 = vpop.f32.mrf.mxu0
        %v1151 = vadd.f32 0.0, %v1150
        %v1152 = vpop.f32.mrf.mxu0
        %1153 = vmatprep.mubr.bf16.mxu0 0
        %1154 = vmatmul.mubr.bf16.gmra.mxu0 %v1003
        %v1155 = vpop.f32.mrf.mxu0
        %v1156 = vadd.f32 0.0, %v1155
        %v1157 = vpop.f32.mrf.mxu0
        %v1158 = vpop.f32.mrf.mxu0
        %v1159 = vadd.f32 0.0, %v1158
        %v1160 = vpop.f32.mrf.mxu0
        %1161 = vmatprep.mubr.bf16.mxu0 0
        %1162 = vmatmul.mubr.bf16.gmra.mxu0 %v1006
        %v1163 = vpop.f32.mrf.mxu0
        %v1164 = vadd.f32 0.0, %v1163
        %v1165 = vpop.f32.mrf.mxu0
        %v1166 = vpop.f32.mrf.mxu0
        %v1167 = vadd.f32 0.0, %v1166
        %v1168 = vpop.f32.mrf.mxu0
        %1169 = vmatprep.mubr.bf16.mxu0 0
        %1170 = vmatmul.mubr.bf16.gmra.mxu0 %v1009
        %v1171 = vpop.f32.mrf.mxu0
        %v1172 = vadd.f32 0.0, %v1171
        %v1173 = vpop.f32.mrf.mxu0
        %v1174 = vpop.f32.mrf.mxu0
        %v1175 = vadd.f32 0.0, %v1174
        %v1176 = vpop.f32.mrf.mxu0
        %1177 = vmatprep.mubr.bf16.mxu0 0
        %1178 = vmatmul.mubr.bf16.gmra.mxu0 %v1012
        %v1179 = vpop.f32.mrf.mxu0
        %v1180 = vadd.f32 0.0, %v1179
        %v1181 = vpop.f32.mrf.mxu0
        %v1182 = vpop.f32.mrf.mxu0
        %v1183 = vadd.f32 0.0, %v1182
        %v1184 = vpop.f32.mrf.mxu0
        %1185 = vmatprep.mubr.bf16.mxu0 0
        %1186 = vmatmul.mubr.bf16.gmra.mxu0 %v1015
        %v1187 = vpop.f32.mrf.mxu0
        %v1188 = vadd.f32 0.0, %v1187
        %v1189 = vpop.f32.mrf.mxu0
        %v1190 = vpop.f32.mrf.mxu0
        %v1191 = vadd.f32 0.0, %v1190
        %v1192 = vpop.f32.mrf.mxu0
        %1193 = vdwg.mxu0
        %v1194 = vadd.f32 %v770, %v1052
        %v1195 = vadd.f32 %v773, %v1055
        %v1196 = vadd.f32 %v778, %v1060
        %v1197 = vadd.f32 %v781, %v1063
        %v1198 = vadd.f32 %v786, %v1068
        %v1199 = vadd.f32 %v789, %v1071
        %v1200 = vadd.f32 %v794, %v1076
        %v1201 = vadd.f32 %v797, %v1079
        %v1202 = vadd.f32 %v802, %v1084
        %v1203 = vadd.f32 %v805, %v1087
        %v1204 = vadd.f32 %v810, %v1092
        %v1205 = vadd.f32 %v813, %v1095
        %v1206 = vadd.f32 %v818, %v1100
        %v1207 = vadd.f32 %v821, %v1103
        %v1208 = vadd.f32 %v826, %v1108
        %v1209 = vadd.f32 %v829, %v1111
        %v1210 = vadd.f32 %v834, %v1116
        %v1211 = vadd.f32 %v837, %v1119
        %v1212 = vadd.f32 %v842, %v1124
        %v1213 = vadd.f32 %v845, %v1127
        %v1214 = vadd.f32 %v850, %v1132
        %v1215 = vadd.f32 %v853, %v1135
        %v1216 = vadd.f32 %v858, %v1140
        %v1217 = vadd.f32 %v861, %v1143
        %v1218 = vadd.f32 %v866, %v1148
        %v1219 = vadd.f32 %v869, %v1151
        %v1220 = vadd.f32 %v874, %v1156
        %v1221 = vadd.f32 %v877, %v1159
        %v1222 = vadd.f32 %v882, %v1164
        %v1223 = vadd.f32 %v885, %v1167
        %v1224 = vadd.f32 %v890, %v1172
        %v1225 = vadd.f32 %v893, %v1175
        %v1226 = vadd.f32 %v898, %v1180
        %v1227 = vadd.f32 %v901, %v1183
        %v1228 = vadd.f32 %v906, %v1188
        %v1229 = vadd.f32 %v909, %v1191
        %v1230 = vld [vmem:[%s168 + $0x8] sm:$0xe]
        %v1231 = vld [vmem:[%s168 + $0xc] sm:$0xf]
        %v1232 = vld [vmem:[%s168 + $0x10] sm:$0xf]
        %v1233 = vld [vmem:[%s168 + $0x14] sm:$0xf]
        %v1234 = vld [vmem:[%s168 + $0x18] sm:$0xf]
        %v1235 = vld [vmem:[%s168 + $0x1c] sm:$0xf]
        %v1236 = vld [vmem:[%s168 + $0x20] sm:$0xf]
        %v1237 = vld [vmem:[%s168 + $0x24] sm:$0xf]
        %v1238 = vld [vmem:[%s168 + $0x28] sm:$0xf]
        %v1239 = vld [vmem:[%s168 + $0x2c] sm:$0xf]
        %v1240 = vld [vmem:[%s168 + $0x30] sm:$0xf]
        %v1241 = vld [vmem:[%s168 + $0x34] sm:$0xf]
        %v1242 = vld [vmem:[%s168 + $0x38] sm:$0xf]
        %v1243 = vld [vmem:[%s168 + $0x3c] sm:$0xf]
        %v1244 = vld [vmem:[%s168 + $0x40] sm:$0xf]
        %v1245 = vld [vmem:[%s168 + $0x44] sm:$0xf]
        %v1246 = vld [vmem:[%s168 + $0x48] sm:$0xf]
        %v1247 = vld [vmem:[%s168 + $0x4c] sm:$0xf]
        %v1248 = vld [vmem:[%s168 + $0x50] sm:$0xf]
        %v1249 = vld [vmem:[%s168 + $0x54] sm:$0xf]
        %v1250 = vld [vmem:[%s168 + $0x58] sm:$0xf]
        %v1251 = vld [vmem:[%s168 + $0x5c] sm:$0xf]
        %v1252 = vld [vmem:[%s168 + $0x60] sm:$0xf]
        %v1253 = vld [vmem:[%s168 + $0x64] sm:$0xf]
        %v1254 = vld [vmem:[%s168 + $0x68] sm:$0xf]
        %v1255 = vld [vmem:[%s168 + $0x6c] sm:$0xf]
        %v1256 = vld [vmem:[%s168 + $0x70] sm:$0xf]
        %v1257 = vld [vmem:[%s168 + $0x74] sm:$0xf]
        %v1258 = vld [vmem:[%s168 + $0x78] sm:$0xf]
        %v1259 = vld [vmem:[%s168 + $0x7c] sm:$0xf]
        %v1260 = vld [vmem:[%s168 + $0x80] sm:$0xf]
        %v1261 = vld [vmem:[%s168 + $0x84] sm:$0xf]
        %v1262 = vld [vmem:[%s168 + $0x88] sm:$0xf]
        %v1263 = vld [vmem:[%s168 + $0x8c] sm:$0xf]
        %v1264 = vld [vmem:[%s168 + $0x90] sm:$0xf]
        %v1265 = vld [vmem:[%s168 + $0x94] sm:$0xf]
        %v1266 = vld [vmem:[%s168 + $0x98] sm:$0x1]
        %s1267 = scalar_lea.vmem %s1, 24
        %v1268 = vld [vmem:[%s1267] sm:$0xf]
        %v1269 = vld [vmem:[%s1267 + $0x4] sm:$0xf]
        %v1307 = vunpack.c.l.b16 %v1230
        %v1308 = vunpack.c.l.b16 %v1231
        %v1309 = vunpack.c.l.b16 %v1232
        %v1310 = vunpack.c.l.b16 %v1233
        %v1311 = vunpack.c.l.b16 %v1234
        %v1312 = vunpack.c.l.b16 %v1235
        %v1313 = vunpack.c.l.b16 %v1236
        %v1314 = vunpack.c.l.b16 %v1237
        %v1315 = vunpack.c.l.b16 %v1238
        %v1316 = vunpack.c.l.b16 %v1239
        %v1317 = vunpack.c.l.b16 %v1240
        %v1318 = vunpack.c.l.b16 %v1241
        %v1319 = vunpack.c.l.b16 %v1242
        %v1320 = vunpack.c.l.b16 %v1243
        %v1321 = vunpack.c.l.b16 %v1244
        %v1322 = vunpack.c.l.b16 %v1245
        %v1323 = vunpack.c.l.b16 %v1246
        %v1324 = vunpack.c.l.b16 %v1247
        %v1325 = vunpack.c.l.b16 %v1248
        %v1326 = vunpack.c.l.b16 %v1249
        %v1327 = vunpack.c.l.b16 %v1250
        %v1328 = vunpack.c.l.b16 %v1251
        %v1329 = vunpack.c.l.b16 %v1252
        %v1330 = vunpack.c.l.b16 %v1253
        %v1331 = vunpack.c.l.b16 %v1254
        %v1332 = vunpack.c.l.b16 %v1255
        %v1333 = vunpack.c.l.b16 %v1256
        %v1334 = vunpack.c.l.b16 %v1257
        %v1335 = vunpack.c.l.b16 %v1258
        %v1336 = vunpack.c.l.b16 %v1259
        %v1337 = vunpack.c.l.b16 %v1260
        %v1338 = vunpack.c.l.b16 %v1261
        %v1339 = vunpack.c.l.b16 %v1262
        %v1340 = vunpack.c.l.b16 %v1263
        %v1341 = vunpack.c.l.b16 %v1264
        %v1342 = vunpack.c.l.b16 %v1265
        %v1343 = vunpack.c.l.b16 %v1266
        %v1344 = vpack.c.b16 %v1308, %v1307
        %v1345 = vpack.c.b16 %v1310, %v1309
        %v1346 = vpack.c.b16 %v1312, %v1311
        %v1347 = vpack.c.b16 %v1314, %v1313
        %v1348 = vpack.c.b16 %v1316, %v1315
        %v1349 = vpack.c.b16 %v1318, %v1317
        %v1350 = vpack.c.b16 %v1320, %v1319
        %v1351 = vpack.c.b16 %v1322, %v1321
        %v1352 = vpack.c.b16 %v1324, %v1323
        %v1353 = vpack.c.b16 %v1326, %v1325
        %v1354 = vpack.c.b16 %v1328, %v1327
        %v1355 = vpack.c.b16 %v1330, %v1329
        %v1356 = vpack.c.b16 %v1332, %v1331
        %v1357 = vpack.c.b16 %v1334, %v1333
        %v1358 = vpack.c.b16 %v1336, %v1335
        %v1359 = vpack.c.b16 %v1338, %v1337
        %v1360 = vpack.c.b16 %v1340, %v1339
        %v1361 = vpack.c.b16 %v1342, %v1341
        %v1362 = vpack.c.b16 %v1343, %v1343
        %v1363 = vrot.slane %v1344, 1
        %v1364 = vrot.slane %v1345, 1
        %v1365 = vsel %vm919, %v1363, %v1364
        %v1366 = vrot.slane %v1346, 1
        %v1367 = vsel %vm919, %v1364, %v1366
        %v1368 = vrot.slane %v1347, 1
        %v1369 = vsel %vm919, %v1366, %v1368
        %v1370 = vrot.slane %v1348, 1
        %v1371 = vsel %vm919, %v1368, %v1370
        %v1372 = vrot.slane %v1349, 1
        %v1373 = vsel %vm919, %v1370, %v1372
        %v1374 = vrot.slane %v1350, 1
        %v1375 = vsel %vm919, %v1372, %v1374
        %v1376 = vrot.slane %v1351, 1
        %v1377 = vsel %vm919, %v1374, %v1376
        %v1378 = vrot.slane %v1352, 1
        %v1379 = vsel %vm919, %v1376, %v1378
        %v1380 = vrot.slane %v1353, 1
        %v1381 = vsel %vm919, %v1378, %v1380
        %v1382 = vrot.slane %v1354, 1
        %v1383 = vsel %vm919, %v1380, %v1382
        %v1384 = vrot.slane %v1355, 1
        %v1385 = vsel %vm919, %v1382, %v1384
        %v1386 = vrot.slane %v1356, 1
        %v1387 = vsel %vm919, %v1384, %v1386
        %v1388 = vrot.slane %v1357, 1
        %v1389 = vsel %vm919, %v1386, %v1388
        %v1390 = vrot.slane %v1358, 1
        %v1391 = vsel %vm919, %v1388, %v1390
        %v1392 = vrot.slane %v1359, 1
        %v1393 = vsel %vm919, %v1390, %v1392
        %v1394 = vrot.slane %v1360, 1
        %v1395 = vsel %vm919, %v1392, %v1394
        %v1396 = vrot.slane %v1361, 1
        %v1397 = vsel %vm919, %v1394, %v1396
        %v1398 = vrot.slane %v1362, 1
        %v1399 = vsel %vm919, %v1396, %v1398
        %v1402 = vunpack.c.l.b16 %v1268
        %v1403 = vunpack.c.l.b16 %v1269
        %v1404 = vpack.c.b16 %v1403, %v1402
        %v1407 = vsel %vm461, %v1365, 0
        %v1410 = vsel %vm461, %v1367, 0
        %v1413 = vsel %vm461, %v1369, 0
        %v1416 = vsel %vm461, %v1371, 0
        %v1419 = vsel %vm461, %v1373, 0
        %v1422 = vsel %vm461, %v1375, 0
        %v1425 = vsel %vm461, %v1377, 0
        %v1428 = vsel %vm461, %v1379, 0
        %v1431 = vsel %vm461, %v1381, 0
        %v1434 = vsel %vm461, %v1383, 0
        %v1437 = vsel %vm461, %v1385, 0
        %v1440 = vsel %vm461, %v1387, 0
        %v1443 = vsel %vm461, %v1389, 0
        %v1446 = vsel %vm461, %v1391, 0
        %v1449 = vsel %vm461, %v1393, 0
        %v1452 = vsel %vm461, %v1395, 0
        %v1455 = vsel %vm461, %v1397, 0
        %v1458 = vsel %vm461, %v1399, 0
        %1460 = vmatprep.subr.bf16.mxu0 0
        %1461 = vmatpush1.bf16.msra.mxu0 0
        %1462 = vmatprep.subr.bf16.mxu0 0
        %1463 = vmatpush1.bf16.msra.mxu0 0
        %1464 = vmatprep.subr.bf16.mxu0 0
        %1465 = vmatpush1.bf16.msra.mxu0 0
        %1466 = vmatprep.subr.bf16.mxu0 0
        %1467 = vmatpush1.bf16.msra.mxu0 0
        %1468 = vmatprep.subr.bf16.mxu0 0
        %1469 = vmatpush1.bf16.msra.mxu0 0
        %1470 = vmatprep.subr.bf16.mxu0 0
        %1471 = vmatpush1.bf16.msra.mxu0 0
        %1472 = vmatprep.subr.bf16.mxu0 0
        %1473 = vmatpush1.bf16.msra.mxu0 0
        %1474 = vmatprep.subr.bf16.mxu0 0
        %1475 = vmatpush1.bf16.msra.mxu0 %v1404
        %1476 = vmatprep.subr.bf16.mxu0 0
        %1477 = vmatpush2.bf16.msra.mxu0 0
        %1478 = vmatprep.subr.bf16.mxu0 0
        %1479 = vmatpush2.bf16.msra.mxu0 0
        %1480 = vmatprep.subr.bf16.mxu0 0
        %1481 = vmatpush2.bf16.msra.mxu0 0
        %1482 = vmatprep.subr.bf16.mxu0 0
        %1483 = vmatpush2.bf16.msra.mxu0 0
        %1484 = vmatprep.subr.bf16.mxu0 0
        %1485 = vmatpush2.bf16.msra.mxu0 0
        %1486 = vmatprep.subr.bf16.mxu0 0
        %1487 = vmatpush2.bf16.msra.mxu0 0
        %1488 = vmatprep.subr.bf16.mxu0 0
        %1489 = vmatpush2.bf16.msra.mxu0 0
        %1490 = vmatprep.subr.bf16.mxu0 0
        %1491 = vmatpush2.bf16.msra.mxu0 0
        %1492 = vmatprep.mubr.bf16.mxu0 0
        %1493 = vmatmul.mubr.bf16.gmra.mxu0 %v1407
        %v1494 = vpop.f32.mrf.mxu0
        %v1495 = vadd.f32 0.0, %v1494
        %v1496 = vpop.f32.mrf.mxu0
        %v1497 = vpop.f32.mrf.mxu0
        %v1498 = vadd.f32 0.0, %v1497
        %v1499 = vpop.f32.mrf.mxu0
        %1500 = vmatprep.mubr.bf16.mxu0 0
        %1501 = vmatmul.mubr.bf16.gmra.mxu0 %v1410
        %v1502 = vpop.f32.mrf.mxu0
        %v1503 = vadd.f32 0.0, %v1502
        %v1504 = vpop.f32.mrf.mxu0
        %v1505 = vpop.f32.mrf.mxu0
        %v1506 = vadd.f32 0.0, %v1505
        %v1507 = vpop.f32.mrf.mxu0
        %1508 = vmatprep.mubr.bf16.mxu0 0
        %1509 = vmatmul.mubr.bf16.gmra.mxu0 %v1413
        %v1510 = vpop.f32.mrf.mxu0
        %v1511 = vadd.f32 0.0, %v1510
        %v1512 = vpop.f32.mrf.mxu0
        %v1513 = vpop.f32.mrf.mxu0
        %v1514 = vadd.f32 0.0, %v1513
        %v1515 = vpop.f32.mrf.mxu0
        %1516 = vmatprep.mubr.bf16.mxu0 0
        %1517 = vmatmul.mubr.bf16.gmra.mxu0 %v1416
        %v1518 = vpop.f32.mrf.mxu0
        %v1519 = vadd.f32 0.0, %v1518
        %v1520 = vpop.f32.mrf.mxu0
        %v1521 = vpop.f32.mrf.mxu0
        %v1522 = vadd.f32 0.0, %v1521
        %v1523 = vpop.f32.mrf.mxu0
        %1524 = vmatprep.mubr.bf16.mxu0 0
        %1525 = vmatmul.mubr.bf16.gmra.mxu0 %v1419
        %v1526 = vpop.f32.mrf.mxu0
        %v1527 = vadd.f32 0.0, %v1526
        %v1528 = vpop.f32.mrf.mxu0
        %v1529 = vpop.f32.mrf.mxu0
        %v1530 = vadd.f32 0.0, %v1529
        %v1531 = vpop.f32.mrf.mxu0
        %1532 = vmatprep.mubr.bf16.mxu0 0
        %1533 = vmatmul.mubr.bf16.gmra.mxu0 %v1422
        %v1534 = vpop.f32.mrf.mxu0
        %v1535 = vadd.f32 0.0, %v1534
        %v1536 = vpop.f32.mrf.mxu0
        %v1537 = vpop.f32.mrf.mxu0
        %v1538 = vadd.f32 0.0, %v1537
        %v1539 = vpop.f32.mrf.mxu0
        %1540 = vmatprep.mubr.bf16.mxu0 0
        %1541 = vmatmul.mubr.bf16.gmra.mxu0 %v1425
        %v1542 = vpop.f32.mrf.mxu0
        %v1543 = vadd.f32 0.0, %v1542
        %v1544 = vpop.f32.mrf.mxu0
        %v1545 = vpop.f32.mrf.mxu0
        %v1546 = vadd.f32 0.0, %v1545
        %v1547 = vpop.f32.mrf.mxu0
        %1548 = vmatprep.mubr.bf16.mxu0 0
        %1549 = vmatmul.mubr.bf16.gmra.mxu0 %v1428
        %v1550 = vpop.f32.mrf.mxu0
        %v1551 = vadd.f32 0.0, %v1550
        %v1552 = vpop.f32.mrf.mxu0
        %v1553 = vpop.f32.mrf.mxu0
        %v1554 = vadd.f32 0.0, %v1553
        %v1555 = vpop.f32.mrf.mxu0
        %1556 = vmatprep.mubr.bf16.mxu0 0
        %1557 = vmatmul.mubr.bf16.gmra.mxu0 %v1431
        %v1558 = vpop.f32.mrf.mxu0
        %v1559 = vadd.f32 0.0, %v1558
        %v1560 = vpop.f32.mrf.mxu0
        %v1561 = vpop.f32.mrf.mxu0
        %v1562 = vadd.f32 0.0, %v1561
        %v1563 = vpop.f32.mrf.mxu0
        %1564 = vmatprep.mubr.bf16.mxu0 0
        %1565 = vmatmul.mubr.bf16.gmra.mxu0 %v1434
        %v1566 = vpop.f32.mrf.mxu0
        %v1567 = vadd.f32 0.0, %v1566
        %v1568 = vpop.f32.mrf.mxu0
        %v1569 = vpop.f32.mrf.mxu0
        %v1570 = vadd.f32 0.0, %v1569
        %v1571 = vpop.f32.mrf.mxu0
        %1572 = vmatprep.mubr.bf16.mxu0 0
        %1573 = vmatmul.mubr.bf16.gmra.mxu0 %v1437
        %v1574 = vpop.f32.mrf.mxu0
        %v1575 = vadd.f32 0.0, %v1574
        %v1576 = vpop.f32.mrf.mxu0
        %v1577 = vpop.f32.mrf.mxu0
        %v1578 = vadd.f32 0.0, %v1577
        %v1579 = vpop.f32.mrf.mxu0
        %1580 = vmatprep.mubr.bf16.mxu0 0
        %1581 = vmatmul.mubr.bf16.gmra.mxu0 %v1440
        %v1582 = vpop.f32.mrf.mxu0
        %v1583 = vadd.f32 0.0, %v1582
        %v1584 = vpop.f32.mrf.mxu0
        %v1585 = vpop.f32.mrf.mxu0
        %v1586 = vadd.f32 0.0, %v1585
        %v1587 = vpop.f32.mrf.mxu0
        %1588 = vmatprep.mubr.bf16.mxu0 0
        %1589 = vmatmul.mubr.bf16.gmra.mxu0 %v1443
        %v1590 = vpop.f32.mrf.mxu0
        %v1591 = vadd.f32 0.0, %v1590
        %v1592 = vpop.f32.mrf.mxu0
        %v1593 = vpop.f32.mrf.mxu0
        %v1594 = vadd.f32 0.0, %v1593
        %v1595 = vpop.f32.mrf.mxu0
        %1596 = vmatprep.mubr.bf16.mxu0 0
        %1597 = vmatmul.mubr.bf16.gmra.mxu0 %v1446
        %v1598 = vpop.f32.mrf.mxu0
        %v1599 = vadd.f32 0.0, %v1598
        %v1600 = vpop.f32.mrf.mxu0
        %v1601 = vpop.f32.mrf.mxu0
        %v1602 = vadd.f32 0.0, %v1601
        %v1603 = vpop.f32.mrf.mxu0
        %1604 = vmatprep.mubr.bf16.mxu0 0
        %1605 = vmatmul.mubr.bf16.gmra.mxu0 %v1449
        %v1606 = vpop.f32.mrf.mxu0
        %v1607 = vadd.f32 0.0, %v1606
        %v1608 = vpop.f32.mrf.mxu0
        %v1609 = vpop.f32.mrf.mxu0
        %v1610 = vadd.f32 0.0, %v1609
        %v1611 = vpop.f32.mrf.mxu0
        %1612 = vmatprep.mubr.bf16.mxu0 0
        %1613 = vmatmul.mubr.bf16.gmra.mxu0 %v1452
        %v1614 = vpop.f32.mrf.mxu0
        %v1615 = vadd.f32 0.0, %v1614
        %v1616 = vpop.f32.mrf.mxu0
        %v1617 = vpop.f32.mrf.mxu0
        %v1618 = vadd.f32 0.0, %v1617
        %v1619 = vpop.f32.mrf.mxu0
        %1620 = vmatprep.mubr.bf16.mxu0 0
        %1621 = vmatmul.mubr.bf16.gmra.mxu0 %v1455
        %v1622 = vpop.f32.mrf.mxu0
        %v1623 = vadd.f32 0.0, %v1622
        %v1624 = vpop.f32.mrf.mxu0
        %v1625 = vpop.f32.mrf.mxu0
        %v1626 = vadd.f32 0.0, %v1625
        %v1627 = vpop.f32.mrf.mxu0
        %1628 = vmatprep.mubr.bf16.mxu0 0
        %1629 = vmatmul.mubr.bf16.gmra.mxu0 %v1458
        %v1630 = vpop.f32.mrf.mxu0
        %v1631 = vadd.f32 0.0, %v1630
        %v1632 = vpop.f32.mrf.mxu0
        %v1633 = vpop.f32.mrf.mxu0
        %v1634 = vadd.f32 0.0, %v1633
        %v1635 = vpop.f32.mrf.mxu0
        %1636 = vdwg.mxu0
        %v1637 = vadd.f32 %v1194, %v1495
        %v1638 = vadd.f32 %v1195, %v1498
        %v1639 = vadd.f32 %v1196, %v1503
        %v1640 = vadd.f32 %v1197, %v1506
        %v1641 = vadd.f32 %v1198, %v1511
        %v1642 = vadd.f32 %v1199, %v1514
        %v1643 = vadd.f32 %v1200, %v1519
        %v1644 = vadd.f32 %v1201, %v1522
        %v1645 = vadd.f32 %v1202, %v1527
        %v1646 = vadd.f32 %v1203, %v1530
        %v1647 = vadd.f32 %v1204, %v1535
        %v1648 = vadd.f32 %v1205, %v1538
        %v1649 = vadd.f32 %v1206, %v1543
        %v1650 = vadd.f32 %v1207, %v1546
        %v1651 = vadd.f32 %v1208, %v1551
        %v1652 = vadd.f32 %v1209, %v1554
        %v1653 = vadd.f32 %v1210, %v1559
        %v1654 = vadd.f32 %v1211, %v1562
        %v1655 = vadd.f32 %v1212, %v1567
        %v1656 = vadd.f32 %v1213, %v1570
        %v1657 = vadd.f32 %v1214, %v1575
        %v1658 = vadd.f32 %v1215, %v1578
        %v1659 = vadd.f32 %v1216, %v1583
        %v1660 = vadd.f32 %v1217, %v1586
        %v1661 = vadd.f32 %v1218, %v1591
        %v1662 = vadd.f32 %v1219, %v1594
        %v1663 = vadd.f32 %v1220, %v1599
        %v1664 = vadd.f32 %v1221, %v1602
        %v1665 = vadd.f32 %v1222, %v1607
        %v1666 = vadd.f32 %v1223, %v1610
        %v1667 = vadd.f32 %v1224, %v1615
        %v1668 = vadd.f32 %v1225, %v1618
        %v1669 = vadd.f32 %v1226, %v1623
        %v1670 = vadd.f32 %v1227, %v1626
        %v1671 = vadd.f32 %v1228, %v1631
        %v1672 = vadd.f32 %v1229, %v1634
        %v1673 = vld [vmem:[%s168 + $0x98] sm:$0x3]
        %s1674 = scalar_lea.vmem %s1, 32
        %v1675 = vld [vmem:[%s1674] sm:$0xf]
        %v1676 = vld [vmem:[%s1674 + $0x4] sm:$0xf]
        %v1678 = vunpack.c.l.b16 %v1673
        %v1679 = vpack.c.b16 %v1678, %v1678
        %vm1680 = vsmask.f32 6400
        %v1682 = vshrl.u32 %v1344, 16
        %v1684 = vrot.slane %v1682, 1
        %v1685 = vshll.u32 %v1344, 16
        %v1687 = vrot.slane %v1685, 2
        %v1688 = vor.u32 %v1684, %v1687
        %v1690 = vshrl.u32 %v1345, 16
        %v1692 = vrot.slane %v1690, 1
        %v1693 = vshll.u32 %v1345, 16
        %v1695 = vrot.slane %v1693, 2
        %v1696 = vor.u32 %v1692, %v1695
        %v1697 = vsel %vm1680, %v1688, %v1696
        %v1699 = vshrl.u32 %v1346, 16
        %v1701 = vrot.slane %v1699, 1
        %v1702 = vshll.u32 %v1346, 16
        %v1704 = vrot.slane %v1702, 2
        %v1705 = vor.u32 %v1701, %v1704
        %v1706 = vsel %vm1680, %v1696, %v1705
        %v1708 = vshrl.u32 %v1347, 16
        %v1710 = vrot.slane %v1708, 1
        %v1711 = vshll.u32 %v1347, 16
        %v1713 = vrot.slane %v1711, 2
        %v1714 = vor.u32 %v1710, %v1713
        %v1715 = vsel %vm1680, %v1705, %v1714
        %v1717 = vshrl.u32 %v1348, 16
        %v1719 = vrot.slane %v1717, 1
        %v1720 = vshll.u32 %v1348, 16
        %v1722 = vrot.slane %v1720, 2
        %v1723 = vor.u32 %v1719, %v1722
        %v1724 = vsel %vm1680, %v1714, %v1723
        %v1726 = vshrl.u32 %v1349, 16
        %v1728 = vrot.slane %v1726, 1
        %v1729 = vshll.u32 %v1349, 16
        %v1731 = vrot.slane %v1729, 2
        %v1732 = vor.u32 %v1728, %v1731
        %v1733 = vsel %vm1680, %v1723, %v1732
        %v1735 = vshrl.u32 %v1350, 16
        %v1737 = vrot.slane %v1735, 1
        %v1738 = vshll.u32 %v1350, 16
        %v1740 = vrot.slane %v1738, 2
        %v1741 = vor.u32 %v1737, %v1740
        %v1742 = vsel %vm1680, %v1732, %v1741
        %v1744 = vshrl.u32 %v1351, 16
        %v1746 = vrot.slane %v1744, 1
        %v1747 = vshll.u32 %v1351, 16
        %v1749 = vrot.slane %v1747, 2
        %v1750 = vor.u32 %v1746, %v1749
        %v1751 = vsel %vm1680, %v1741, %v1750
        %v1753 = vshrl.u32 %v1352, 16
        %v1755 = vrot.slane %v1753, 1
        %v1756 = vshll.u32 %v1352, 16
        %v1758 = vrot.slane %v1756, 2
        %v1759 = vor.u32 %v1755, %v1758
        %v1760 = vsel %vm1680, %v1750, %v1759
        %v1762 = vshrl.u32 %v1353, 16
        %v1764 = vrot.slane %v1762, 1
        %v1765 = vshll.u32 %v1353, 16
        %v1767 = vrot.slane %v1765, 2
        %v1768 = vor.u32 %v1764, %v1767
        %v1769 = vsel %vm1680, %v1759, %v1768
        %v1771 = vshrl.u32 %v1354, 16
        %v1773 = vrot.slane %v1771, 1
        %v1774 = vshll.u32 %v1354, 16
        %v1776 = vrot.slane %v1774, 2
        %v1777 = vor.u32 %v1773, %v1776
        %v1778 = vsel %vm1680, %v1768, %v1777
        %v1780 = vshrl.u32 %v1355, 16
        %v1782 = vrot.slane %v1780, 1
        %v1783 = vshll.u32 %v1355, 16
        %v1785 = vrot.slane %v1783, 2
        %v1786 = vor.u32 %v1782, %v1785
        %v1787 = vsel %vm1680, %v1777, %v1786
        %v1789 = vshrl.u32 %v1356, 16
        %v1791 = vrot.slane %v1789, 1
        %v1792 = vshll.u32 %v1356, 16
        %v1794 = vrot.slane %v1792, 2
        %v1795 = vor.u32 %v1791, %v1794
        %v1796 = vsel %vm1680, %v1786, %v1795
        %v1798 = vshrl.u32 %v1357, 16
        %v1800 = vrot.slane %v1798, 1
        %v1801 = vshll.u32 %v1357, 16
        %v1803 = vrot.slane %v1801, 2
        %v1804 = vor.u32 %v1800, %v1803
        %v1805 = vsel %vm1680, %v1795, %v1804
        %v1807 = vshrl.u32 %v1358, 16
        %v1809 = vrot.slane %v1807, 1
        %v1810 = vshll.u32 %v1358, 16
        %v1812 = vrot.slane %v1810, 2
        %v1813 = vor.u32 %v1809, %v1812
        %v1814 = vsel %vm1680, %v1804, %v1813
        %v1816 = vshrl.u32 %v1359, 16
        %v1818 = vrot.slane %v1816, 1
        %v1819 = vshll.u32 %v1359, 16
        %v1821 = vrot.slane %v1819, 2
        %v1822 = vor.u32 %v1818, %v1821
        %v1823 = vsel %vm1680, %v1813, %v1822
        %v1825 = vshrl.u32 %v1360, 16
        %v1827 = vrot.slane %v1825, 1
        %v1828 = vshll.u32 %v1360, 16
        %v1830 = vrot.slane %v1828, 2
        %v1831 = vor.u32 %v1827, %v1830
        %v1832 = vsel %vm1680, %v1822, %v1831
        %v1834 = vshrl.u32 %v1361, 16
        %v1836 = vrot.slane %v1834, 1
        %v1837 = vshll.u32 %v1361, 16
        %v1839 = vrot.slane %v1837, 2
        %v1840 = vor.u32 %v1836, %v1839
        %v1841 = vsel %vm1680, %v1831, %v1840
        %v1843 = vshrl.u32 %v1679, 16
        %v1845 = vrot.slane %v1843, 1
        %v1846 = vshll.u32 %v1679, 16
        %v1848 = vrot.slane %v1846, 2
        %v1849 = vor.u32 %v1845, %v1848
        %v1850 = vsel %vm1680, %v1840, %v1849
        %v1853 = vunpack.c.l.b16 %v1675
        %v1854 = vunpack.c.l.b16 %v1676
        %v1855 = vpack.c.b16 %v1854, %v1853
        %v1858 = vsel %vm461, %v1697, 0
        %v1861 = vsel %vm461, %v1706, 0
        %v1864 = vsel %vm461, %v1715, 0
        %v1867 = vsel %vm461, %v1724, 0
        %v1870 = vsel %vm461, %v1733, 0
        %v1873 = vsel %vm461, %v1742, 0
        %v1876 = vsel %vm461, %v1751, 0
        %v1879 = vsel %vm461, %v1760, 0
        %v1882 = vsel %vm461, %v1769, 0
        %v1885 = vsel %vm461, %v1778, 0
        %v1888 = vsel %vm461, %v1787, 0
        %v1891 = vsel %vm461, %v1796, 0
        %v1894 = vsel %vm461, %v1805, 0
        %v1897 = vsel %vm461, %v1814, 0
        %v1900 = vsel %vm461, %v1823, 0
        %v1903 = vsel %vm461, %v1832, 0
        %v1906 = vsel %vm461, %v1841, 0
        %v1909 = vsel %vm461, %v1850, 0
        %1911 = vmatprep.subr.bf16.mxu0 0
        %1912 = vmatpush1.bf16.msra.mxu0 0
        %1913 = vmatprep.subr.bf16.mxu0 0
        %1914 = vmatpush1.bf16.msra.mxu0 0
        %1915 = vmatprep.subr.bf16.mxu0 0
        %1916 = vmatpush1.bf16.msra.mxu0 0
        %1917 = vmatprep.subr.bf16.mxu0 0
        %1918 = vmatpush1.bf16.msra.mxu0 0
        %1919 = vmatprep.subr.bf16.mxu0 0
        %1920 = vmatpush1.bf16.msra.mxu0 0
        %1921 = vmatprep.subr.bf16.mxu0 0
        %1922 = vmatpush1.bf16.msra.mxu0 0
        %1923 = vmatprep.subr.bf16.mxu0 0
        %1924 = vmatpush1.bf16.msra.mxu0 0
        %1925 = vmatprep.subr.bf16.mxu0 0
        %1926 = vmatpush1.bf16.msra.mxu0 %v1855
        %1927 = vmatprep.subr.bf16.mxu0 0
        %1928 = vmatpush2.bf16.msra.mxu0 0
        %1929 = vmatprep.subr.bf16.mxu0 0
        %1930 = vmatpush2.bf16.msra.mxu0 0
        %1931 = vmatprep.subr.bf16.mxu0 0
        %1932 = vmatpush2.bf16.msra.mxu0 0
        %1933 = vmatprep.subr.bf16.mxu0 0
        %1934 = vmatpush2.bf16.msra.mxu0 0
        %1935 = vmatprep.subr.bf16.mxu0 0
        %1936 = vmatpush2.bf16.msra.mxu0 0
        %1937 = vmatprep.subr.bf16.mxu0 0
        %1938 = vmatpush2.bf16.msra.mxu0 0
        %1939 = vmatprep.subr.bf16.mxu0 0
        %1940 = vmatpush2.bf16.msra.mxu0 0
        %1941 = vmatprep.subr.bf16.mxu0 0
        %1942 = vmatpush2.bf16.msra.mxu0 0
        %1943 = vmatprep.mubr.bf16.mxu0 0
        %1944 = vmatmul.mubr.bf16.gmra.mxu0 %v1858
        %v1945 = vpop.f32.mrf.mxu0
        %v1946 = vadd.f32 0.0, %v1945
        %v1947 = vpop.f32.mrf.mxu0
        %v1948 = vpop.f32.mrf.mxu0
        %v1949 = vadd.f32 0.0, %v1948
        %v1950 = vpop.f32.mrf.mxu0
        %1951 = vmatprep.mubr.bf16.mxu0 0
        %1952 = vmatmul.mubr.bf16.gmra.mxu0 %v1861
        %v1953 = vpop.f32.mrf.mxu0
        %v1954 = vadd.f32 0.0, %v1953
        %v1955 = vpop.f32.mrf.mxu0
        %v1956 = vpop.f32.mrf.mxu0
        %v1957 = vadd.f32 0.0, %v1956
        %v1958 = vpop.f32.mrf.mxu0
        %1959 = vmatprep.mubr.bf16.mxu0 0
        %1960 = vmatmul.mubr.bf16.gmra.mxu0 %v1864
        %v1961 = vpop.f32.mrf.mxu0
        %v1962 = vadd.f32 0.0, %v1961
        %v1963 = vpop.f32.mrf.mxu0
        %v1964 = vpop.f32.mrf.mxu0
        %v1965 = vadd.f32 0.0, %v1964
        %v1966 = vpop.f32.mrf.mxu0
        %1967 = vmatprep.mubr.bf16.mxu0 0
        %1968 = vmatmul.mubr.bf16.gmra.mxu0 %v1867
        %v1969 = vpop.f32.mrf.mxu0
        %v1970 = vadd.f32 0.0, %v1969
        %v1971 = vpop.f32.mrf.mxu0
        %v1972 = vpop.f32.mrf.mxu0
        %v1973 = vadd.f32 0.0, %v1972
        %v1974 = vpop.f32.mrf.mxu0
        %1975 = vmatprep.mubr.bf16.mxu0 0
        %1976 = vmatmul.mubr.bf16.gmra.mxu0 %v1870
        %v1977 = vpop.f32.mrf.mxu0
        %v1978 = vadd.f32 0.0, %v1977
        %v1979 = vpop.f32.mrf.mxu0
        %v1980 = vpop.f32.mrf.mxu0
        %v1981 = vadd.f32 0.0, %v1980
        %v1982 = vpop.f32.mrf.mxu0
        %1983 = vmatprep.mubr.bf16.mxu0 0
        %1984 = vmatmul.mubr.bf16.gmra.mxu0 %v1873
        %v1985 = vpop.f32.mrf.mxu0
        %v1986 = vadd.f32 0.0, %v1985
        %v1987 = vpop.f32.mrf.mxu0
        %v1988 = vpop.f32.mrf.mxu0
        %v1989 = vadd.f32 0.0, %v1988
        %v1990 = vpop.f32.mrf.mxu0
        %1991 = vmatprep.mubr.bf16.mxu0 0
        %1992 = vmatmul.mubr.bf16.gmra.mxu0 %v1876
        %v1993 = vpop.f32.mrf.mxu0
        %v1994 = vadd.f32 0.0, %v1993
        %v1995 = vpop.f32.mrf.mxu0
        %v1996 = vpop.f32.mrf.mxu0
        %v1997 = vadd.f32 0.0, %v1996
        %v1998 = vpop.f32.mrf.mxu0
        %1999 = vmatprep.mubr.bf16.mxu0 0
        %2000 = vmatmul.mubr.bf16.gmra.mxu0 %v1879
        %v2001 = vpop.f32.mrf.mxu0
        %v2002 = vadd.f32 0.0, %v2001
        %v2003 = vpop.f32.mrf.mxu0
        %v2004 = vpop.f32.mrf.mxu0
        %v2005 = vadd.f32 0.0, %v2004
        %v2006 = vpop.f32.mrf.mxu0
        %2007 = vmatprep.mubr.bf16.mxu0 0
        %2008 = vmatmul.mubr.bf16.gmra.mxu0 %v1882
        %v2009 = vpop.f32.mrf.mxu0
        %v2010 = vadd.f32 0.0, %v2009
        %v2011 = vpop.f32.mrf.mxu0
        %v2012 = vpop.f32.mrf.mxu0
        %v2013 = vadd.f32 0.0, %v2012
        %v2014 = vpop.f32.mrf.mxu0
        %2015 = vmatprep.mubr.bf16.mxu0 0
        %2016 = vmatmul.mubr.bf16.gmra.mxu0 %v1885
        %v2017 = vpop.f32.mrf.mxu0
        %v2018 = vadd.f32 0.0, %v2017
        %v2019 = vpop.f32.mrf.mxu0
        %v2020 = vpop.f32.mrf.mxu0
        %v2021 = vadd.f32 0.0, %v2020
        %v2022 = vpop.f32.mrf.mxu0
        %2023 = vmatprep.mubr.bf16.mxu0 0
        %2024 = vmatmul.mubr.bf16.gmra.mxu0 %v1888
        %v2025 = vpop.f32.mrf.mxu0
        %v2026 = vadd.f32 0.0, %v2025
        %v2027 = vpop.f32.mrf.mxu0
        %v2028 = vpop.f32.mrf.mxu0
        %v2029 = vadd.f32 0.0, %v2028
        %v2030 = vpop.f32.mrf.mxu0
        %2031 = vmatprep.mubr.bf16.mxu0 0
        %2032 = vmatmul.mubr.bf16.gmra.mxu0 %v1891
        %v2033 = vpop.f32.mrf.mxu0
        %v2034 = vadd.f32 0.0, %v2033
        %v2035 = vpop.f32.mrf.mxu0
        %v2036 = vpop.f32.mrf.mxu0
        %v2037 = vadd.f32 0.0, %v2036
        %v2038 = vpop.f32.mrf.mxu0
        %2039 = vmatprep.mubr.bf16.mxu0 0
        %2040 = vmatmul.mubr.bf16.gmra.mxu0 %v1894
        %v2041 = vpop.f32.mrf.mxu0
        %v2042 = vadd.f32 0.0, %v2041
        %v2043 = vpop.f32.mrf.mxu0
        %v2044 = vpop.f32.mrf.mxu0
        %v2045 = vadd.f32 0.0, %v2044
        %v2046 = vpop.f32.mrf.mxu0
        %2047 = vmatprep.mubr.bf16.mxu0 0
        %2048 = vmatmul.mubr.bf16.gmra.mxu0 %v1897
        %v2049 = vpop.f32.mrf.mxu0
        %v2050 = vadd.f32 0.0, %v2049
        %v2051 = vpop.f32.mrf.mxu0
        %v2052 = vpop.f32.mrf.mxu0
        %v2053 = vadd.f32 0.0, %v2052
        %v2054 = vpop.f32.mrf.mxu0
        %2055 = vmatprep.mubr.bf16.mxu0 0
        %2056 = vmatmul.mubr.bf16.gmra.mxu0 %v1900
        %v2057 = vpop.f32.mrf.mxu0
        %v2058 = vadd.f32 0.0, %v2057
        %v2059 = vpop.f32.mrf.mxu0
        %v2060 = vpop.f32.mrf.mxu0
        %v2061 = vadd.f32 0.0, %v2060
        %v2062 = vpop.f32.mrf.mxu0
        %2063 = vmatprep.mubr.bf16.mxu0 0
        %2064 = vmatmul.mubr.bf16.gmra.mxu0 %v1903
        %v2065 = vpop.f32.mrf.mxu0
        %v2066 = vadd.f32 0.0, %v2065
        %v2067 = vpop.f32.mrf.mxu0
        %v2068 = vpop.f32.mrf.mxu0
        %v2069 = vadd.f32 0.0, %v2068
        %v2070 = vpop.f32.mrf.mxu0
        %2071 = vmatprep.mubr.bf16.mxu0 0
        %2072 = vmatmul.mubr.bf16.gmra.mxu0 %v1906
        %v2073 = vpop.f32.mrf.mxu0
        %v2074 = vadd.f32 0.0, %v2073
        %v2075 = vpop.f32.mrf.mxu0
        %v2076 = vpop.f32.mrf.mxu0
        %v2077 = vadd.f32 0.0, %v2076
        %v2078 = vpop.f32.mrf.mxu0
        %2079 = vmatprep.mubr.bf16.mxu0 0
        %2080 = vmatmul.mubr.bf16.gmra.mxu0 %v1909
        %v2081 = vpop.f32.mrf.mxu0
        %v2082 = vadd.f32 0.0, %v2081
        %v2083 = vpop.f32.mrf.mxu0
        %v2084 = vpop.f32.mrf.mxu0
        %v2085 = vadd.f32 0.0, %v2084
        %v2086 = vpop.f32.mrf.mxu0
        %2087 = vdwg.mxu0
        %v2088 = vadd.f32 %v1637, %v1946
        %v2089 = vadd.f32 %v1638, %v1949
        %v2090 = vadd.f32 %v1639, %v1954
        %v2091 = vadd.f32 %v1640, %v1957
        %v2092 = vadd.f32 %v1641, %v1962
        %v2093 = vadd.f32 %v1642, %v1965
        %v2094 = vadd.f32 %v1643, %v1970
        %v2095 = vadd.f32 %v1644, %v1973
        %v2096 = vadd.f32 %v1645, %v1978
        %v2097 = vadd.f32 %v1646, %v1981
        %v2098 = vadd.f32 %v1647, %v1986
        %v2099 = vadd.f32 %v1648, %v1989
        %v2100 = vadd.f32 %v1649, %v1994
        %v2101 = vadd.f32 %v1650, %v1997
        %v2102 = vadd.f32 %v1651, %v2002
        %v2103 = vadd.f32 %v1652, %v2005
        %v2104 = vadd.f32 %v1653, %v2010
        %v2105 = vadd.f32 %v1654, %v2013
        %v2106 = vadd.f32 %v1655, %v2018
        %v2107 = vadd.f32 %v1656, %v2021
        %v2108 = vadd.f32 %v1657, %v2026
        %v2109 = vadd.f32 %v1658, %v2029
        %v2110 = vadd.f32 %v1659, %v2034
        %v2111 = vadd.f32 %v1660, %v2037
        %v2112 = vadd.f32 %v1661, %v2042
        %v2113 = vadd.f32 %v1662, %v2045
        %v2114 = vadd.f32 %v1663, %v2050
        %v2115 = vadd.f32 %v1664, %v2053
        %v2116 = vadd.f32 %v1665, %v2058
        %v2117 = vadd.f32 %v1666, %v2061
        %v2118 = vadd.f32 %v1667, %v2066
        %v2119 = vadd.f32 %v1668, %v2069
        %v2120 = vadd.f32 %v1669, %v2074
        %v2121 = vadd.f32 %v1670, %v2077
        %v2122 = vadd.f32 %v1671, %v2082
        %v2123 = vadd.f32 %v1672, %v2085
        %v2124 = vld [vmem:[%s168 + $0x8] sm:$0xc]
        %s2125 = scalar_lea.vmem %s1, 40
        %v2126 = vld [vmem:[%s2125] sm:$0xf]
        %v2127 = vld [vmem:[%s2125 + $0x4] sm:$0xf]
        %v2129 = vunpack.c.l.b16 %v2124
        %v2130 = vpack.c.b16 %v1308, %v2129
        %vm2131 = vcmask 1045504
        %v2132 = vrot.slane %v2130, 2
        %v2133 = vrot.slane %v1345, 2
        %v2134 = vsel %vm2131, %v2132, %v2133
        %v2135 = vrot.slane %v1346, 2
        %v2136 = vsel %vm2131, %v2133, %v2135
        %v2137 = vrot.slane %v1347, 2
        %v2138 = vsel %vm2131, %v2135, %v2137
        %v2139 = vrot.slane %v1348, 2
        %v2140 = vsel %vm2131, %v2137, %v2139
        %v2141 = vrot.slane %v1349, 2
        %v2142 = vsel %vm2131, %v2139, %v2141
        %v2143 = vrot.slane %v1350, 2
        %v2144 = vsel %vm2131, %v2141, %v2143
        %v2145 = vrot.slane %v1351, 2
        %v2146 = vsel %vm2131, %v2143, %v2145
        %v2147 = vrot.slane %v1352, 2
        %v2148 = vsel %vm2131, %v2145, %v2147
        %v2149 = vrot.slane %v1353, 2
        %v2150 = vsel %vm2131, %v2147, %v2149
        %v2151 = vrot.slane %v1354, 2
        %v2152 = vsel %vm2131, %v2149, %v2151
        %v2153 = vrot.slane %v1355, 2
        %v2154 = vsel %vm2131, %v2151, %v2153
        %v2155 = vrot.slane %v1356, 2
        %v2156 = vsel %vm2131, %v2153, %v2155
        %v2157 = vrot.slane %v1357, 2
        %v2158 = vsel %vm2131, %v2155, %v2157
        %v2159 = vrot.slane %v1358, 2
        %v2160 = vsel %vm2131, %v2157, %v2159
        %v2161 = vrot.slane %v1359, 2
        %v2162 = vsel %vm2131, %v2159, %v2161
        %v2163 = vrot.slane %v1360, 2
        %v2164 = vsel %vm2131, %v2161, %v2163
        %v2165 = vrot.slane %v1361, 2
        %v2166 = vsel %vm2131, %v2163, %v2165
        %v2167 = vrot.slane %v1679, 2
        %v2168 = vsel %vm2131, %v2165, %v2167
        %v2171 = vunpack.c.l.b16 %v2126
        %v2172 = vunpack.c.l.b16 %v2127
        %v2173 = vpack.c.b16 %v2172, %v2171
        %v2176 = vsel %vm461, %v2134, 0
        %v2179 = vsel %vm461, %v2136, 0
        %v2182 = vsel %vm461, %v2138, 0
        %v2185 = vsel %vm461, %v2140, 0
        %v2188 = vsel %vm461, %v2142, 0
        %v2191 = vsel %vm461, %v2144, 0
        %v2194 = vsel %vm461, %v2146, 0
        %v2197 = vsel %vm461, %v2148, 0
        %v2200 = vsel %vm461, %v2150, 0
        %v2203 = vsel %vm461, %v2152, 0
        %v2206 = vsel %vm461, %v2154, 0
        %v2209 = vsel %vm461, %v2156, 0
        %v2212 = vsel %vm461, %v2158, 0
        %v2215 = vsel %vm461, %v2160, 0
        %v2218 = vsel %vm461, %v2162, 0
        %v2221 = vsel %vm461, %v2164, 0
        %v2224 = vsel %vm461, %v2166, 0
        %v2227 = vsel %vm461, %v2168, 0
        %2229 = vmatprep.subr.bf16.mxu0 0
        %2230 = vmatpush1.bf16.msra.mxu0 0
        %2231 = vmatprep.subr.bf16.mxu0 0
        %2232 = vmatpush1.bf16.msra.mxu0 0
        %2233 = vmatprep.subr.bf16.mxu0 0
        %2234 = vmatpush1.bf16.msra.mxu0 0
        %2235 = vmatprep.subr.bf16.mxu0 0
        %2236 = vmatpush1.bf16.msra.mxu0 0
        %2237 = vmatprep.subr.bf16.mxu0 0
        %2238 = vmatpush1.bf16.msra.mxu0 0
        %2239 = vmatprep.subr.bf16.mxu0 0
        %2240 = vmatpush1.bf16.msra.mxu0 0
        %2241 = vmatprep.subr.bf16.mxu0 0
        %2242 = vmatpush1.bf16.msra.mxu0 0
        %2243 = vmatprep.subr.bf16.mxu0 0
        %2244 = vmatpush1.bf16.msra.mxu0 %v2173
        %2245 = vmatprep.subr.bf16.mxu0 0
        %2246 = vmatpush2.bf16.msra.mxu0 0
        %2247 = vmatprep.subr.bf16.mxu0 0
        %2248 = vmatpush2.bf16.msra.mxu0 0
        %2249 = vmatprep.subr.bf16.mxu0 0
        %2250 = vmatpush2.bf16.msra.mxu0 0
        %2251 = vmatprep.subr.bf16.mxu0 0
        %2252 = vmatpush2.bf16.msra.mxu0 0
        %2253 = vmatprep.subr.bf16.mxu0 0
        %2254 = vmatpush2.bf16.msra.mxu0 0
        %2255 = vmatprep.subr.bf16.mxu0 0
        %2256 = vmatpush2.bf16.msra.mxu0 0
        %2257 = vmatprep.subr.bf16.mxu0 0
        %2258 = vmatpush2.bf16.msra.mxu0 0
        %2259 = vmatprep.subr.bf16.mxu0 0
        %2260 = vmatpush2.bf16.msra.mxu0 0
        %2261 = vmatprep.mubr.bf16.mxu0 0
        %2262 = vmatmul.mubr.bf16.gmra.mxu0 %v2176
        %v2263 = vpop.f32.mrf.mxu0
        %v2264 = vadd.f32 0.0, %v2263
        %v2265 = vpop.f32.mrf.mxu0
        %v2266 = vpop.f32.mrf.mxu0
        %v2267 = vadd.f32 0.0, %v2266
        %v2268 = vpop.f32.mrf.mxu0
        %2269 = vmatprep.mubr.bf16.mxu0 0
        %2270 = vmatmul.mubr.bf16.gmra.mxu0 %v2179
        %v2271 = vpop.f32.mrf.mxu0
        %v2272 = vadd.f32 0.0, %v2271
        %v2273 = vpop.f32.mrf.mxu0
        %v2274 = vpop.f32.mrf.mxu0
        %v2275 = vadd.f32 0.0, %v2274
        %v2276 = vpop.f32.mrf.mxu0
        %2277 = vmatprep.mubr.bf16.mxu0 0
        %2278 = vmatmul.mubr.bf16.gmra.mxu0 %v2182
        %v2279 = vpop.f32.mrf.mxu0
        %v2280 = vadd.f32 0.0, %v2279
        %v2281 = vpop.f32.mrf.mxu0
        %v2282 = vpop.f32.mrf.mxu0
        %v2283 = vadd.f32 0.0, %v2282
        %v2284 = vpop.f32.mrf.mxu0
        %2285 = vmatprep.mubr.bf16.mxu0 0
        %2286 = vmatmul.mubr.bf16.gmra.mxu0 %v2185
        %v2287 = vpop.f32.mrf.mxu0
        %v2288 = vadd.f32 0.0, %v2287
        %v2289 = vpop.f32.mrf.mxu0
        %v2290 = vpop.f32.mrf.mxu0
        %v2291 = vadd.f32 0.0, %v2290
        %v2292 = vpop.f32.mrf.mxu0
        %2293 = vmatprep.mubr.bf16.mxu0 0
        %2294 = vmatmul.mubr.bf16.gmra.mxu0 %v2188
        %v2295 = vpop.f32.mrf.mxu0
        %v2296 = vadd.f32 0.0, %v2295
        %v2297 = vpop.f32.mrf.mxu0
        %v2298 = vpop.f32.mrf.mxu0
        %v2299 = vadd.f32 0.0, %v2298
        %v2300 = vpop.f32.mrf.mxu0
        %2301 = vmatprep.mubr.bf16.mxu0 0
        %2302 = vmatmul.mubr.bf16.gmra.mxu0 %v2191
        %v2303 = vpop.f32.mrf.mxu0
        %v2304 = vadd.f32 0.0, %v2303
        %v2305 = vpop.f32.mrf.mxu0
        %v2306 = vpop.f32.mrf.mxu0
        %v2307 = vadd.f32 0.0, %v2306
        %v2308 = vpop.f32.mrf.mxu0
        %2309 = vmatprep.mubr.bf16.mxu0 0
        %2310 = vmatmul.mubr.bf16.gmra.mxu0 %v2194
        %v2311 = vpop.f32.mrf.mxu0
        %v2312 = vadd.f32 0.0, %v2311
        %v2313 = vpop.f32.mrf.mxu0
        %v2314 = vpop.f32.mrf.mxu0
        %v2315 = vadd.f32 0.0, %v2314
        %v2316 = vpop.f32.mrf.mxu0
        %2317 = vmatprep.mubr.bf16.mxu0 0
        %2318 = vmatmul.mubr.bf16.gmra.mxu0 %v2197
        %v2319 = vpop.f32.mrf.mxu0
        %v2320 = vadd.f32 0.0, %v2319
        %v2321 = vpop.f32.mrf.mxu0
        %v2322 = vpop.f32.mrf.mxu0
        %v2323 = vadd.f32 0.0, %v2322
        %v2324 = vpop.f32.mrf.mxu0
        %2325 = vmatprep.mubr.bf16.mxu0 0
        %2326 = vmatmul.mubr.bf16.gmra.mxu0 %v2200
        %v2327 = vpop.f32.mrf.mxu0
        %v2328 = vadd.f32 0.0, %v2327
        %v2329 = vpop.f32.mrf.mxu0
        %v2330 = vpop.f32.mrf.mxu0
        %v2331 = vadd.f32 0.0, %v2330
        %v2332 = vpop.f32.mrf.mxu0
        %2333 = vmatprep.mubr.bf16.mxu0 0
        %2334 = vmatmul.mubr.bf16.gmra.mxu0 %v2203
        %v2335 = vpop.f32.mrf.mxu0
        %v2336 = vadd.f32 0.0, %v2335
        %v2337 = vpop.f32.mrf.mxu0
        %v2338 = vpop.f32.mrf.mxu0
        %v2339 = vadd.f32 0.0, %v2338
        %v2340 = vpop.f32.mrf.mxu0
        %2341 = vmatprep.mubr.bf16.mxu0 0
        %2342 = vmatmul.mubr.bf16.gmra.mxu0 %v2206
        %v2343 = vpop.f32.mrf.mxu0
        %v2344 = vadd.f32 0.0, %v2343
        %v2345 = vpop.f32.mrf.mxu0
        %v2346 = vpop.f32.mrf.mxu0
        %v2347 = vadd.f32 0.0, %v2346
        %v2348 = vpop.f32.mrf.mxu0
        %2349 = vmatprep.mubr.bf16.mxu0 0
        %2350 = vmatmul.mubr.bf16.gmra.mxu0 %v2209
        %v2351 = vpop.f32.mrf.mxu0
        %v2352 = vadd.f32 0.0, %v2351
        %v2353 = vpop.f32.mrf.mxu0
        %v2354 = vpop.f32.mrf.mxu0
        %v2355 = vadd.f32 0.0, %v2354
        %v2356 = vpop.f32.mrf.mxu0
        %2357 = vmatprep.mubr.bf16.mxu0 0
        %2358 = vmatmul.mubr.bf16.gmra.mxu0 %v2212
        %v2359 = vpop.f32.mrf.mxu0
        %v2360 = vadd.f32 0.0, %v2359
        %v2361 = vpop.f32.mrf.mxu0
        %v2362 = vpop.f32.mrf.mxu0
        %v2363 = vadd.f32 0.0, %v2362
        %v2364 = vpop.f32.mrf.mxu0
        %2365 = vmatprep.mubr.bf16.mxu0 0
        %2366 = vmatmul.mubr.bf16.gmra.mxu0 %v2215
        %v2367 = vpop.f32.mrf.mxu0
        %v2368 = vadd.f32 0.0, %v2367
        %v2369 = vpop.f32.mrf.mxu0
        %v2370 = vpop.f32.mrf.mxu0
        %v2371 = vadd.f32 0.0, %v2370
        %v2372 = vpop.f32.mrf.mxu0
        %2373 = vmatprep.mubr.bf16.mxu0 0
        %2374 = vmatmul.mubr.bf16.gmra.mxu0 %v2218
        %v2375 = vpop.f32.mrf.mxu0
        %v2376 = vadd.f32 0.0, %v2375
        %v2377 = vpop.f32.mrf.mxu0
        %v2378 = vpop.f32.mrf.mxu0
        %v2379 = vadd.f32 0.0, %v2378
        %v2380 = vpop.f32.mrf.mxu0
        %2381 = vmatprep.mubr.bf16.mxu0 0
        %2382 = vmatmul.mubr.bf16.gmra.mxu0 %v2221
        %v2383 = vpop.f32.mrf.mxu0
        %v2384 = vadd.f32 0.0, %v2383
        %v2385 = vpop.f32.mrf.mxu0
        %v2386 = vpop.f32.mrf.mxu0
        %v2387 = vadd.f32 0.0, %v2386
        %v2388 = vpop.f32.mrf.mxu0
        %2389 = vmatprep.mubr.bf16.mxu0 0
        %2390 = vmatmul.mubr.bf16.gmra.mxu0 %v2224
        %v2391 = vpop.f32.mrf.mxu0
        %v2392 = vadd.f32 0.0, %v2391
        %v2393 = vpop.f32.mrf.mxu0
        %v2394 = vpop.f32.mrf.mxu0
        %v2395 = vadd.f32 0.0, %v2394
        %v2396 = vpop.f32.mrf.mxu0
        %2397 = vmatprep.mubr.bf16.mxu0 0
        %2398 = vmatmul.mubr.bf16.gmra.mxu0 %v2227
        %v2399 = vpop.f32.mrf.mxu0
        %v2400 = vadd.f32 0.0, %v2399
        %v2401 = vpop.f32.mrf.mxu0
        %v2402 = vpop.f32.mrf.mxu0
        %v2403 = vadd.f32 0.0, %v2402
        %v2404 = vpop.f32.mrf.mxu0
        %2405 = vdwg.mxu0
        %v2406 = vadd.f32 %v2088, %v2264
        %v2407 = vadd.f32 %v2089, %v2267
        %v2408 = vadd.f32 %v2090, %v2272
        %v2409 = vadd.f32 %v2091, %v2275
        %v2410 = vadd.f32 %v2092, %v2280
        %v2411 = vadd.f32 %v2093, %v2283
        %v2412 = vadd.f32 %v2094, %v2288
        %v2413 = vadd.f32 %v2095, %v2291
        %v2414 = vadd.f32 %v2096, %v2296
        %v2415 = vadd.f32 %v2097, %v2299
        %v2416 = vadd.f32 %v2098, %v2304
        %v2417 = vadd.f32 %v2099, %v2307
        %v2418 = vadd.f32 %v2100, %v2312
        %v2419 = vadd.f32 %v2101, %v2315
        %v2420 = vadd.f32 %v2102, %v2320
        %v2421 = vadd.f32 %v2103, %v2323
        %v2422 = vadd.f32 %v2104, %v2328
        %v2423 = vadd.f32 %v2105, %v2331
        %v2424 = vadd.f32 %v2106, %v2336
        %v2425 = vadd.f32 %v2107, %v2339
        %v2426 = vadd.f32 %v2108, %v2344
        %v2427 = vadd.f32 %v2109, %v2347
        %v2428 = vadd.f32 %v2110, %v2352
        %v2429 = vadd.f32 %v2111, %v2355
        %v2430 = vadd.f32 %v2112, %v2360
        %v2431 = vadd.f32 %v2113, %v2363
        %v2432 = vadd.f32 %v2114, %v2368
        %v2433 = vadd.f32 %v2115, %v2371
        %v2434 = vadd.f32 %v2116, %v2376
        %v2435 = vadd.f32 %v2117, %v2379
        %v2436 = vadd.f32 %v2118, %v2384
        %v2437 = vadd.f32 %v2119, %v2387
        %v2438 = vadd.f32 %v2120, %v2392
        %v2439 = vadd.f32 %v2121, %v2395
        %v2440 = vadd.f32 %v2122, %v2400
        %v2441 = vadd.f32 %v2123, %v2403
        %v2442 = vld [vmem:[%s168 + $0x10] sm:$0xc]
        %v2443 = vld [vmem:[%s168 + $0x14] sm:$0xf]
        %v2444 = vld [vmem:[%s168 + $0x18] sm:$0xf]
        %v2445 = vld [vmem:[%s168 + $0x1c] sm:$0xf]
        %v2446 = vld [vmem:[%s168 + $0x20] sm:$0xf]
        %v2447 = vld [vmem:[%s168 + $0x24] sm:$0xf]
        %v2448 = vld [vmem:[%s168 + $0x28] sm:$0xf]
        %v2449 = vld [vmem:[%s168 + $0x2c] sm:$0xf]
        %v2450 = vld [vmem:[%s168 + $0x30] sm:$0xf]
        %v2451 = vld [vmem:[%s168 + $0x34] sm:$0xf]
        %v2452 = vld [vmem:[%s168 + $0x38] sm:$0xf]
        %v2453 = vld [vmem:[%s168 + $0x3c] sm:$0xf]
        %v2454 = vld [vmem:[%s168 + $0x40] sm:$0xf]
        %v2455 = vld [vmem:[%s168 + $0x44] sm:$0xf]
        %v2456 = vld [vmem:[%s168 + $0x48] sm:$0xf]
        %v2457 = vld [vmem:[%s168 + $0x4c] sm:$0xf]
        %v2458 = vld [vmem:[%s168 + $0x50] sm:$0xf]
        %v2459 = vld [vmem:[%s168 + $0x54] sm:$0xf]
        %v2460 = vld [vmem:[%s168 + $0x58] sm:$0xf]
        %v2461 = vld [vmem:[%s168 + $0x5c] sm:$0xf]
        %v2462 = vld [vmem:[%s168 + $0x60] sm:$0xf]
        %v2463 = vld [vmem:[%s168 + $0x64] sm:$0xf]
        %v2464 = vld [vmem:[%s168 + $0x68] sm:$0xf]
        %v2465 = vld [vmem:[%s168 + $0x6c] sm:$0xf]
        %v2466 = vld [vmem:[%s168 + $0x70] sm:$0xf]
        %v2467 = vld [vmem:[%s168 + $0x74] sm:$0xf]
        %v2468 = vld [vmem:[%s168 + $0x78] sm:$0xf]
        %v2469 = vld [vmem:[%s168 + $0x7c] sm:$0xf]
        %v2470 = vld [vmem:[%s168 + $0x80] sm:$0xf]
        %v2471 = vld [vmem:[%s168 + $0x84] sm:$0xf]
        %v2472 = vld [vmem:[%s168 + $0x88] sm:$0xf]
        %v2473 = vld [vmem:[%s168 + $0x8c] sm:$0xf]
        %v2474 = vld [vmem:[%s168 + $0x90] sm:$0xf]
        %v2475 = vld [vmem:[%s168 + $0x94] sm:$0xf]
        %v2476 = vld [vmem:[%s168 + $0x98] sm:$0xf]
        %v2477 = vld [vmem:[%s168 + $0x9c] sm:$0xf]
        %v2478 = vld [vmem:[%s168 + $0xa0] sm:$0x3]
        %s2479 = scalar_lea.vmem %s1, 48
        %v2480 = vld [vmem:[%s2479] sm:$0xf]
        %v2481 = vld [vmem:[%s2479 + $0x4] sm:$0xf]
        %v2519 = vunpack.c.l.b16 %v2442
        %v2520 = vunpack.c.l.b16 %v2443
        %v2521 = vunpack.c.l.b16 %v2444
        %v2522 = vunpack.c.l.b16 %v2445
        %v2523 = vunpack.c.l.b16 %v2446
        %v2524 = vunpack.c.l.b16 %v2447
        %v2525 = vunpack.c.l.b16 %v2448
        %v2526 = vunpack.c.l.b16 %v2449
        %v2527 = vunpack.c.l.b16 %v2450
        %v2528 = vunpack.c.l.b16 %v2451
        %v2529 = vunpack.c.l.b16 %v2452
        %v2530 = vunpack.c.l.b16 %v2453
        %v2531 = vunpack.c.l.b16 %v2454
        %v2532 = vunpack.c.l.b16 %v2455
        %v2533 = vunpack.c.l.b16 %v2456
        %v2534 = vunpack.c.l.b16 %v2457
        %v2535 = vunpack.c.l.b16 %v2458
        %v2536 = vunpack.c.l.b16 %v2459
        %v2537 = vunpack.c.l.b16 %v2460
        %v2538 = vunpack.c.l.b16 %v2461
        %v2539 = vunpack.c.l.b16 %v2462
        %v2540 = vunpack.c.l.b16 %v2463
        %v2541 = vunpack.c.l.b16 %v2464
        %v2542 = vunpack.c.l.b16 %v2465
        %v2543 = vunpack.c.l.b16 %v2466
        %v2544 = vunpack.c.l.b16 %v2467
        %v2545 = vunpack.c.l.b16 %v2468
        %v2546 = vunpack.c.l.b16 %v2469
        %v2547 = vunpack.c.l.b16 %v2470
        %v2548 = vunpack.c.l.b16 %v2471
        %v2549 = vunpack.c.l.b16 %v2472
        %v2550 = vunpack.c.l.b16 %v2473
        %v2551 = vunpack.c.l.b16 %v2474
        %v2552 = vunpack.c.l.b16 %v2475
        %v2553 = vunpack.c.l.b16 %v2476
        %v2554 = vunpack.c.l.b16 %v2477
        %v2555 = vunpack.c.l.b16 %v2478
        %v2556 = vpack.c.b16 %v2520, %v2519
        %v2557 = vpack.c.b16 %v2522, %v2521
        %v2558 = vpack.c.b16 %v2524, %v2523
        %v2559 = vpack.c.b16 %v2526, %v2525
        %v2560 = vpack.c.b16 %v2528, %v2527
        %v2561 = vpack.c.b16 %v2530, %v2529
        %v2562 = vpack.c.b16 %v2532, %v2531
        %v2563 = vpack.c.b16 %v2534, %v2533
        %v2564 = vpack.c.b16 %v2536, %v2535
        %v2565 = vpack.c.b16 %v2538, %v2537
        %v2566 = vpack.c.b16 %v2540, %v2539
        %v2567 = vpack.c.b16 %v2542, %v2541
        %v2568 = vpack.c.b16 %v2544, %v2543
        %v2569 = vpack.c.b16 %v2546, %v2545
        %v2570 = vpack.c.b16 %v2548, %v2547
        %v2571 = vpack.c.b16 %v2550, %v2549
        %v2572 = vpack.c.b16 %v2552, %v2551
        %v2573 = vpack.c.b16 %v2554, %v2553
        %v2574 = vpack.c.b16 %v2555, %v2555
        %v2575 = vrot.slane %v2556, 2
        %v2576 = vrot.slane %v2557, 2
        %v2577 = vsel %vm2131, %v2575, %v2576
        %v2578 = vrot.slane %v2558, 2
        %v2579 = vsel %vm2131, %v2576, %v2578
        %v2580 = vrot.slane %v2559, 2
        %v2581 = vsel %vm2131, %v2578, %v2580
        %v2582 = vrot.slane %v2560, 2
        %v2583 = vsel %vm2131, %v2580, %v2582
        %v2584 = vrot.slane %v2561, 2
        %v2585 = vsel %vm2131, %v2582, %v2584
        %v2586 = vrot.slane %v2562, 2
        %v2587 = vsel %vm2131, %v2584, %v2586
        %v2588 = vrot.slane %v2563, 2
        %v2589 = vsel %vm2131, %v2586, %v2588
        %v2590 = vrot.slane %v2564, 2
        %v2591 = vsel %vm2131, %v2588, %v2590
        %v2592 = vrot.slane %v2565, 2
        %v2593 = vsel %vm2131, %v2590, %v2592
        %v2594 = vrot.slane %v2566, 2
        %v2595 = vsel %vm2131, %v2592, %v2594
        %v2596 = vrot.slane %v2567, 2
        %v2597 = vsel %vm2131, %v2594, %v2596
        %v2598 = vrot.slane %v2568, 2
        %v2599 = vsel %vm2131, %v2596, %v2598
        %v2600 = vrot.slane %v2569, 2
        %v2601 = vsel %vm2131, %v2598, %v2600
        %v2602 = vrot.slane %v2570, 2
        %v2603 = vsel %vm2131, %v2600, %v2602
        %v2604 = vrot.slane %v2571, 2
        %v2605 = vsel %vm2131, %v2602, %v2604
        %v2606 = vrot.slane %v2572, 2
        %v2607 = vsel %vm2131, %v2604, %v2606
        %v2608 = vrot.slane %v2573, 2
        %v2609 = vsel %vm2131, %v2606, %v2608
        %v2610 = vrot.slane %v2574, 2
        %v2611 = vsel %vm2131, %v2608, %v2610
        %v2614 = vunpack.c.l.b16 %v2480
        %v2615 = vunpack.c.l.b16 %v2481
        %v2616 = vpack.c.b16 %v2615, %v2614
        %v2619 = vsel %vm461, %v2577, 0
        %v2622 = vsel %vm461, %v2579, 0
        %v2625 = vsel %vm461, %v2581, 0
        %v2628 = vsel %vm461, %v2583, 0
        %v2631 = vsel %vm461, %v2585, 0
        %v2634 = vsel %vm461, %v2587, 0
        %v2637 = vsel %vm461, %v2589, 0
        %v2640 = vsel %vm461, %v2591, 0
        %v2643 = vsel %vm461, %v2593, 0
        %v2646 = vsel %vm461, %v2595, 0
        %v2649 = vsel %vm461, %v2597, 0
        %v2652 = vsel %vm461, %v2599, 0
        %v2655 = vsel %vm461, %v2601, 0
        %v2658 = vsel %vm461, %v2603, 0
        %v2661 = vsel %vm461, %v2605, 0
        %v2664 = vsel %vm461, %v2607, 0
        %v2667 = vsel %vm461, %v2609, 0
        %v2670 = vsel %vm461, %v2611, 0
        %2672 = vmatprep.subr.bf16.mxu0 0
        %2673 = vmatpush1.bf16.msra.mxu0 0
        %2674 = vmatprep.subr.bf16.mxu0 0
        %2675 = vmatpush1.bf16.msra.mxu0 0
        %2676 = vmatprep.subr.bf16.mxu0 0
        %2677 = vmatpush1.bf16.msra.mxu0 0
        %2678 = vmatprep.subr.bf16.mxu0 0
        %2679 = vmatpush1.bf16.msra.mxu0 0
        %2680 = vmatprep.subr.bf16.mxu0 0
        %2681 = vmatpush1.bf16.msra.mxu0 0
        %2682 = vmatprep.subr.bf16.mxu0 0
        %2683 = vmatpush1.bf16.msra.mxu0 0
        %2684 = vmatprep.subr.bf16.mxu0 0
        %2685 = vmatpush1.bf16.msra.mxu0 0
        %2686 = vmatprep.subr.bf16.mxu0 0
        %2687 = vmatpush1.bf16.msra.mxu0 %v2616
        %2688 = vmatprep.subr.bf16.mxu0 0
        %2689 = vmatpush2.bf16.msra.mxu0 0
        %2690 = vmatprep.subr.bf16.mxu0 0
        %2691 = vmatpush2.bf16.msra.mxu0 0
        %2692 = vmatprep.subr.bf16.mxu0 0
        %2693 = vmatpush2.bf16.msra.mxu0 0
        %2694 = vmatprep.subr.bf16.mxu0 0
        %2695 = vmatpush2.bf16.msra.mxu0 0
        %2696 = vmatprep.subr.bf16.mxu0 0
        %2697 = vmatpush2.bf16.msra.mxu0 0
        %2698 = vmatprep.subr.bf16.mxu0 0
        %2699 = vmatpush2.bf16.msra.mxu0 0
        %2700 = vmatprep.subr.bf16.mxu0 0
        %2701 = vmatpush2.bf16.msra.mxu0 0
        %2702 = vmatprep.subr.bf16.mxu0 0
        %2703 = vmatpush2.bf16.msra.mxu0 0
        %2704 = vmatprep.mubr.bf16.mxu0 0
        %2705 = vmatmul.mubr.bf16.gmra.mxu0 %v2619
        %v2706 = vpop.f32.mrf.mxu0
        %v2707 = vadd.f32 0.0, %v2706
        %v2708 = vpop.f32.mrf.mxu0
        %v2709 = vpop.f32.mrf.mxu0
        %v2710 = vadd.f32 0.0, %v2709
        %v2711 = vpop.f32.mrf.mxu0
        %2712 = vmatprep.mubr.bf16.mxu0 0
        %2713 = vmatmul.mubr.bf16.gmra.mxu0 %v2622
        %v2714 = vpop.f32.mrf.mxu0
        %v2715 = vadd.f32 0.0, %v2714
        %v2716 = vpop.f32.mrf.mxu0
        %v2717 = vpop.f32.mrf.mxu0
        %v2718 = vadd.f32 0.0, %v2717
        %v2719 = vpop.f32.mrf.mxu0
        %2720 = vmatprep.mubr.bf16.mxu0 0
        %2721 = vmatmul.mubr.bf16.gmra.mxu0 %v2625
        %v2722 = vpop.f32.mrf.mxu0
        %v2723 = vadd.f32 0.0, %v2722
        %v2724 = vpop.f32.mrf.mxu0
        %v2725 = vpop.f32.mrf.mxu0
        %v2726 = vadd.f32 0.0, %v2725
        %v2727 = vpop.f32.mrf.mxu0
        %2728 = vmatprep.mubr.bf16.mxu0 0
        %2729 = vmatmul.mubr.bf16.gmra.mxu0 %v2628
        %v2730 = vpop.f32.mrf.mxu0
        %v2731 = vadd.f32 0.0, %v2730
        %v2732 = vpop.f32.mrf.mxu0
        %v2733 = vpop.f32.mrf.mxu0
        %v2734 = vadd.f32 0.0, %v2733
        %v2735 = vpop.f32.mrf.mxu0
        %2736 = vmatprep.mubr.bf16.mxu0 0
        %2737 = vmatmul.mubr.bf16.gmra.mxu0 %v2631
        %v2738 = vpop.f32.mrf.mxu0
        %v2739 = vadd.f32 0.0, %v2738
        %v2740 = vpop.f32.mrf.mxu0
        %v2741 = vpop.f32.mrf.mxu0
        %v2742 = vadd.f32 0.0, %v2741
        %v2743 = vpop.f32.mrf.mxu0
        %2744 = vmatprep.mubr.bf16.mxu0 0
        %2745 = vmatmul.mubr.bf16.gmra.mxu0 %v2634
        %v2746 = vpop.f32.mrf.mxu0
        %v2747 = vadd.f32 0.0, %v2746
        %v2748 = vpop.f32.mrf.mxu0
        %v2749 = vpop.f32.mrf.mxu0
        %v2750 = vadd.f32 0.0, %v2749
        %v2751 = vpop.f32.mrf.mxu0
        %2752 = vmatprep.mubr.bf16.mxu0 0
        %2753 = vmatmul.mubr.bf16.gmra.mxu0 %v2637
        %v2754 = vpop.f32.mrf.mxu0
        %v2755 = vadd.f32 0.0, %v2754
        %v2756 = vpop.f32.mrf.mxu0
        %v2757 = vpop.f32.mrf.mxu0
        %v2758 = vadd.f32 0.0, %v2757
        %v2759 = vpop.f32.mrf.mxu0
        %2760 = vmatprep.mubr.bf16.mxu0 0
        %2761 = vmatmul.mubr.bf16.gmra.mxu0 %v2640
        %v2762 = vpop.f32.mrf.mxu0
        %v2763 = vadd.f32 0.0, %v2762
        %v2764 = vpop.f32.mrf.mxu0
        %v2765 = vpop.f32.mrf.mxu0
        %v2766 = vadd.f32 0.0, %v2765
        %v2767 = vpop.f32.mrf.mxu0
        %2768 = vmatprep.mubr.bf16.mxu0 0
        %2769 = vmatmul.mubr.bf16.gmra.mxu0 %v2643
        %v2770 = vpop.f32.mrf.mxu0
        %v2771 = vadd.f32 0.0, %v2770
        %v2772 = vpop.f32.mrf.mxu0
        %v2773 = vpop.f32.mrf.mxu0
        %v2774 = vadd.f32 0.0, %v2773
        %v2775 = vpop.f32.mrf.mxu0
        %2776 = vmatprep.mubr.bf16.mxu0 0
        %2777 = vmatmul.mubr.bf16.gmra.mxu0 %v2646
        %v2778 = vpop.f32.mrf.mxu0
        %v2779 = vadd.f32 0.0, %v2778
        %v2780 = vpop.f32.mrf.mxu0
        %v2781 = vpop.f32.mrf.mxu0
        %v2782 = vadd.f32 0.0, %v2781
        %v2783 = vpop.f32.mrf.mxu0
        %2784 = vmatprep.mubr.bf16.mxu0 0
        %2785 = vmatmul.mubr.bf16.gmra.mxu0 %v2649
        %v2786 = vpop.f32.mrf.mxu0
        %v2787 = vadd.f32 0.0, %v2786
        %v2788 = vpop.f32.mrf.mxu0
        %v2789 = vpop.f32.mrf.mxu0
        %v2790 = vadd.f32 0.0, %v2789
        %v2791 = vpop.f32.mrf.mxu0
        %2792 = vmatprep.mubr.bf16.mxu0 0
        %2793 = vmatmul.mubr.bf16.gmra.mxu0 %v2652
        %v2794 = vpop.f32.mrf.mxu0
        %v2795 = vadd.f32 0.0, %v2794
        %v2796 = vpop.f32.mrf.mxu0
        %v2797 = vpop.f32.mrf.mxu0
        %v2798 = vadd.f32 0.0, %v2797
        %v2799 = vpop.f32.mrf.mxu0
        %2800 = vmatprep.mubr.bf16.mxu0 0
        %2801 = vmatmul.mubr.bf16.gmra.mxu0 %v2655
        %v2802 = vpop.f32.mrf.mxu0
        %v2803 = vadd.f32 0.0, %v2802
        %v2804 = vpop.f32.mrf.mxu0
        %v2805 = vpop.f32.mrf.mxu0
        %v2806 = vadd.f32 0.0, %v2805
        %v2807 = vpop.f32.mrf.mxu0
        %2808 = vmatprep.mubr.bf16.mxu0 0
        %2809 = vmatmul.mubr.bf16.gmra.mxu0 %v2658
        %v2810 = vpop.f32.mrf.mxu0
        %v2811 = vadd.f32 0.0, %v2810
        %v2812 = vpop.f32.mrf.mxu0
        %v2813 = vpop.f32.mrf.mxu0
        %v2814 = vadd.f32 0.0, %v2813
        %v2815 = vpop.f32.mrf.mxu0
        %2816 = vmatprep.mubr.bf16.mxu0 0
        %2817 = vmatmul.mubr.bf16.gmra.mxu0 %v2661
        %v2818 = vpop.f32.mrf.mxu0
        %v2819 = vadd.f32 0.0, %v2818
        %v2820 = vpop.f32.mrf.mxu0
        %v2821 = vpop.f32.mrf.mxu0
        %v2822 = vadd.f32 0.0, %v2821
        %v2823 = vpop.f32.mrf.mxu0
        %2824 = vmatprep.mubr.bf16.mxu0 0
        %2825 = vmatmul.mubr.bf16.gmra.mxu0 %v2664
        %v2826 = vpop.f32.mrf.mxu0
        %v2827 = vadd.f32 0.0, %v2826
        %v2828 = vpop.f32.mrf.mxu0
        %v2829 = vpop.f32.mrf.mxu0
        %v2830 = vadd.f32 0.0, %v2829
        %v2831 = vpop.f32.mrf.mxu0
        %2832 = vmatprep.mubr.bf16.mxu0 0
        %2833 = vmatmul.mubr.bf16.gmra.mxu0 %v2667
        %v2834 = vpop.f32.mrf.mxu0
        %v2835 = vadd.f32 0.0, %v2834
        %v2836 = vpop.f32.mrf.mxu0
        %v2837 = vpop.f32.mrf.mxu0
        %v2838 = vadd.f32 0.0, %v2837
        %v2839 = vpop.f32.mrf.mxu0
        %2840 = vmatprep.mubr.bf16.mxu0 0
        %2841 = vmatmul.mubr.bf16.gmra.mxu0 %v2670
        %v2842 = vpop.f32.mrf.mxu0
        %v2843 = vadd.f32 0.0, %v2842
        %v2844 = vpop.f32.mrf.mxu0
        %v2845 = vpop.f32.mrf.mxu0
        %v2846 = vadd.f32 0.0, %v2845
        %v2847 = vpop.f32.mrf.mxu0
        %2848 = vdwg.mxu0
        %v2849 = vadd.f32 %v2406, %v2707
        %v2850 = vadd.f32 %v2407, %v2710
        %v2851 = vadd.f32 %v2408, %v2715
        %v2852 = vadd.f32 %v2409, %v2718
        %v2853 = vadd.f32 %v2410, %v2723
        %v2854 = vadd.f32 %v2411, %v2726
        %v2855 = vadd.f32 %v2412, %v2731
        %v2856 = vadd.f32 %v2413, %v2734
        %v2857 = vadd.f32 %v2414, %v2739
        %v2858 = vadd.f32 %v2415, %v2742
        %v2859 = vadd.f32 %v2416, %v2747
        %v2860 = vadd.f32 %v2417, %v2750
        %v2861 = vadd.f32 %v2418, %v2755
        %v2862 = vadd.f32 %v2419, %v2758
        %v2863 = vadd.f32 %v2420, %v2763
        %v2864 = vadd.f32 %v2421, %v2766
        %v2865 = vadd.f32 %v2422, %v2771
        %v2866 = vadd.f32 %v2423, %v2774
        %v2867 = vadd.f32 %v2424, %v2779
        %v2868 = vadd.f32 %v2425, %v2782
        %v2869 = vadd.f32 %v2426, %v2787
        %v2870 = vadd.f32 %v2427, %v2790
        %v2871 = vadd.f32 %v2428, %v2795
        %v2872 = vadd.f32 %v2429, %v2798
        %v2873 = vadd.f32 %v2430, %v2803
        %v2874 = vadd.f32 %v2431, %v2806
        %v2875 = vadd.f32 %v2432, %v2811
        %v2876 = vadd.f32 %v2433, %v2814
        %v2877 = vadd.f32 %v2434, %v2819
        %v2878 = vadd.f32 %v2435, %v2822
        %v2879 = vadd.f32 %v2436, %v2827
        %v2880 = vadd.f32 %v2437, %v2830
        %v2881 = vadd.f32 %v2438, %v2835
        %v2882 = vadd.f32 %v2439, %v2838
        %v2883 = vadd.f32 %v2440, %v2843
        %v2884 = vadd.f32 %v2441, %v2846
        %v2885 = vld [vmem:[%s168 + $0xa0] sm:$0x7]
        %s2886 = scalar_lea.vmem %s1, 56
        %v2887 = vld [vmem:[%s2886] sm:$0xf]
        %v2888 = vld [vmem:[%s2886 + $0x4] sm:$0xf]
        %v2890 = vunpack.c.l.b16 %v2885
        %v2891 = vpack.c.b16 %v2890, %v2890
        %vm2892 = vsmask.f32 5376
        %v2894 = vshrl.u32 %v2556, 16
        %v2896 = vrot.slane %v2894, 2
        %v2897 = vshll.u32 %v2556, 16
        %v2899 = vrot.slane %v2897, 3
        %v2900 = vor.u32 %v2896, %v2899
        %v2902 = vshrl.u32 %v2557, 16
        %v2904 = vrot.slane %v2902, 2
        %v2905 = vshll.u32 %v2557, 16
        %v2907 = vrot.slane %v2905, 3
        %v2908 = vor.u32 %v2904, %v2907
        %v2909 = vsel %vm2892, %v2900, %v2908
        %v2911 = vshrl.u32 %v2558, 16
        %v2913 = vrot.slane %v2911, 2
        %v2914 = vshll.u32 %v2558, 16
        %v2916 = vrot.slane %v2914, 3
        %v2917 = vor.u32 %v2913, %v2916
        %v2918 = vsel %vm2892, %v2908, %v2917
        %v2920 = vshrl.u32 %v2559, 16
        %v2922 = vrot.slane %v2920, 2
        %v2923 = vshll.u32 %v2559, 16
        %v2925 = vrot.slane %v2923, 3
        %v2926 = vor.u32 %v2922, %v2925
        %v2927 = vsel %vm2892, %v2917, %v2926
        %v2929 = vshrl.u32 %v2560, 16
        %v2931 = vrot.slane %v2929, 2
        %v2932 = vshll.u32 %v2560, 16
        %v2934 = vrot.slane %v2932, 3
        %v2935 = vor.u32 %v2931, %v2934
        %v2936 = vsel %vm2892, %v2926, %v2935
        %v2938 = vshrl.u32 %v2561, 16
        %v2940 = vrot.slane %v2938, 2
        %v2941 = vshll.u32 %v2561, 16
        %v2943 = vrot.slane %v2941, 3
        %v2944 = vor.u32 %v2940, %v2943
        %v2945 = vsel %vm2892, %v2935, %v2944
        %v2947 = vshrl.u32 %v2562, 16
        %v2949 = vrot.slane %v2947, 2
        %v2950 = vshll.u32 %v2562, 16
        %v2952 = vrot.slane %v2950, 3
        %v2953 = vor.u32 %v2949, %v2952
        %v2954 = vsel %vm2892, %v2944, %v2953
        %v2956 = vshrl.u32 %v2563, 16
        %v2958 = vrot.slane %v2956, 2
        %v2959 = vshll.u32 %v2563, 16
        %v2961 = vrot.slane %v2959, 3
        %v2962 = vor.u32 %v2958, %v2961
        %v2963 = vsel %vm2892, %v2953, %v2962
        %v2965 = vshrl.u32 %v2564, 16
        %v2967 = vrot.slane %v2965, 2
        %v2968 = vshll.u32 %v2564, 16
        %v2970 = vrot.slane %v2968, 3
        %v2971 = vor.u32 %v2967, %v2970
        %v2972 = vsel %vm2892, %v2962, %v2971
        %v2974 = vshrl.u32 %v2565, 16
        %v2976 = vrot.slane %v2974, 2
        %v2977 = vshll.u32 %v2565, 16
        %v2979 = vrot.slane %v2977, 3
        %v2980 = vor.u32 %v2976, %v2979
        %v2981 = vsel %vm2892, %v2971, %v2980
        %v2983 = vshrl.u32 %v2566, 16
        %v2985 = vrot.slane %v2983, 2
        %v2986 = vshll.u32 %v2566, 16
        %v2988 = vrot.slane %v2986, 3
        %v2989 = vor.u32 %v2985, %v2988
        %v2990 = vsel %vm2892, %v2980, %v2989
        %v2992 = vshrl.u32 %v2567, 16
        %v2994 = vrot.slane %v2992, 2
        %v2995 = vshll.u32 %v2567, 16
        %v2997 = vrot.slane %v2995, 3
        %v2998 = vor.u32 %v2994, %v2997
        %v2999 = vsel %vm2892, %v2989, %v2998
        %v3001 = vshrl.u32 %v2568, 16
        %v3003 = vrot.slane %v3001, 2
        %v3004 = vshll.u32 %v2568, 16
        %v3006 = vrot.slane %v3004, 3
        %v3007 = vor.u32 %v3003, %v3006
        %v3008 = vsel %vm2892, %v2998, %v3007
        %v3010 = vshrl.u32 %v2569, 16
        %v3012 = vrot.slane %v3010, 2
        %v3013 = vshll.u32 %v2569, 16
        %v3015 = vrot.slane %v3013, 3
        %v3016 = vor.u32 %v3012, %v3015
        %v3017 = vsel %vm2892, %v3007, %v3016
        %v3019 = vshrl.u32 %v2570, 16
        %v3021 = vrot.slane %v3019, 2
        %v3022 = vshll.u32 %v2570, 16
        %v3024 = vrot.slane %v3022, 3
        %v3025 = vor.u32 %v3021, %v3024
        %v3026 = vsel %vm2892, %v3016, %v3025
        %v3028 = vshrl.u32 %v2571, 16
        %v3030 = vrot.slane %v3028, 2
        %v3031 = vshll.u32 %v2571, 16
        %v3033 = vrot.slane %v3031, 3
        %v3034 = vor.u32 %v3030, %v3033
        %v3035 = vsel %vm2892, %v3025, %v3034
        %v3037 = vshrl.u32 %v2572, 16
        %v3039 = vrot.slane %v3037, 2
        %v3040 = vshll.u32 %v2572, 16
        %v3042 = vrot.slane %v3040, 3
        %v3043 = vor.u32 %v3039, %v3042
        %v3044 = vsel %vm2892, %v3034, %v3043
        %v3046 = vshrl.u32 %v2573, 16
        %v3048 = vrot.slane %v3046, 2
        %v3049 = vshll.u32 %v2573, 16
        %v3051 = vrot.slane %v3049, 3
        %v3052 = vor.u32 %v3048, %v3051
        %v3053 = vsel %vm2892, %v3043, %v3052
        %v3055 = vshrl.u32 %v2891, 16
        %v3057 = vrot.slane %v3055, 2
        %v3058 = vshll.u32 %v2891, 16
        %v3060 = vrot.slane %v3058, 3
        %v3061 = vor.u32 %v3057, %v3060
        %v3062 = vsel %vm2892, %v3052, %v3061
        %v3065 = vunpack.c.l.b16 %v2887
        %v3066 = vunpack.c.l.b16 %v2888
        %v3067 = vpack.c.b16 %v3066, %v3065
        %v3070 = vsel %vm461, %v2909, 0
        %v3073 = vsel %vm461, %v2918, 0
        %v3076 = vsel %vm461, %v2927, 0
        %v3079 = vsel %vm461, %v2936, 0
        %v3082 = vsel %vm461, %v2945, 0
        %v3085 = vsel %vm461, %v2954, 0
        %v3088 = vsel %vm461, %v2963, 0
        %v3091 = vsel %vm461, %v2972, 0
        %v3094 = vsel %vm461, %v2981, 0
        %v3097 = vsel %vm461, %v2990, 0
        %v3100 = vsel %vm461, %v2999, 0
        %v3103 = vsel %vm461, %v3008, 0
        %v3106 = vsel %vm461, %v3017, 0
        %v3109 = vsel %vm461, %v3026, 0
        %v3112 = vsel %vm461, %v3035, 0
        %v3115 = vsel %vm461, %v3044, 0
        %v3118 = vsel %vm461, %v3053, 0
        %v3121 = vsel %vm461, %v3062, 0
        %3123 = vmatprep.subr.bf16.mxu0 0
        %3124 = vmatpush1.bf16.msra.mxu0 0
        %3125 = vmatprep.subr.bf16.mxu0 0
        %3126 = vmatpush1.bf16.msra.mxu0 0
        %3127 = vmatprep.subr.bf16.mxu0 0
        %3128 = vmatpush1.bf16.msra.mxu0 0
        %3129 = vmatprep.subr.bf16.mxu0 0
        %3130 = vmatpush1.bf16.msra.mxu0 0
        %3131 = vmatprep.subr.bf16.mxu0 0
        %3132 = vmatpush1.bf16.msra.mxu0 0
        %3133 = vmatprep.subr.bf16.mxu0 0
        %3134 = vmatpush1.bf16.msra.mxu0 0
        %3135 = vmatprep.subr.bf16.mxu0 0
        %3136 = vmatpush1.bf16.msra.mxu0 0
        %3137 = vmatprep.subr.bf16.mxu0 0
        %3138 = vmatpush1.bf16.msra.mxu0 %v3067
        %3139 = vmatprep.subr.bf16.mxu0 0
        %3140 = vmatpush2.bf16.msra.mxu0 0
        %3141 = vmatprep.subr.bf16.mxu0 0
        %3142 = vmatpush2.bf16.msra.mxu0 0
        %3143 = vmatprep.subr.bf16.mxu0 0
        %3144 = vmatpush2.bf16.msra.mxu0 0
        %3145 = vmatprep.subr.bf16.mxu0 0
        %3146 = vmatpush2.bf16.msra.mxu0 0
        %3147 = vmatprep.subr.bf16.mxu0 0
        %3148 = vmatpush2.bf16.msra.mxu0 0
        %3149 = vmatprep.subr.bf16.mxu0 0
        %3150 = vmatpush2.bf16.msra.mxu0 0
        %3151 = vmatprep.subr.bf16.mxu0 0
        %3152 = vmatpush2.bf16.msra.mxu0 0
        %3153 = vmatprep.subr.bf16.mxu0 0
        %3154 = vmatpush2.bf16.msra.mxu0 0
        %3155 = vmatprep.mubr.bf16.mxu0 0
        %3156 = vmatmul.mubr.bf16.gmra.mxu0 %v3070
        %v3157 = vpop.f32.mrf.mxu0
        %v3158 = vadd.f32 0.0, %v3157
        %v3159 = vpop.f32.mrf.mxu0
        %v3160 = vpop.f32.mrf.mxu0
        %v3161 = vadd.f32 0.0, %v3160
        %v3162 = vpop.f32.mrf.mxu0
        %3163 = vmatprep.mubr.bf16.mxu0 0
        %3164 = vmatmul.mubr.bf16.gmra.mxu0 %v3073
        %v3165 = vpop.f32.mrf.mxu0
        %v3166 = vadd.f32 0.0, %v3165
        %v3167 = vpop.f32.mrf.mxu0
        %v3168 = vpop.f32.mrf.mxu0
        %v3169 = vadd.f32 0.0, %v3168
        %v3170 = vpop.f32.mrf.mxu0
        %3171 = vmatprep.mubr.bf16.mxu0 0
        %3172 = vmatmul.mubr.bf16.gmra.mxu0 %v3076
        %v3173 = vpop.f32.mrf.mxu0
        %v3174 = vadd.f32 0.0, %v3173
        %v3175 = vpop.f32.mrf.mxu0
        %v3176 = vpop.f32.mrf.mxu0
        %v3177 = vadd.f32 0.0, %v3176
        %v3178 = vpop.f32.mrf.mxu0
        %3179 = vmatprep.mubr.bf16.mxu0 0
        %3180 = vmatmul.mubr.bf16.gmra.mxu0 %v3079
        %v3181 = vpop.f32.mrf.mxu0
        %v3182 = vadd.f32 0.0, %v3181
        %v3183 = vpop.f32.mrf.mxu0
        %v3184 = vpop.f32.mrf.mxu0
        %v3185 = vadd.f32 0.0, %v3184
        %v3186 = vpop.f32.mrf.mxu0
        %3187 = vmatprep.mubr.bf16.mxu0 0
        %3188 = vmatmul.mubr.bf16.gmra.mxu0 %v3082
        %v3189 = vpop.f32.mrf.mxu0
        %v3190 = vadd.f32 0.0, %v3189
        %v3191 = vpop.f32.mrf.mxu0
        %v3192 = vpop.f32.mrf.mxu0
        %v3193 = vadd.f32 0.0, %v3192
        %v3194 = vpop.f32.mrf.mxu0
        %3195 = vmatprep.mubr.bf16.mxu0 0
        %3196 = vmatmul.mubr.bf16.gmra.mxu0 %v3085
        %v3197 = vpop.f32.mrf.mxu0
        %v3198 = vadd.f32 0.0, %v3197
        %v3199 = vpop.f32.mrf.mxu0
        %v3200 = vpop.f32.mrf.mxu0
        %v3201 = vadd.f32 0.0, %v3200
        %v3202 = vpop.f32.mrf.mxu0
        %3203 = vmatprep.mubr.bf16.mxu0 0
        %3204 = vmatmul.mubr.bf16.gmra.mxu0 %v3088
        %v3205 = vpop.f32.mrf.mxu0
        %v3206 = vadd.f32 0.0, %v3205
        %v3207 = vpop.f32.mrf.mxu0
        %v3208 = vpop.f32.mrf.mxu0
        %v3209 = vadd.f32 0.0, %v3208
        %v3210 = vpop.f32.mrf.mxu0
        %3211 = vmatprep.mubr.bf16.mxu0 0
        %3212 = vmatmul.mubr.bf16.gmra.mxu0 %v3091
        %v3213 = vpop.f32.mrf.mxu0
        %v3214 = vadd.f32 0.0, %v3213
        %v3215 = vpop.f32.mrf.mxu0
        %v3216 = vpop.f32.mrf.mxu0
        %v3217 = vadd.f32 0.0, %v3216
        %v3218 = vpop.f32.mrf.mxu0
        %3219 = vmatprep.mubr.bf16.mxu0 0
        %3220 = vmatmul.mubr.bf16.gmra.mxu0 %v3094
        %v3221 = vpop.f32.mrf.mxu0
        %v3222 = vadd.f32 0.0, %v3221
        %v3223 = vpop.f32.mrf.mxu0
        %v3224 = vpop.f32.mrf.mxu0
        %v3225 = vadd.f32 0.0, %v3224
        %v3226 = vpop.f32.mrf.mxu0
        %3227 = vmatprep.mubr.bf16.mxu0 0
        %3228 = vmatmul.mubr.bf16.gmra.mxu0 %v3097
        %v3229 = vpop.f32.mrf.mxu0
        %v3230 = vadd.f32 0.0, %v3229
        %v3231 = vpop.f32.mrf.mxu0
        %v3232 = vpop.f32.mrf.mxu0
        %v3233 = vadd.f32 0.0, %v3232
        %v3234 = vpop.f32.mrf.mxu0
        %3235 = vmatprep.mubr.bf16.mxu0 0
        %3236 = vmatmul.mubr.bf16.gmra.mxu0 %v3100
        %v3237 = vpop.f32.mrf.mxu0
        %v3238 = vadd.f32 0.0, %v3237
        %v3239 = vpop.f32.mrf.mxu0
        %v3240 = vpop.f32.mrf.mxu0
        %v3241 = vadd.f32 0.0, %v3240
        %v3242 = vpop.f32.mrf.mxu0
        %3243 = vmatprep.mubr.bf16.mxu0 0
        %3244 = vmatmul.mubr.bf16.gmra.mxu0 %v3103
        %v3245 = vpop.f32.mrf.mxu0
        %v3246 = vadd.f32 0.0, %v3245
        %v3247 = vpop.f32.mrf.mxu0
        %v3248 = vpop.f32.mrf.mxu0
        %v3249 = vadd.f32 0.0, %v3248
        %v3250 = vpop.f32.mrf.mxu0
        %3251 = vmatprep.mubr.bf16.mxu0 0
        %3252 = vmatmul.mubr.bf16.gmra.mxu0 %v3106
        %v3253 = vpop.f32.mrf.mxu0
        %v3254 = vadd.f32 0.0, %v3253
        %v3255 = vpop.f32.mrf.mxu0
        %v3256 = vpop.f32.mrf.mxu0
        %v3257 = vadd.f32 0.0, %v3256
        %v3258 = vpop.f32.mrf.mxu0
        %3259 = vmatprep.mubr.bf16.mxu0 0
        %3260 = vmatmul.mubr.bf16.gmra.mxu0 %v3109
        %v3261 = vpop.f32.mrf.mxu0
        %v3262 = vadd.f32 0.0, %v3261
        %v3263 = vpop.f32.mrf.mxu0
        %v3264 = vpop.f32.mrf.mxu0
        %v3265 = vadd.f32 0.0, %v3264
        %v3266 = vpop.f32.mrf.mxu0
        %3267 = vmatprep.mubr.bf16.mxu0 0
        %3268 = vmatmul.mubr.bf16.gmra.mxu0 %v3112
        %v3269 = vpop.f32.mrf.mxu0
        %v3270 = vadd.f32 0.0, %v3269
        %v3271 = vpop.f32.mrf.mxu0
        %v3272 = vpop.f32.mrf.mxu0
        %v3273 = vadd.f32 0.0, %v3272
        %v3274 = vpop.f32.mrf.mxu0
        %3275 = vmatprep.mubr.bf16.mxu0 0
        %3276 = vmatmul.mubr.bf16.gmra.mxu0 %v3115
        %v3277 = vpop.f32.mrf.mxu0
        %v3278 = vadd.f32 0.0, %v3277
        %v3279 = vpop.f32.mrf.mxu0
        %v3280 = vpop.f32.mrf.mxu0
        %v3281 = vadd.f32 0.0, %v3280
        %v3282 = vpop.f32.mrf.mxu0
        %3283 = vmatprep.mubr.bf16.mxu0 0
        %3284 = vmatmul.mubr.bf16.gmra.mxu0 %v3118
        %v3285 = vpop.f32.mrf.mxu0
        %v3286 = vadd.f32 0.0, %v3285
        %v3287 = vpop.f32.mrf.mxu0
        %v3288 = vpop.f32.mrf.mxu0
        %v3289 = vadd.f32 0.0, %v3288
        %v3290 = vpop.f32.mrf.mxu0
        %3291 = vmatprep.mubr.bf16.mxu0 0
        %3292 = vmatmul.mubr.bf16.gmra.mxu0 %v3121
        %v3293 = vpop.f32.mrf.mxu0
        %v3294 = vadd.f32 0.0, %v3293
        %v3295 = vpop.f32.mrf.mxu0
        %v3296 = vpop.f32.mrf.mxu0
        %v3297 = vadd.f32 0.0, %v3296
        %v3298 = vpop.f32.mrf.mxu0
        %3299 = vdwg.mxu0
        %v3300 = vadd.f32 %v2849, %v3158
        %v3301 = vadd.f32 %v2850, %v3161
        %v3302 = vadd.f32 %v2851, %v3166
        %v3303 = vadd.f32 %v2852, %v3169
        %v3304 = vadd.f32 %v2853, %v3174
        %v3305 = vadd.f32 %v2854, %v3177
        %v3306 = vadd.f32 %v2855, %v3182
        %v3307 = vadd.f32 %v2856, %v3185
        %v3308 = vadd.f32 %v2857, %v3190
        %v3309 = vadd.f32 %v2858, %v3193
        %v3310 = vadd.f32 %v2859, %v3198
        %v3311 = vadd.f32 %v2860, %v3201
        %v3312 = vadd.f32 %v2861, %v3206
        %v3313 = vadd.f32 %v2862, %v3209
        %v3314 = vadd.f32 %v2863, %v3214
        %v3315 = vadd.f32 %v2864, %v3217
        %v3316 = vadd.f32 %v2865, %v3222
        %v3317 = vadd.f32 %v2866, %v3225
        %v3318 = vadd.f32 %v2867, %v3230
        %v3319 = vadd.f32 %v2868, %v3233
        %v3320 = vadd.f32 %v2869, %v3238
        %v3321 = vadd.f32 %v2870, %v3241
        %v3322 = vadd.f32 %v2871, %v3246
        %v3323 = vadd.f32 %v2872, %v3249
        %v3324 = vadd.f32 %v2873, %v3254
        %v3325 = vadd.f32 %v2874, %v3257
        %v3326 = vadd.f32 %v2875, %v3262
        %v3327 = vadd.f32 %v2876, %v3265
        %v3328 = vadd.f32 %v2877, %v3270
        %v3329 = vadd.f32 %v2878, %v3273
        %v3330 = vadd.f32 %v2879, %v3278
        %v3331 = vadd.f32 %v2880, %v3281
        %v3332 = vadd.f32 %v2881, %v3286
        %v3333 = vadd.f32 %v2882, %v3289
        %v3334 = vadd.f32 %v2883, %v3294
        %v3335 = vadd.f32 %v2884, %v3297
        %v3336 = vld [vmem:[%s168 + $0x10] sm:$0x8]
        %s3337 = scalar_lea.vmem %s1, 64
        %v3338 = vld [vmem:[%s3337] sm:$0xf]
        %v3339 = vld [vmem:[%s3337 + $0x4] sm:$0xf]
        %v3341 = vunpack.c.l.b16 %v3336
        %v3342 = vpack.c.b16 %v2520, %v3341
        %vm3343 = vcmask 1044480
        %v3344 = vrot.slane %v3342, 3
        %v3345 = vrot.slane %v2557, 3
        %v3346 = vsel %vm3343, %v3344, %v3345
        %v3347 = vrot.slane %v2558, 3
        %v3348 = vsel %vm3343, %v3345, %v3347
        %v3349 = vrot.slane %v2559, 3
        %v3350 = vsel %vm3343, %v3347, %v3349
        %v3351 = vrot.slane %v2560, 3
        %v3352 = vsel %vm3343, %v3349, %v3351
        %v3353 = vrot.slane %v2561, 3
        %v3354 = vsel %vm3343, %v3351, %v3353
        %v3355 = vrot.slane %v2562, 3
        %v3356 = vsel %vm3343, %v3353, %v3355
        %v3357 = vrot.slane %v2563, 3
        %v3358 = vsel %vm3343, %v3355, %v3357
        %v3359 = vrot.slane %v2564, 3
        %v3360 = vsel %vm3343, %v3357, %v3359
        %v3361 = vrot.slane %v2565, 3
        %v3362 = vsel %vm3343, %v3359, %v3361
        %v3363 = vrot.slane %v2566, 3
        %v3364 = vsel %vm3343, %v3361, %v3363
        %v3365 = vrot.slane %v2567, 3
        %v3366 = vsel %vm3343, %v3363, %v3365
        %v3367 = vrot.slane %v2568, 3
        %v3368 = vsel %vm3343, %v3365, %v3367
        %v3369 = vrot.slane %v2569, 3
        %v3370 = vsel %vm3343, %v3367, %v3369
        %v3371 = vrot.slane %v2570, 3
        %v3372 = vsel %vm3343, %v3369, %v3371
        %v3373 = vrot.slane %v2571, 3
        %v3374 = vsel %vm3343, %v3371, %v3373
        %v3375 = vrot.slane %v2572, 3
        %v3376 = vsel %vm3343, %v3373, %v3375
        %v3377 = vrot.slane %v2573, 3
        %v3378 = vsel %vm3343, %v3375, %v3377
        %v3379 = vrot.slane %v2891, 3
        %v3380 = vsel %vm3343, %v3377, %v3379
        %v3383 = vunpack.c.l.b16 %v3338
        %v3384 = vunpack.c.l.b16 %v3339
        %v3385 = vpack.c.b16 %v3384, %v3383
        %v3388 = vsel %vm461, %v3346, 0
        %v3391 = vsel %vm461, %v3348, 0
        %v3394 = vsel %vm461, %v3350, 0
        %v3397 = vsel %vm461, %v3352, 0
        %v3400 = vsel %vm461, %v3354, 0
        %v3403 = vsel %vm461, %v3356, 0
        %v3406 = vsel %vm461, %v3358, 0
        %v3409 = vsel %vm461, %v3360, 0
        %v3412 = vsel %vm461, %v3362, 0
        %v3415 = vsel %vm461, %v3364, 0
        %v3418 = vsel %vm461, %v3366, 0
        %v3421 = vsel %vm461, %v3368, 0
        %v3424 = vsel %vm461, %v3370, 0
        %v3427 = vsel %vm461, %v3372, 0
        %v3430 = vsel %vm461, %v3374, 0
        %v3433 = vsel %vm461, %v3376, 0
        %v3436 = vsel %vm461, %v3378, 0
        %v3439 = vsel %vm461, %v3380, 0
        %3441 = vmatprep.subr.bf16.mxu0 0
        %3442 = vmatpush1.bf16.msra.mxu0 0
        %3443 = vmatprep.subr.bf16.mxu0 0
        %3444 = vmatpush1.bf16.msra.mxu0 0
        %3445 = vmatprep.subr.bf16.mxu0 0
        %3446 = vmatpush1.bf16.msra.mxu0 0
        %3447 = vmatprep.subr.bf16.mxu0 0
        %3448 = vmatpush1.bf16.msra.mxu0 0
        %3449 = vmatprep.subr.bf16.mxu0 0
        %3450 = vmatpush1.bf16.msra.mxu0 0
        %3451 = vmatprep.subr.bf16.mxu0 0
        %3452 = vmatpush1.bf16.msra.mxu0 0
        %3453 = vmatprep.subr.bf16.mxu0 0
        %3454 = vmatpush1.bf16.msra.mxu0 0
        %3455 = vmatprep.subr.bf16.mxu0 0
        %3456 = vmatpush1.bf16.msra.mxu0 %v3385
        %3457 = vmatprep.subr.bf16.mxu0 0
        %3458 = vmatpush2.bf16.msra.mxu0 0
        %3459 = vmatprep.subr.bf16.mxu0 0
        %3460 = vmatpush2.bf16.msra.mxu0 0
        %3461 = vmatprep.subr.bf16.mxu0 0
        %3462 = vmatpush2.bf16.msra.mxu0 0
        %3463 = vmatprep.subr.bf16.mxu0 0
        %3464 = vmatpush2.bf16.msra.mxu0 0
        %3465 = vmatprep.subr.bf16.mxu0 0
        %3466 = vmatpush2.bf16.msra.mxu0 0
        %3467 = vmatprep.subr.bf16.mxu0 0
        %3468 = vmatpush2.bf16.msra.mxu0 0
        %3469 = vmatprep.subr.bf16.mxu0 0
        %3470 = vmatpush2.bf16.msra.mxu0 0
        %3471 = vmatprep.subr.bf16.mxu0 0
        %3472 = vmatpush2.bf16.msra.mxu0 0
        %3473 = vmatprep.mubr.bf16.mxu0 0
        %3474 = vmatmul.mubr.bf16.gmra.mxu0 %v3388
        %v3475 = vpop.f32.mrf.mxu0
        %v3476 = vadd.f32 0.0, %v3475
        %v3477 = vpop.f32.mrf.mxu0
        %v3478 = vpop.f32.mrf.mxu0
        %v3479 = vadd.f32 0.0, %v3478
        %v3480 = vpop.f32.mrf.mxu0
        %3481 = vmatprep.mubr.bf16.mxu0 0
        %3482 = vmatmul.mubr.bf16.gmra.mxu0 %v3391
        %v3483 = vpop.f32.mrf.mxu0
        %v3484 = vadd.f32 0.0, %v3483
        %v3485 = vpop.f32.mrf.mxu0
        %v3486 = vpop.f32.mrf.mxu0
        %v3487 = vadd.f32 0.0, %v3486
        %v3488 = vpop.f32.mrf.mxu0
        %3489 = vmatprep.mubr.bf16.mxu0 0
        %3490 = vmatmul.mubr.bf16.gmra.mxu0 %v3394
        %v3491 = vpop.f32.mrf.mxu0
        %v3492 = vadd.f32 0.0, %v3491
        %v3493 = vpop.f32.mrf.mxu0
        %v3494 = vpop.f32.mrf.mxu0
        %v3495 = vadd.f32 0.0, %v3494
        %v3496 = vpop.f32.mrf.mxu0
        %3497 = vmatprep.mubr.bf16.mxu0 0
        %3498 = vmatmul.mubr.bf16.gmra.mxu0 %v3397
        %v3499 = vpop.f32.mrf.mxu0
        %v3500 = vadd.f32 0.0, %v3499
        %v3501 = vpop.f32.mrf.mxu0
        %v3502 = vpop.f32.mrf.mxu0
        %v3503 = vadd.f32 0.0, %v3502
        %v3504 = vpop.f32.mrf.mxu0
        %3505 = vmatprep.mubr.bf16.mxu0 0
        %3506 = vmatmul.mubr.bf16.gmra.mxu0 %v3400
        %v3507 = vpop.f32.mrf.mxu0
        %v3508 = vadd.f32 0.0, %v3507
        %v3509 = vpop.f32.mrf.mxu0
        %v3510 = vpop.f32.mrf.mxu0
        %v3511 = vadd.f32 0.0, %v3510
        %v3512 = vpop.f32.mrf.mxu0
        %3513 = vmatprep.mubr.bf16.mxu0 0
        %3514 = vmatmul.mubr.bf16.gmra.mxu0 %v3403
        %v3515 = vpop.f32.mrf.mxu0
        %v3516 = vadd.f32 0.0, %v3515
        %v3517 = vpop.f32.mrf.mxu0
        %v3518 = vpop.f32.mrf.mxu0
        %v3519 = vadd.f32 0.0, %v3518
        %v3520 = vpop.f32.mrf.mxu0
        %3521 = vmatprep.mubr.bf16.mxu0 0
        %3522 = vmatmul.mubr.bf16.gmra.mxu0 %v3406
        %v3523 = vpop.f32.mrf.mxu0
        %v3524 = vadd.f32 0.0, %v3523
        %v3525 = vpop.f32.mrf.mxu0
        %v3526 = vpop.f32.mrf.mxu0
        %v3527 = vadd.f32 0.0, %v3526
        %v3528 = vpop.f32.mrf.mxu0
        %3529 = vmatprep.mubr.bf16.mxu0 0
        %3530 = vmatmul.mubr.bf16.gmra.mxu0 %v3409
        %v3531 = vpop.f32.mrf.mxu0
        %v3532 = vadd.f32 0.0, %v3531
        %v3533 = vpop.f32.mrf.mxu0
        %v3534 = vpop.f32.mrf.mxu0
        %v3535 = vadd.f32 0.0, %v3534
        %v3536 = vpop.f32.mrf.mxu0
        %3537 = vmatprep.mubr.bf16.mxu0 0
        %3538 = vmatmul.mubr.bf16.gmra.mxu0 %v3412
        %v3539 = vpop.f32.mrf.mxu0
        %v3540 = vadd.f32 0.0, %v3539
        %v3541 = vpop.f32.mrf.mxu0
        %v3542 = vpop.f32.mrf.mxu0
        %v3543 = vadd.f32 0.0, %v3542
        %v3544 = vpop.f32.mrf.mxu0
        %3545 = vmatprep.mubr.bf16.mxu0 0
        %3546 = vmatmul.mubr.bf16.gmra.mxu0 %v3415
        %v3547 = vpop.f32.mrf.mxu0
        %v3548 = vadd.f32 0.0, %v3547
        %v3549 = vpop.f32.mrf.mxu0
        %v3550 = vpop.f32.mrf.mxu0
        %v3551 = vadd.f32 0.0, %v3550
        %v3552 = vpop.f32.mrf.mxu0
        %3553 = vmatprep.mubr.bf16.mxu0 0
        %3554 = vmatmul.mubr.bf16.gmra.mxu0 %v3418
        %v3555 = vpop.f32.mrf.mxu0
        %v3556 = vadd.f32 0.0, %v3555
        %v3557 = vpop.f32.mrf.mxu0
        %v3558 = vpop.f32.mrf.mxu0
        %v3559 = vadd.f32 0.0, %v3558
        %v3560 = vpop.f32.mrf.mxu0
        %3561 = vmatprep.mubr.bf16.mxu0 0
        %3562 = vmatmul.mubr.bf16.gmra.mxu0 %v3421
        %v3563 = vpop.f32.mrf.mxu0
        %v3564 = vadd.f32 0.0, %v3563
        %v3565 = vpop.f32.mrf.mxu0
        %v3566 = vpop.f32.mrf.mxu0
        %v3567 = vadd.f32 0.0, %v3566
        %v3568 = vpop.f32.mrf.mxu0
        %3569 = vmatprep.mubr.bf16.mxu0 0
        %3570 = vmatmul.mubr.bf16.gmra.mxu0 %v3424
        %v3571 = vpop.f32.mrf.mxu0
        %v3572 = vadd.f32 0.0, %v3571
        %v3573 = vpop.f32.mrf.mxu0
        %v3574 = vpop.f32.mrf.mxu0
        %v3575 = vadd.f32 0.0, %v3574
        %v3576 = vpop.f32.mrf.mxu0
        %3577 = vmatprep.mubr.bf16.mxu0 0
        %3578 = vmatmul.mubr.bf16.gmra.mxu0 %v3427
        %v3579 = vpop.f32.mrf.mxu0
        %v3580 = vadd.f32 0.0, %v3579
        %v3581 = vpop.f32.mrf.mxu0
        %v3582 = vpop.f32.mrf.mxu0
        %v3583 = vadd.f32 0.0, %v3582
        %v3584 = vpop.f32.mrf.mxu0
        %3585 = vmatprep.mubr.bf16.mxu0 0
        %3586 = vmatmul.mubr.bf16.gmra.mxu0 %v3430
        %v3587 = vpop.f32.mrf.mxu0
        %v3588 = vadd.f32 0.0, %v3587
        %v3589 = vpop.f32.mrf.mxu0
        %v3590 = vpop.f32.mrf.mxu0
        %v3591 = vadd.f32 0.0, %v3590
        %v3592 = vpop.f32.mrf.mxu0
        %3593 = vmatprep.mubr.bf16.mxu0 0
        %3594 = vmatmul.mubr.bf16.gmra.mxu0 %v3433
        %v3595 = vpop.f32.mrf.mxu0
        %v3596 = vadd.f32 0.0, %v3595
        %v3597 = vpop.f32.mrf.mxu0
        %v3598 = vpop.f32.mrf.mxu0
        %v3599 = vadd.f32 0.0, %v3598
        %v3600 = vpop.f32.mrf.mxu0
        %3601 = vmatprep.mubr.bf16.mxu0 0
        %3602 = vmatmul.mubr.bf16.gmra.mxu0 %v3436
        %v3603 = vpop.f32.mrf.mxu0
        %v3604 = vadd.f32 0.0, %v3603
        %v3605 = vpop.f32.mrf.mxu0
        %v3606 = vpop.f32.mrf.mxu0
        %v3607 = vadd.f32 0.0, %v3606
        %v3608 = vpop.f32.mrf.mxu0
        %3609 = vmatprep.mubr.bf16.mxu0 0
        %3610 = vmatmul.mubr.bf16.gmra.mxu0 %v3439
        %v3611 = vpop.f32.mrf.mxu0
        %v3612 = vadd.f32 0.0, %v3611
        %v3613 = vpop.f32.mrf.mxu0
        %v3614 = vpop.f32.mrf.mxu0
        %v3615 = vadd.f32 0.0, %v3614
        %v3616 = vpop.f32.mrf.mxu0
        %3617 = vdwg.mxu0
        %v3618 = vadd.f32 %v3300, %v3476
        %v3619 = vadd.f32 %v3301, %v3479
        %v3620 = vadd.f32 %v3302, %v3484
        %v3621 = vadd.f32 %v3303, %v3487
        %v3622 = vadd.f32 %v3304, %v3492
        %v3623 = vadd.f32 %v3305, %v3495
        %v3624 = vadd.f32 %v3306, %v3500
        %v3625 = vadd.f32 %v3307, %v3503
        %v3626 = vadd.f32 %v3308, %v3508
        %v3627 = vadd.f32 %v3309, %v3511
        %v3628 = vadd.f32 %v3310, %v3516
        %v3629 = vadd.f32 %v3311, %v3519
        %v3630 = vadd.f32 %v3312, %v3524
        %v3631 = vadd.f32 %v3313, %v3527
        %v3632 = vadd.f32 %v3314, %v3532
        %v3633 = vadd.f32 %v3315, %v3535
        %v3634 = vadd.f32 %v3316, %v3540
        %v3635 = vadd.f32 %v3317, %v3543
        %v3636 = vadd.f32 %v3318, %v3548
        %v3637 = vadd.f32 %v3319, %v3551
        %v3638 = vadd.f32 %v3320, %v3556
        %v3639 = vadd.f32 %v3321, %v3559
        %v3640 = vadd.f32 %v3322, %v3564
        %v3641 = vadd.f32 %v3323, %v3567
        %v3642 = vadd.f32 %v3324, %v3572
        %v3643 = vadd.f32 %v3325, %v3575
        %v3644 = vadd.f32 %v3326, %v3580
        %v3645 = vadd.f32 %v3327, %v3583
        %v3646 = vadd.f32 %v3328, %v3588
        %v3647 = vadd.f32 %v3329, %v3591
        %v3648 = vadd.f32 %v3330, %v3596
        %v3649 = vadd.f32 %v3331, %v3599
        %v3650 = vadd.f32 %v3332, %v3604
        %v3651 = vadd.f32 %v3333, %v3607
        %v3652 = vadd.f32 %v3334, %v3612
        %v3653 = vadd.f32 %v3335, %v3615
        %v3654 = vld [vmem:[%s2] sm:$0x1]
        %v3656 = vlaneseq
        %v3657 = vshrl.u32 %v3656, 7
        %v3658 = vsub.s32 0, %v3657
        %v3659 = vrot.slane %v3654, %v3658
        %v3661 = vadd.f32 %v3618, %v3659
        %v3662 = vadd.f32 %v3619, %v3659
        %v3663 = vadd.f32 %v3620, %v3659
        %v3664 = vadd.f32 %v3621, %v3659
        %v3665 = vadd.f32 %v3622, %v3659
        %v3666 = vadd.f32 %v3623, %v3659
        %v3667 = vadd.f32 %v3624, %v3659
        %v3668 = vadd.f32 %v3625, %v3659
        %v3669 = vadd.f32 %v3626, %v3659
        %v3670 = vadd.f32 %v3627, %v3659
        %v3671 = vadd.f32 %v3628, %v3659
        %v3672 = vadd.f32 %v3629, %v3659
        %v3673 = vadd.f32 %v3630, %v3659
        %v3674 = vadd.f32 %v3631, %v3659
        %v3675 = vadd.f32 %v3632, %v3659
        %v3676 = vadd.f32 %v3633, %v3659
        %v3677 = vadd.f32 %v3634, %v3659
        %v3678 = vadd.f32 %v3635, %v3659
        %v3679 = vadd.f32 %v3636, %v3659
        %v3680 = vadd.f32 %v3637, %v3659
        %v3681 = vadd.f32 %v3638, %v3659
        %v3682 = vadd.f32 %v3639, %v3659
        %v3683 = vadd.f32 %v3640, %v3659
        %v3684 = vadd.f32 %v3641, %v3659
        %v3685 = vadd.f32 %v3642, %v3659
        %v3686 = vadd.f32 %v3643, %v3659
        %v3687 = vadd.f32 %v3644, %v3659
        %v3688 = vadd.f32 %v3645, %v3659
        %v3689 = vadd.f32 %v3646, %v3659
        %v3690 = vadd.f32 %v3647, %v3659
        %v3691 = vadd.f32 %v3648, %v3659
        %v3692 = vadd.f32 %v3649, %v3659
        %v3693 = vadd.f32 %v3650, %v3659
        %v3694 = vadd.f32 %v3651, %v3659
        %v3695 = vadd.f32 %v3652, %v3659
        %v3696 = vadd.f32 %v3653, %v3659
        %v3697 = vpack.c.bf16 %v3662, %v3661
        %v3698 = vpack.c.bf16 %v3664, %v3663
        %v3699 = vpack.c.bf16 %v3666, %v3665
        %v3700 = vpack.c.bf16 %v3668, %v3667
        %v3701 = vpack.c.bf16 %v3670, %v3669
        %v3702 = vpack.c.bf16 %v3672, %v3671
        %v3703 = vpack.c.bf16 %v3674, %v3673
        %v3704 = vpack.c.bf16 %v3676, %v3675
        %v3705 = vpack.c.bf16 %v3678, %v3677
        %v3706 = vpack.c.bf16 %v3680, %v3679
        %v3707 = vpack.c.bf16 %v3682, %v3681
        %v3708 = vpack.c.bf16 %v3684, %v3683
        %v3709 = vpack.c.bf16 %v3686, %v3685
        %v3710 = vpack.c.bf16 %v3688, %v3687
        %v3711 = vpack.c.bf16 %v3690, %v3689
        %v3712 = vpack.c.bf16 %v3692, %v3691
        %v3713 = vpack.c.bf16 %v3694, %v3693
        %v3714 = vpack.c.bf16 %v3696, %v3695
        %v3733 = vunpack.c.l.b16 %v3697
        %v3734 = vunpack.c.h.b16 %v3697
        %v3735 = vunpack.c.l.b16 %v3698
        %v3736 = vunpack.c.h.b16 %v3698
        %v3737 = vunpack.c.l.b16 %v3699
        %v3738 = vunpack.c.h.b16 %v3699
        %v3739 = vunpack.c.l.b16 %v3700
        %v3740 = vunpack.c.h.b16 %v3700
        %v3741 = vunpack.c.l.b16 %v3701
        %v3742 = vunpack.c.h.b16 %v3701
        %v3743 = vunpack.c.l.b16 %v3702
        %v3744 = vunpack.c.h.b16 %v3702
        %v3745 = vunpack.c.l.b16 %v3703
        %v3746 = vunpack.c.h.b16 %v3703
        %v3747 = vunpack.c.l.b16 %v3704
        %v3748 = vunpack.c.h.b16 %v3704
        %v3749 = vunpack.c.l.b16 %v3705
        %v3750 = vunpack.c.h.b16 %v3705
        %v3751 = vunpack.c.l.b16 %v3706
        %v3752 = vunpack.c.h.b16 %v3706
        %v3753 = vunpack.c.l.b16 %v3707
        %v3754 = vunpack.c.h.b16 %v3707
        %v3755 = vunpack.c.l.b16 %v3708
        %v3756 = vunpack.c.h.b16 %v3708
        %v3757 = vunpack.c.l.b16 %v3709
        %v3758 = vunpack.c.h.b16 %v3709
        %v3759 = vunpack.c.l.b16 %v3710
        %v3760 = vunpack.c.h.b16 %v3710
        %v3761 = vunpack.c.l.b16 %v3711
        %v3762 = vunpack.c.h.b16 %v3711
        %v3763 = vunpack.c.l.b16 %v3712
        %v3764 = vunpack.c.h.b16 %v3712
        %v3765 = vunpack.c.l.b16 %v3713
        %v3766 = vunpack.c.h.b16 %v3713
        %v3767 = vunpack.c.l.b16 %v3714
        %v3768 = vunpack.c.h.b16 %v3714
        %v3769 = vpack.c.b16 %v3733, %v3733
        %v3770 = vpack.c.b16 %v3734, %v3734
        %v3771 = vpack.c.b16 %v3735, %v3735
        %v3772 = vpack.c.b16 %v3736, %v3736
        %v3773 = vpack.c.b16 %v3737, %v3737
        %v3774 = vpack.c.b16 %v3738, %v3738
        %v3775 = vpack.c.b16 %v3739, %v3739
        %v3776 = vpack.c.b16 %v3740, %v3740
        %v3777 = vpack.c.b16 %v3741, %v3741
        %v3778 = vpack.c.b16 %v3742, %v3742
        %v3779 = vpack.c.b16 %v3743, %v3743
        %v3780 = vpack.c.b16 %v3744, %v3744
        %v3781 = vpack.c.b16 %v3745, %v3745
        %v3782 = vpack.c.b16 %v3746, %v3746
        %v3783 = vpack.c.b16 %v3747, %v3747
        %v3784 = vpack.c.b16 %v3748, %v3748
        %v3785 = vpack.c.b16 %v3749, %v3749
        %v3786 = vpack.c.b16 %v3750, %v3750
        %v3787 = vpack.c.b16 %v3751, %v3751
        %v3788 = vpack.c.b16 %v3752, %v3752
        %v3789 = vpack.c.b16 %v3753, %v3753
        %v3790 = vpack.c.b16 %v3754, %v3754
        %v3791 = vpack.c.b16 %v3755, %v3755
        %v3792 = vpack.c.b16 %v3756, %v3756
        %v3793 = vpack.c.b16 %v3757, %v3757
        %v3794 = vpack.c.b16 %v3758, %v3758
        %v3795 = vpack.c.b16 %v3759, %v3759
        %v3796 = vpack.c.b16 %v3760, %v3760
        %v3797 = vpack.c.b16 %v3761, %v3761
        %v3798 = vpack.c.b16 %v3762, %v3762
        %v3799 = vpack.c.b16 %v3763, %v3763
        %v3800 = vpack.c.b16 %v3764, %v3764
        %v3801 = vpack.c.b16 %v3765, %v3765
        %v3802 = vpack.c.b16 %v3766, %v3766
        %v3803 = vpack.c.b16 %v3767, %v3767
        %v3804 = vpack.c.b16 %v3768, %v3768
        %3841 = vst [vmem:[%s163] sm:$0xf] %v3769
        %3842 = vst [vmem:[%s163 + $0x4] sm:$0xf] %v3770
        %3843 = vst [vmem:[%s163 + $0x8] sm:$0xf] %v3771
        %3844 = vst [vmem:[%s163 + $0xc] sm:$0xf] %v3772
        %3845 = vst [vmem:[%s163 + $0x10] sm:$0xf] %v3773
        %3846 = vst [vmem:[%s163 + $0x14] sm:$0xf] %v3774
        %3847 = vst [vmem:[%s163 + $0x18] sm:$0xf] %v3775
        %3848 = vst [vmem:[%s163 + $0x1c] sm:$0xf] %v3776
        %3849 = vst [vmem:[%s163 + $0x20] sm:$0xf] %v3777
        %3850 = vst [vmem:[%s163 + $0x24] sm:$0xf] %v3778
        %3851 = vst [vmem:[%s163 + $0x28] sm:$0xf] %v3779
        %3852 = vst [vmem:[%s163 + $0x2c] sm:$0xf] %v3780
        %3853 = vst [vmem:[%s163 + $0x30] sm:$0xf] %v3781
        %3854 = vst [vmem:[%s163 + $0x34] sm:$0xf] %v3782
        %3855 = vst [vmem:[%s163 + $0x38] sm:$0xf] %v3783
        %3856 = vst [vmem:[%s163 + $0x3c] sm:$0xf] %v3784
        %3857 = vst [vmem:[%s163 + $0x40] sm:$0xf] %v3785
        %3858 = vst [vmem:[%s163 + $0x44] sm:$0xf] %v3786
        %3859 = vst [vmem:[%s163 + $0x48] sm:$0xf] %v3787
        %3860 = vst [vmem:[%s163 + $0x4c] sm:$0xf] %v3788
        %3861 = vst [vmem:[%s163 + $0x50] sm:$0xf] %v3789
        %3862 = vst [vmem:[%s163 + $0x54] sm:$0xf] %v3790
        %3863 = vst [vmem:[%s163 + $0x58] sm:$0xf] %v3791
        %3864 = vst [vmem:[%s163 + $0x5c] sm:$0xf] %v3792
        %3865 = vst [vmem:[%s163 + $0x60] sm:$0xf] %v3793
        %3866 = vst [vmem:[%s163 + $0x64] sm:$0xf] %v3794
        %3867 = vst [vmem:[%s163 + $0x68] sm:$0xf] %v3795
        %3868 = vst [vmem:[%s163 + $0x6c] sm:$0xf] %v3796
        %3869 = vst [vmem:[%s163 + $0x70] sm:$0xf] %v3797
        %3870 = vst [vmem:[%s163 + $0x74] sm:$0xf] %v3798
        %3871 = vst [vmem:[%s163 + $0x78] sm:$0xf] %v3799
        %3872 = vst [vmem:[%s163 + $0x7c] sm:$0xf] %v3800
        %3873 = vst [vmem:[%s163 + $0x80] sm:$0xf] %v3801
        %3874 = vst [vmem:[%s163 + $0x84] sm:$0xf] %v3802
        %3875 = vst [vmem:[%s163 + $0x88] sm:$0xf] %v3803
        %3876 = vst [vmem:[%s163 + $0x8c] sm:$0xf] %v3804
        %s3877 = sand.u32 %s93, 1
        %s3878 = scalar_lea.sflag [#allocation3], %s3877
        %s3879 = sand.u32 %s93, 1
        %s3880 = smul.addr %s3879, 144
        %s3881 = scalar_lea.vmem [#allocation2], %s3880
        // Predicated region
        $region33: #{tpu_custom_call.1} parent=31 // pred_check
          %p3882 = pneg %p103
        $region34: #{tpu_custom_call.1} parent=31 // pred_check_branch
          %3884 = sbr.rel (%p3882) target = $region36
        $region35: #{tpu_custom_call.1} parent=31 // pred_region
          %s3885 = smul.u32 36, %s17
          %s3887 = ssub.s32 2304, 2304
          %3888 = vsyncadd %s3878, %s3887
          %s3889 = smul.addr %s3885, 64
          %s3890 = scalar_lea.hbm %s3, %s3889
          %s3891 = sshll.u32 %s3881, 4
          %s3892 = int_to_ptr.vmem [resolvable:$true] %s3891
          %3897 = dma.vmem_to_hbm [thread:$0]  %s3892, 2304, %s3890, %s3878, 64, 64, 4
        $region36: #{tpu_custom_call.1} parent=31 // pred_fallthru
          _
      $region32: #{tpu_custom_call.1} parent=5 // pred_fallthru
        _
      %p3898 = scmp.le.s32.totalorder 2, %s12
      // Predicated region
      $region37: #{tpu_custom_call.1} parent=5 // pred_check
        %p3899 = pneg %p3898
      $region38: #{tpu_custom_call.1} parent=5 // pred_check_branch
        %3901 = sbr.rel (%p3899) target = $region40
      $region39: #{tpu_custom_call.1} parent=5 // pred_region
        %s3902 = ssub.s32 %s12, 2
        // Predicated region
        $region41: #{tpu_custom_call.1} parent=39 // pred_check
          %p3903 = pneg %p109
        $region42: #{tpu_custom_call.1} parent=39 // pred_check_branch
          %3905 = sbr.rel (%p3903) target = $region44
        $region43: #{tpu_custom_call.1} parent=39 // pred_region
          %s3906 = sand.u32 %s94, 1
          %s3907 = scalar_lea.sflag [#allocation3], %s3906
          %s3908 = sand.u32 %s94, 1
          %s3909 = smul.addr %s3908, 144
          %s3910 = scalar_lea.vmem [#allocation2], %s3909
          %3911 = dma.done %s3907, 2304
        $region44: #{tpu_custom_call.1} parent=39 // pred_fallthru
          _
      $region40: #{tpu_custom_call.1} parent=5 // pred_fallthru
        _
    $region6: #{tpu_custom_call.1} parent=1 // loop_footer
      %s16 = sadd.s32 1, %s12
    $region7: #{tpu_custom_call.1} parent=1 // loop_footer_branch
      %11 = sbr.rel target = $region3
    $region8: #{tpu_custom_call.1} parent=1 // loop_exit
      _
    %3912 = vsyncpa [#allocation3], 1
    %s3913 = scalar_lea.sflag [#allocation3], 1
    %3914 = vsyncpa %s3913, 1

</llo_original>
